<compile_context>
chip_gen: v7x
topology: tpu7x:2x2x1
jax: 0.10.0
libtpu: 0.0.40
codegen_flags: <defaults>
</compile_context>

<pallas_src>
import functools

import jax
import jax.numpy as jnp
from jax.experimental import pallas as pl
from jax.experimental.pallas import tpu as pltpu


def _self_attention_kernel(x_ref, w_ref, p_ref, o_ref, attn_sc, *,
                           num_heads: int, num_groups: int, eps: float):
    # x_ref:    (Bt, S, C)   tokens (bf16), C == D
    # w_ref:    (C, 4*D)     [Wq | Wk | Wv | Wout] (bf16, in_features x out_features)
    # p_ref:    (6 + G, D)   rows 0..5 = [bq, bk, bv, bout, gamma, beta] (f32),
    #                        rows 6..6+G = one-hot group->channel map Mt (f32)
    # o_ref:    (Bt, S, D)
    # attn_sc:  VMEM (Bt*S, D) f32 scratch for concatenated head outputs
    Bt, S, C = x_ref.shape
    D = o_ref.shape[2]
    G = num_groups
    dk = D // num_heads
    scale = float(dk) ** -0.5
    rows = Bt * S

    x_bt = x_ref[...]                              # (Bt, S, C) bf16
    x_flat = x_bt.reshape(rows, C)                 # (rows, C)  bf16
    params = p_ref[0:6, :]                         # (6, D) f32
    mt = p_ref[6:6 + G, :]                         # (G, D) f32 one-hot

    # --- fused Q/K/V projection: one (rows, C) x (C, 3D) bf16 MXU matmul ----
    qkv = jnp.dot(x_flat, w_ref[:, 0:3 * D],
                  preferred_element_type=jnp.float32)            # (rows, 3D) f32
    q16 = ((qkv[:, 0:D] + params[0:1]) * scale).astype(jnp.bfloat16)
    k16 = (qkv[:, D:2 * D] + params[1:2]).astype(jnp.bfloat16)
    v16 = (qkv[:, 2 * D:3 * D] + params[2:3]).astype(jnp.bfloat16)

    # --- multi-head attention: deferred softmax norm, scratch accumulation ---
    for bt in range(Bt):
        r0 = bt * S
        for h in range(num_heads):
            lo = h * dk
            qh = q16[r0:r0 + S, lo:lo + dk]                      # (S, dk) bf16
            kh = k16[r0:r0 + S, lo:lo + dk]
            vh = v16[r0:r0 + S, lo:lo + dk]
            # scores = qh @ kh^T (contract last dim of both; scale folded in q)
            s = jax.lax.dot_general(qh, kh, (((1,), (1,)), ((), ())),
                                    preferred_element_type=jnp.float32)  # (S, S)
            m = jnp.max(s, axis=-1, keepdims=True)
            e = jnp.exp(s - m)
            rsum = jnp.sum(e, axis=-1, keepdims=True)            # (S, 1) f32
            oh = jnp.dot(e.astype(jnp.bfloat16), vh,
                         preferred_element_type=jnp.float32)     # (S, dk) f32
            # normalize after the PV dot: S*dk multiplies + EUP reciprocal
            attn_sc[r0:r0 + S, lo:lo + dk] = oh * pl.reciprocal(rsum, approx=True)

    # --- output projection + residual (f32 math) -----------------------------
    proj = jnp.dot(attn_sc[...].astype(jnp.bfloat16), w_ref[:, 3 * D:4 * D],
                   preferred_element_type=jnp.float32) + params[3:4]   # (rows, D)
    y = proj + x_flat.astype(jnp.float32)                              # (rows, D)

    # --- GroupNorm(num_groups, D) per batch element ---------------------------
    # Group reduce / broadcast via tiny one-hot matmuls (exact, no lane-dim
    # reshapes); two-pass centered variance; affine folded into one pass.
    Cg = D // G
    count = float(S * Cg)
    gamma = params[4:5]
    beta = params[5:6]
    for bt in range(Bt):
        yb = y[bt * S:(bt + 1) * S, :]                                    # (S, D)
        s1 = jnp.sum(yb, axis=0, keepdims=True)                           # (1, D)
        gmean = jax.lax.dot_general(s1, mt, (((1,), (1,)), ((), ())),
                                    preferred_element_type=jnp.float32) / count   # (1, G)
        mean_c = jnp.dot(gmean, mt, preferred_element_type=jnp.float32)   # (1, D)
        d = yb - mean_c
        s2 = jnp.sum(d * d, axis=0, keepdims=True)                        # (1, D)
        gvar = jax.lax.dot_general(s2, mt, (((1,), (1,)), ((), ())),
                                   preferred_element_type=jnp.float32) / count    # (1, G)
        rstd_c = jnp.dot(jax.lax.rsqrt(gvar + eps), mt,
                         preferred_element_type=jnp.float32)              # (1, D)
        o_ref[bt, :, :] = (d * (rstd_c * gamma) + beta).astype(o_ref.dtype)


def _pick_batch_block(batch: int, seq: int, target_rows: int = 512) -> int:
    """Largest divisor of `batch` with Bt*seq <= target_rows, keeping >=2 grid
    steps (for the two v7x TensorCores) whenever batch allows it."""
    divisors = [d for d in range(1, batch + 1) if batch % d == 0]
    cap = max(1, target_rows // max(seq, 1))
    cands = [d for d in divisors if d <= cap] or [1]
    bt = max(cands)
    if batch >= 2 and batch // bt < 2:
        keep_parallel = [d for d in cands if batch // d >= 2]
        if keep_parallel:
            bt = max(keep_parallel)
    return bt


def _vmem_limit_bytes(bt, s, c, d, g, out_bytes):
    rows = bt * s
    tiles = 2 * (rows * c * 2            # x tile (bf16), double-buffered
                 + c * 4 * d * 2         # packed weights (bf16)
                 + (6 + g) * d * 4       # params + one-hot (f32)
                 + rows * d * out_bytes) # output tile
    scratch = rows * d * 4               # head-output accumulator
    temps = (rows * 3 * d * 4            # qkv f32
             + rows * 3 * d * 2          # q16/k16/v16
             + 2 * rows * d * 4          # proj + y
             + 2 * s * s * 4)            # scores + exp
    est = tiles + scratch + temps
    return int(min(64 * 1024 * 1024, max(32 * 1024 * 1024, 2 * est)))


def self_attention_pallas(x, wq, bq, wk, bk, wv, bv, wo, bo, gamma, beta, *,
                          num_heads, num_groups, eps=1e-5):
    """SelfAttention forward. x: (B, C, H, W) -> (B, C, H, W), C == embedding_dim.

    Linear weights are given in (in_features, out_features) orientation
    (the transpose of torch.nn.Linear.weight).
    """
    B, C, H, W = x.shape
    D = wq.shape[1]
    assert C == D, "residual add in the module requires in_size == embedding_dim"
    assert D % num_heads == 0 and D % num_groups == 0
    # D a multiple of 128 keeps all weight/head slices lane-aligned (perf, not
    # correctness).
    S = H * W
    G = num_groups
    Bt = _pick_batch_block(B, S)

    # Layout glue in plain XLA: channels-last tokens so the embedding dim maps
    # to the TPU lane axis; matmul inputs cast to bf16 (f32 math stays in-kernel).
    x_tok = jnp.transpose(x.reshape(B, C, S), (0, 2, 1)).astype(jnp.bfloat16)  # (B,S,C)

    # One packed weight operand and one packed per-channel/param operand
    # (biases, affine, and the hoisted one-hot group map) -> 3 input DMAs/step.
    w_all = jnp.concatenate([wq, wk, wv, wo], axis=1).astype(jnp.bfloat16)     # (C,4D)
    vecs = jnp.stack([bq, bk, bv, bo, gamma, beta], axis=0).astype(jnp.float32)
    mt = (jnp.arange(D, dtype=jnp.int32)[None, :] // (D // G)
          == jnp.arange(G, dtype=jnp.int32)[:, None]).astype(jnp.float32)      # (G,D)
    p_all = jnp.concatenate([vecs, mt], axis=0)                                # (6+G,D)

    kernel = functools.partial(_self_attention_kernel, num_heads=num_heads,
                               num_groups=num_groups, eps=eps)
    out_dtype = x.dtype

    out_tok = pl.pallas_call(
        kernel,
        out_shape=jax.ShapeDtypeStruct((B, S, D), out_dtype),
        grid_spec=pltpu.PrefetchScalarGridSpec(
            num_scalar_prefetch=0,
            grid=(B // Bt,),
            in_specs=[
                pl.BlockSpec((Bt, S, C), lambda b: (b, 0, 0)),
                pl.BlockSpec((C, 4 * D), lambda b: (0, 0)),
                pl.BlockSpec((6 + G, D), lambda b: (0, 0)),
            ],
            out_specs=pl.BlockSpec((Bt, S, D), lambda b: (b, 0, 0)),
            scratch_shapes=[pltpu.VMEM((Bt * S, D), jnp.float32)],
        ),
        compiler_params=pltpu.CompilerParams(
            dimension_semantics=("parallel",),
            vmem_limit_bytes=_vmem_limit_bytes(
                Bt, S, C, D, G, jnp.dtype(out_dtype).itemsize),
        ),
    )(x_tok, w_all, p_all)

    # Back to the module's (B, D, H, W) layout.
    return jnp.transpose(out_tok, (0, 2, 1)).reshape(B, D, H, W)


def self_attention_reference(x, wq, bq, wk, bk, wv, bv, wo, bo, gamma, beta, *,
                             num_heads, num_groups, eps=1e-5):
    """Pure-JAX reference mirroring the torch module, with the same intentional
    bf16 quantization of the matmul inputs as the kernel (math stays f32)."""
    hp = jax.lax.Precision.HIGHEST
    bf = lambda t: t.astype(jnp.bfloat16).astype(jnp.float32)
    B, C, H, W = x.shape
    D = wq.shape[1]
    S = H * W
    xq = bf(x)
    xs = jnp.transpose(xq.reshape(B, C, S), (0, 2, 1))               # (B, S, C)
    q = jnp.dot(xs, bf(wq), precision=hp) + bq
    k = jnp.dot(xs, bf(wk), precision=hp) + bk
    v = jnp.dot(xs, bf(wv), precision=hp) + bv
    dk = D // num_heads

    def split(t):  # (B, S, D) -> (B, H, S, dk); head h = channels [h*dk:(h+1)*dk]
        return jnp.transpose(t.reshape(B, S, num_heads, dk), (0, 2, 1, 3))

    qh, kh, vh = split(q), split(k), split(v)
    scores = jnp.einsum('bhqd,bhkd->bhqk', qh, kh, precision=hp) * (dk ** -0.5)
    probs = jax.nn.softmax(scores, axis=-1)
    attn = jnp.einsum('bhqk,bhkd->bhqd', probs, vh, precision=hp)
    attn = jnp.transpose(attn, (0, 2, 1, 3)).reshape(B, S, D)
    proj = jnp.dot(attn, bf(wo), precision=hp) + bo                  # (B, S, D)
    proj = jnp.transpose(proj, (0, 2, 1)).reshape(B, D, H, W)
    y = proj + xq
    yr = y.reshape(B, num_groups, D // num_groups, S)
    mean = jnp.mean(yr, axis=(2, 3), keepdims=True)
    var = jnp.mean((yr - mean) ** 2, axis=(2, 3), keepdims=True)
    yn = ((yr - mean) * jax.lax.rsqrt(var + eps)).reshape(B, D, H, W)
    return yn * gamma[None, :, None, None] + beta[None, :, None, None]


if __name__ == "__main__":
    # Module-consistent small shapes: the residual `proj + input` forces
    # in_size == embedding_dim; embedding_dim must be divisible by n_heads and
    # n_groups.  B=4 lets the wrapper block 2 batch elements per grid step
    # while keeping 2 parallel grid steps.
    B, H, W = 4, 8, 8
    D = 128                  # in_size == embedding_dim
    num_heads = 4
    num_groups = 32          # module default

    key = jax.random.PRNGKey(0)
    ks = jax.random.split(key, 9)
    bound = 1.0 / (D ** 0.5)   # torch.nn.Linear default init scale

    x = jax.random.normal(ks[0], (B, D, H, W), dtype=jnp.float32)
    wq = jax.random.uniform(ks[1], (D, D), jnp.float32, -bound, bound)
    wk = jax.random.uniform(ks[2], (D, D), jnp.float32, -bound, bound)
    wv = jax.random.uniform(ks[3], (D, D), jnp.float32, -bound, bound)
    wo = jax.random.uniform(ks[4], (D, D), jnp.float32, -bound, bound)
    bq = jax.random.uniform(ks[5], (D,), jnp.float32, -bound, bound)
    bk = jax.random.uniform(ks[6], (D,), jnp.float32, -bound, bound)
    bv = jax.random.uniform(ks[7], (D,), jnp.float32, -bound, bound)
    bo = jax.random.uniform(ks[8], (D,), jnp.float32, -bound, bound)
    gamma = jnp.ones((D,), jnp.float32)    # GroupNorm default weight
    beta = jnp.zeros((D,), jnp.float32)    # GroupNorm default bias

    out = self_attention_pallas(x, wq, bq, wk, bk, wv, bv, wo, bo, gamma, beta,
                                num_heads=num_heads, num_groups=num_groups)
    out = jax.block_until_ready(out)

    ref = self_attention_reference(x, wq, bq, wk, bk, wv, bv, wo, bo, gamma, beta,
                                   num_heads=num_heads, num_groups=num_groups)
    assert out.shape == (B, D, H, W)
    # Tolerance covers bf16-operand MXU accumulation-order differences and the
    # EUP approximate reciprocal in the deferred softmax normalization.
    err = float(jnp.max(jnp.abs(out - ref)))
    assert jnp.allclose(out, ref, atol=2e-2, rtol=2e-2), err
    print("KERNEL_OK")
</pallas_src>

<mosaic_0001>
module attributes {stable_mosaic.version = 11 : i64} {
  func.func @_self_attention_kernel(%arg0: i32, %arg1: memref<2x64x128xbf16, #tpu.memory_space<vmem>>, %arg2: memref<128x512xbf16, #tpu.memory_space<vmem>>, %arg3: memref<38x128xf32, #tpu.memory_space<vmem>>, %arg4: memref<2x64x128xf32, #tpu.memory_space<vmem>>, %arg5: memref<128x128xf32, #tpu.memory_space<vmem>>) attributes {dimension_semantics = [#tpu.dimension_semantics<parallel>], iteration_bounds = array<i64: 2>, scalar_prefetch = 0 : i64, scratch_operands = 1 : i64, tpu.core_type = #tpu.core_type<tc>, window_params = [{transform_indices = @transform_0, window_bounds = array<i64: 2, 64, 128>}, {pipeline_mode = #tpu.pipeline_mode<synchronous>, transform_indices = @transform_1, window_bounds = array<i64: 128, 512>}, {pipeline_mode = #tpu.pipeline_mode<synchronous>, transform_indices = @transform_2, window_bounds = array<i64: 38, 128>}, {transform_indices = @transform_3, window_bounds = array<i64: 2, 64, 128>}]} {
    %c0 = arith.constant 0 : index
    %c0_0 = arith.constant 0 : index
    %c0_1 = arith.constant 0 : index
    %0 = vector.load %arg1[%c0, %c0_0, %c0_1] : memref<2x64x128xbf16, #tpu.memory_space<vmem>>, vector<2x64x128xbf16>
    %1 = vector.shape_cast %0 : vector<2x64x128xbf16> to vector<128x128xbf16>
    %c0_2 = arith.constant 0 : index
    %c0_3 = arith.constant 0 : index
    %2 = vector.load %arg3[%c0_2, %c0_3] : memref<38x128xf32, #tpu.memory_space<vmem>>, vector<6x128xf32>
    %c6 = arith.constant 6 : index
    %c0_4 = arith.constant 0 : index
    %3 = vector.load %arg3[%c6, %c0_4] : memref<38x128xf32, #tpu.memory_space<vmem>>, vector<32x128xf32>
    %c0_5 = arith.constant 0 : index
    %c0_6 = arith.constant 0 : index
    %4 = vector.load %arg2[%c0_5, %c0_6] : memref<128x512xbf16, #tpu.memory_space<vmem>>, vector<128x384xbf16>
    %cst = arith.constant dense<0.000000e+00> : vector<128x384xf32>
    %5 = tpu.matmul %1, %4, %cst {dimension_numbers = #tpu.dot_dimension_numbers<[1], [0], [0], [1], [0, 0, 1, 1], [], []>} : vector<128x128xbf16>, vector<128x384xbf16>, vector<128x384xf32> -> vector<128x384xf32>
    %6 = vector.extract_strided_slice %5 {offsets = [0, 0], sizes = [128, 128], strides = [1, 1]} : vector<128x384xf32> to vector<128x128xf32>
    %7 = vector.extract_strided_slice %2 {offsets = [0, 0], sizes = [1, 128], strides = [1, 1]} : vector<6x128xf32> to vector<1x128xf32>
    %8 = vector.broadcast %7 : vector<1x128xf32> to vector<128x128xf32>
    %9 = arith.addf %6, %8 : vector<128x128xf32>
    %cst_7 = arith.constant 0.176776692 : f32
    %10 = vector.broadcast %cst_7 : f32 to vector<128x128xf32>
    %11 = arith.mulf %9, %10 : vector<128x128xf32>
    %12 = arith.truncf %11 : vector<128x128xf32> to vector<128x128xbf16>
    %13 = vector.extract_strided_slice %5 {offsets = [0, 128], sizes = [128, 128], strides = [1, 1]} : vector<128x384xf32> to vector<128x128xf32>
    %14 = vector.extract_strided_slice %2 {offsets = [1, 0], sizes = [1, 128], strides = [1, 1]} : vector<6x128xf32> to vector<1x128xf32>
    %15 = vector.broadcast %14 : vector<1x128xf32> to vector<128x128xf32>
    %16 = arith.addf %13, %15 : vector<128x128xf32>
    %17 = arith.truncf %16 : vector<128x128xf32> to vector<128x128xbf16>
    %18 = vector.extract_strided_slice %5 {offsets = [0, 256], sizes = [128, 128], strides = [1, 1]} : vector<128x384xf32> to vector<128x128xf32>
    %19 = vector.extract_strided_slice %2 {offsets = [2, 0], sizes = [1, 128], strides = [1, 1]} : vector<6x128xf32> to vector<1x128xf32>
    %20 = vector.broadcast %19 : vector<1x128xf32> to vector<128x128xf32>
    %21 = arith.addf %18, %20 : vector<128x128xf32>
    %22 = arith.truncf %21 : vector<128x128xf32> to vector<128x128xbf16>
    %23 = vector.extract_strided_slice %12 {offsets = [0, 0], sizes = [64, 32], strides = [1, 1]} : vector<128x128xbf16> to vector<64x32xbf16>
    %24 = vector.extract_strided_slice %17 {offsets = [0, 0], sizes = [64, 32], strides = [1, 1]} : vector<128x128xbf16> to vector<64x32xbf16>
    %25 = vector.extract_strided_slice %22 {offsets = [0, 0], sizes = [64, 32], strides = [1, 1]} : vector<128x128xbf16> to vector<64x32xbf16>
    %cst_8 = arith.constant dense<0.000000e+00> : vector<64x64xf32>
    %26 = tpu.matmul %23, %24, %cst_8 {dimension_numbers = #tpu.dot_dimension_numbers<[1], [1], [0], [0], [0, 0, 1, 0], [], []>} : vector<64x32xbf16>, vector<64x32xbf16>, vector<64x64xf32> -> vector<64x64xf32>
    %cst_9 = arith.constant dense<0xFF800000> : vector<64xf32>
    %27 = vector.multi_reduction <maximumf>, %26, %cst_9 [1] : vector<64x64xf32> to vector<64xf32>
    %28 = vector.shape_cast %27 : vector<64xf32> to vector<64x1xf32>
    %29 = vector.broadcast %28 : vector<64x1xf32> to vector<64x64xf32>
    %30 = arith.subf %26, %29 : vector<64x64xf32>
    %31 = math.exp %30 : vector<64x64xf32>
    %cst_10 = arith.constant dense<0.000000e+00> : vector<64xf32>
    %32 = vector.multi_reduction <add>, %31, %cst_10 [1] : vector<64x64xf32> to vector<64xf32>
    %33 = vector.shape_cast %32 : vector<64xf32> to vector<64x1xf32>
    %34 = arith.truncf %31 : vector<64x64xf32> to vector<64x64xbf16>
    %cst_11 = arith.constant dense<0.000000e+00> : vector<64x32xf32>
    %35 = tpu.matmul %34, %25, %cst_11 {dimension_numbers = #tpu.dot_dimension_numbers<[1], [0], [0], [1], [0, 0, 1, 1], [], []>} : vector<64x64xbf16>, vector<64x32xbf16>, vector<64x32xf32> -> vector<64x32xf32>
    %36 = tpu.reciprocal %33 {approx = true} : vector<64x1xf32> -> vector<64x1xf32>
    %37 = vector.broadcast %36 : vector<64x1xf32> to vector<64x32xf32>
    %38 = arith.mulf %35, %37 : vector<64x32xf32>
    %c0_12 = arith.constant 0 : index
    %c0_13 = arith.constant 0 : index
    %39 = vector.load %arg5[%c0_12, %c0_13] : memref<128x128xf32, #tpu.memory_space<vmem>>, vector<64x32xf32>
    tpu.vector_store %arg5[%c0_12, %c0_13], %38 {strides = array<i32>} : memref<128x128xf32, #tpu.memory_space<vmem>>, vector<64x32xf32>,
    %40 = vector.extract_strided_slice %12 {offsets = [0, 32], sizes = [64, 32], strides = [1, 1]} : vector<128x128xbf16> to vector<64x32xbf16>
    %41 = vector.extract_strided_slice %17 {offsets = [0, 32], sizes = [64, 32], strides = [1, 1]} : vector<128x128xbf16> to vector<64x32xbf16>
    %42 = vector.extract_strided_slice %22 {offsets = [0, 32], sizes = [64, 32], strides = [1, 1]} : vector<128x128xbf16> to vector<64x32xbf16>
    %cst_14 = arith.constant dense<0.000000e+00> : vector<64x64xf32>
    %43 = tpu.matmul %40, %41, %cst_14 {dimension_numbers = #tpu.dot_dimension_numbers<[1], [1], [0], [0], [0, 0, 1, 0], [], []>} : vector<64x32xbf16>, vector<64x32xbf16>, vector<64x64xf32> -> vector<64x64xf32>
    %cst_15 = arith.constant dense<0xFF800000> : vector<64xf32>
    %44 = vector.multi_reduction <maximumf>, %43, %cst_15 [1] : vector<64x64xf32> to vector<64xf32>
    %45 = vector.shape_cast %44 : vector<64xf32> to vector<64x1xf32>
    %46 = vector.broadcast %45 : vector<64x1xf32> to vector<64x64xf32>
    %47 = arith.subf %43, %46 : vector<64x64xf32>
    %48 = math.exp %47 : vector<64x64xf32>
    %cst_16 = arith.constant dense<0.000000e+00> : vector<64xf32>
    %49 = vector.multi_reduction <add>, %48, %cst_16 [1] : vector<64x64xf32> to vector<64xf32>
    %50 = vector.shape_cast %49 : vector<64xf32> to vector<64x1xf32>
    %51 = arith.truncf %48 : vector<64x64xf32> to vector<64x64xbf16>
    %cst_17 = arith.constant dense<0.000000e+00> : vector<64x32xf32>
    %52 = tpu.matmul %51, %42, %cst_17 {dimension_numbers = #tpu.dot_dimension_numbers<[1], [0], [0], [1], [0, 0, 1, 1], [], []>} : vector<64x64xbf16>, vector<64x32xbf16>, vector<64x32xf32> -> vector<64x32xf32>
    %53 = tpu.reciprocal %50 {approx = true} : vector<64x1xf32> -> vector<64x1xf32>
    %54 = vector.broadcast %53 : vector<64x1xf32> to vector<64x32xf32>
    %55 = arith.mulf %52, %54 : vector<64x32xf32>
    %c0_18 = arith.constant 0 : index
    %c32 = arith.constant 32 : index
    %56 = vector.load %arg5[%c0_18, %c32] : memref<128x128xf32, #tpu.memory_space<vmem>>, vector<64x32xf32>
    tpu.vector_store %arg5[%c0_18, %c32], %55 {strides = array<i32>} : memref<128x128xf32, #tpu.memory_space<vmem>>, vector<64x32xf32>,
    %57 = vector.extract_strided_slice %12 {offsets = [0, 64], sizes = [64, 32], strides = [1, 1]} : vector<128x128xbf16> to vector<64x32xbf16>
    %58 = vector.extract_strided_slice %17 {offsets = [0, 64], sizes = [64, 32], strides = [1, 1]} : vector<128x128xbf16> to vector<64x32xbf16>
    %59 = vector.extract_strided_slice %22 {offsets = [0, 64], sizes = [64, 32], strides = [1, 1]} : vector<128x128xbf16> to vector<64x32xbf16>
    %cst_19 = arith.constant dense<0.000000e+00> : vector<64x64xf32>
    %60 = tpu.matmul %57, %58, %cst_19 {dimension_numbers = #tpu.dot_dimension_numbers<[1], [1], [0], [0], [0, 0, 1, 0], [], []>} : vector<64x32xbf16>, vector<64x32xbf16>, vector<64x64xf32> -> vector<64x64xf32>
    %cst_20 = arith.constant dense<0xFF800000> : vector<64xf32>
    %61 = vector.multi_reduction <maximumf>, %60, %cst_20 [1] : vector<64x64xf32> to vector<64xf32>
    %62 = vector.shape_cast %61 : vector<64xf32> to vector<64x1xf32>
    %63 = vector.broadcast %62 : vector<64x1xf32> to vector<64x64xf32>
    %64 = arith.subf %60, %63 : vector<64x64xf32>
    %65 = math.exp %64 : vector<64x64xf32>
    %cst_21 = arith.constant dense<0.000000e+00> : vector<64xf32>
    %66 = vector.multi_reduction <add>, %65, %cst_21 [1] : vector<64x64xf32> to vector<64xf32>
    %67 = vector.shape_cast %66 : vector<64xf32> to vector<64x1xf32>
    %68 = arith.truncf %65 : vector<64x64xf32> to vector<64x64xbf16>
    %cst_22 = arith.constant dense<0.000000e+00> : vector<64x32xf32>
    %69 = tpu.matmul %68, %59, %cst_22 {dimension_numbers = #tpu.dot_dimension_numbers<[1], [0], [0], [1], [0, 0, 1, 1], [], []>} : vector<64x64xbf16>, vector<64x32xbf16>, vector<64x32xf32> -> vector<64x32xf32>
    %70 = tpu.reciprocal %67 {approx = true} : vector<64x1xf32> -> vector<64x1xf32>
    %71 = vector.broadcast %70 : vector<64x1xf32> to vector<64x32xf32>
    %72 = arith.mulf %69, %71 : vector<64x32xf32>
    %c0_23 = arith.constant 0 : index
    %c64 = arith.constant 64 : index
    %73 = vector.load %arg5[%c0_23, %c64] : memref<128x128xf32, #tpu.memory_space<vmem>>, vector<64x32xf32>
    tpu.vector_store %arg5[%c0_23, %c64], %72 {strides = array<i32>} : memref<128x128xf32, #tpu.memory_space<vmem>>, vector<64x32xf32>,
    %74 = vector.extract_strided_slice %12 {offsets = [0, 96], sizes = [64, 32], strides = [1, 1]} : vector<128x128xbf16> to vector<64x32xbf16>
    %75 = vector.extract_strided_slice %17 {offsets = [0, 96], sizes = [64, 32], strides = [1, 1]} : vector<128x128xbf16> to vector<64x32xbf16>
    %76 = vector.extract_strided_slice %22 {offsets = [0, 96], sizes = [64, 32], strides = [1, 1]} : vector<128x128xbf16> to vector<64x32xbf16>
    %cst_24 = arith.constant dense<0.000000e+00> : vector<64x64xf32>
    %77 = tpu.matmul %74, %75, %cst_24 {dimension_numbers = #tpu.dot_dimension_numbers<[1], [1], [0], [0], [0, 0, 1, 0], [], []>} : vector<64x32xbf16>, vector<64x32xbf16>, vector<64x64xf32> -> vector<64x64xf32>
    %cst_25 = arith.constant dense<0xFF800000> : vector<64xf32>
    %78 = vector.multi_reduction <maximumf>, %77, %cst_25 [1] : vector<64x64xf32> to vector<64xf32>
    %79 = vector.shape_cast %78 : vector<64xf32> to vector<64x1xf32>
    %80 = vector.broadcast %79 : vector<64x1xf32> to vector<64x64xf32>
    %81 = arith.subf %77, %80 : vector<64x64xf32>
    %82 = math.exp %81 : vector<64x64xf32>
    %cst_26 = arith.constant dense<0.000000e+00> : vector<64xf32>
    %83 = vector.multi_reduction <add>, %82, %cst_26 [1] : vector<64x64xf32> to vector<64xf32>
    %84 = vector.shape_cast %83 : vector<64xf32> to vector<64x1xf32>
    %85 = arith.truncf %82 : vector<64x64xf32> to vector<64x64xbf16>
    %cst_27 = arith.constant dense<0.000000e+00> : vector<64x32xf32>
    %86 = tpu.matmul %85, %76, %cst_27 {dimension_numbers = #tpu.dot_dimension_numbers<[1], [0], [0], [1], [0, 0, 1, 1], [], []>} : vector<64x64xbf16>, vector<64x32xbf16>, vector<64x32xf32> -> vector<64x32xf32>
    %87 = tpu.reciprocal %84 {approx = true} : vector<64x1xf32> -> vector<64x1xf32>
    %88 = vector.broadcast %87 : vector<64x1xf32> to vector<64x32xf32>
    %89 = arith.mulf %86, %88 : vector<64x32xf32>
    %c0_28 = arith.constant 0 : index
    %c96 = arith.constant 96 : index
    %90 = vector.load %arg5[%c0_28, %c96] : memref<128x128xf32, #tpu.memory_space<vmem>>, vector<64x32xf32>
    tpu.vector_store %arg5[%c0_28, %c96], %89 {strides = array<i32>} : memref<128x128xf32, #tpu.memory_space<vmem>>, vector<64x32xf32>,
    %91 = vector.extract_strided_slice %12 {offsets = [64, 0], sizes = [64, 32], strides = [1, 1]} : vector<128x128xbf16> to vector<64x32xbf16>
    %92 = vector.extract_strided_slice %17 {offsets = [64, 0], sizes = [64, 32], strides = [1, 1]} : vector<128x128xbf16> to vector<64x32xbf16>
    %93 = vector.extract_strided_slice %22 {offsets = [64, 0], sizes = [64, 32], strides = [1, 1]} : vector<128x128xbf16> to vector<64x32xbf16>
    %cst_29 = arith.constant dense<0.000000e+00> : vector<64x64xf32>
    %94 = tpu.matmul %91, %92, %cst_29 {dimension_numbers = #tpu.dot_dimension_numbers<[1], [1], [0], [0], [0, 0, 1, 0], [], []>} : vector<64x32xbf16>, vector<64x32xbf16>, vector<64x64xf32> -> vector<64x64xf32>
    %cst_30 = arith.constant dense<0xFF800000> : vector<64xf32>
    %95 = vector.multi_reduction <maximumf>, %94, %cst_30 [1] : vector<64x64xf32> to vector<64xf32>
    %96 = vector.shape_cast %95 : vector<64xf32> to vector<64x1xf32>
    %97 = vector.broadcast %96 : vector<64x1xf32> to vector<64x64xf32>
    %98 = arith.subf %94, %97 : vector<64x64xf32>
    %99 = math.exp %98 : vector<64x64xf32>
    %cst_31 = arith.constant dense<0.000000e+00> : vector<64xf32>
    %100 = vector.multi_reduction <add>, %99, %cst_31 [1] : vector<64x64xf32> to vector<64xf32>
    %101 = vector.shape_cast %100 : vector<64xf32> to vector<64x1xf32>
    %102 = arith.truncf %99 : vector<64x64xf32> to vector<64x64xbf16>
    %cst_32 = arith.constant dense<0.000000e+00> : vector<64x32xf32>
    %103 = tpu.matmul %102, %93, %cst_32 {dimension_numbers = #tpu.dot_dimension_numbers<[1], [0], [0], [1], [0, 0, 1, 1], [], []>} : vector<64x64xbf16>, vector<64x32xbf16>, vector<64x32xf32> -> vector<64x32xf32>
    %104 = tpu.reciprocal %101 {approx = true} : vector<64x1xf32> -> vector<64x1xf32>
    %105 = vector.broadcast %104 : vector<64x1xf32> to vector<64x32xf32>
    %106 = arith.mulf %103, %105 : vector<64x32xf32>
    %c64_33 = arith.constant 64 : index
    %c0_34 = arith.constant 0 : index
    %107 = vector.load %arg5[%c64_33, %c0_34] : memref<128x128xf32, #tpu.memory_space<vmem>>, vector<64x32xf32>
    tpu.vector_store %arg5[%c64_33, %c0_34], %106 {strides = array<i32>} : memref<128x128xf32, #tpu.memory_space<vmem>>, vector<64x32xf32>,
    %108 = vector.extract_strided_slice %12 {offsets = [64, 32], sizes = [64, 32], strides = [1, 1]} : vector<128x128xbf16> to vector<64x32xbf16>
    %109 = vector.extract_strided_slice %17 {offsets = [64, 32], sizes = [64, 32], strides = [1, 1]} : vector<128x128xbf16> to vector<64x32xbf16>
    %110 = vector.extract_strided_slice %22 {offsets = [64, 32], sizes = [64, 32], strides = [1, 1]} : vector<128x128xbf16> to vector<64x32xbf16>
    %cst_35 = arith.constant dense<0.000000e+00> : vector<64x64xf32>
    %111 = tpu.matmul %108, %109, %cst_35 {dimension_numbers = #tpu.dot_dimension_numbers<[1], [1], [0], [0], [0, 0, 1, 0], [], []>} : vector<64x32xbf16>, vector<64x32xbf16>, vector<64x64xf32> -> vector<64x64xf32>
    %cst_36 = arith.constant dense<0xFF800000> : vector<64xf32>
    %112 = vector.multi_reduction <maximumf>, %111, %cst_36 [1] : vector<64x64xf32> to vector<64xf32>
    %113 = vector.shape_cast %112 : vector<64xf32> to vector<64x1xf32>
    %114 = vector.broadcast %113 : vector<64x1xf32> to vector<64x64xf32>
    %115 = arith.subf %111, %114 : vector<64x64xf32>
    %116 = math.exp %115 : vector<64x64xf32>
    %cst_37 = arith.constant dense<0.000000e+00> : vector<64xf32>
    %117 = vector.multi_reduction <add>, %116, %cst_37 [1] : vector<64x64xf32> to vector<64xf32>
    %118 = vector.shape_cast %117 : vector<64xf32> to vector<64x1xf32>
    %119 = arith.truncf %116 : vector<64x64xf32> to vector<64x64xbf16>
    %cst_38 = arith.constant dense<0.000000e+00> : vector<64x32xf32>
    %120 = tpu.matmul %119, %110, %cst_38 {dimension_numbers = #tpu.dot_dimension_numbers<[1], [0], [0], [1], [0, 0, 1, 1], [], []>} : vector<64x64xbf16>, vector<64x32xbf16>, vector<64x32xf32> -> vector<64x32xf32>
    %121 = tpu.reciprocal %118 {approx = true} : vector<64x1xf32> -> vector<64x1xf32>
    %122 = vector.broadcast %121 : vector<64x1xf32> to vector<64x32xf32>
    %123 = arith.mulf %120, %122 : vector<64x32xf32>
    %c64_39 = arith.constant 64 : index
    %c32_40 = arith.constant 32 : index
    %124 = vector.load %arg5[%c64_39, %c32_40] : memref<128x128xf32, #tpu.memory_space<vmem>>, vector<64x32xf32>
    tpu.vector_store %arg5[%c64_39, %c32_40], %123 {strides = array<i32>} : memref<128x128xf32, #tpu.memory_space<vmem>>, vector<64x32xf32>,
    %125 = vector.extract_strided_slice %12 {offsets = [64, 64], sizes = [64, 32], strides = [1, 1]} : vector<128x128xbf16> to vector<64x32xbf16>
    %126 = vector.extract_strided_slice %17 {offsets = [64, 64], sizes = [64, 32], strides = [1, 1]} : vector<128x128xbf16> to vector<64x32xbf16>
    %127 = vector.extract_strided_slice %22 {offsets = [64, 64], sizes = [64, 32], strides = [1, 1]} : vector<128x128xbf16> to vector<64x32xbf16>
    %cst_41 = arith.constant dense<0.000000e+00> : vector<64x64xf32>
    %128 = tpu.matmul %125, %126, %cst_41 {dimension_numbers = #tpu.dot_dimension_numbers<[1], [1], [0], [0], [0, 0, 1, 0], [], []>} : vector<64x32xbf16>, vector<64x32xbf16>, vector<64x64xf32> -> vector<64x64xf32>
    %cst_42 = arith.constant dense<0xFF800000> : vector<64xf32>
    %129 = vector.multi_reduction <maximumf>, %128, %cst_42 [1] : vector<64x64xf32> to vector<64xf32>
    %130 = vector.shape_cast %129 : vector<64xf32> to vector<64x1xf32>
    %131 = vector.broadcast %130 : vector<64x1xf32> to vector<64x64xf32>
    %132 = arith.subf %128, %131 : vector<64x64xf32>
    %133 = math.exp %132 : vector<64x64xf32>
    %cst_43 = arith.constant dense<0.000000e+00> : vector<64xf32>
    %134 = vector.multi_reduction <add>, %133, %cst_43 [1] : vector<64x64xf32> to vector<64xf32>
    %135 = vector.shape_cast %134 : vector<64xf32> to vector<64x1xf32>
    %136 = arith.truncf %133 : vector<64x64xf32> to vector<64x64xbf16>
    %cst_44 = arith.constant dense<0.000000e+00> : vector<64x32xf32>
    %137 = tpu.matmul %136, %127, %cst_44 {dimension_numbers = #tpu.dot_dimension_numbers<[1], [0], [0], [1], [0, 0, 1, 1], [], []>} : vector<64x64xbf16>, vector<64x32xbf16>, vector<64x32xf32> -> vector<64x32xf32>
    %138 = tpu.reciprocal %135 {approx = true} : vector<64x1xf32> -> vector<64x1xf32>
    %139 = vector.broadcast %138 : vector<64x1xf32> to vector<64x32xf32>
    %140 = arith.mulf %137, %139 : vector<64x32xf32>
    %c64_45 = arith.constant 64 : index
    %c64_46 = arith.constant 64 : index
    %141 = vector.load %arg5[%c64_45, %c64_46] : memref<128x128xf32, #tpu.memory_space<vmem>>, vector<64x32xf32>
    tpu.vector_store %arg5[%c64_45, %c64_46], %140 {strides = array<i32>} : memref<128x128xf32, #tpu.memory_space<vmem>>, vector<64x32xf32>,
    %142 = vector.extract_strided_slice %12 {offsets = [64, 96], sizes = [64, 32], strides = [1, 1]} : vector<128x128xbf16> to vector<64x32xbf16>
    %143 = vector.extract_strided_slice %17 {offsets = [64, 96], sizes = [64, 32], strides = [1, 1]} : vector<128x128xbf16> to vector<64x32xbf16>
    %144 = vector.extract_strided_slice %22 {offsets = [64, 96], sizes = [64, 32], strides = [1, 1]} : vector<128x128xbf16> to vector<64x32xbf16>
    %cst_47 = arith.constant dense<0.000000e+00> : vector<64x64xf32>
    %145 = tpu.matmul %142, %143, %cst_47 {dimension_numbers = #tpu.dot_dimension_numbers<[1], [1], [0], [0], [0, 0, 1, 0], [], []>} : vector<64x32xbf16>, vector<64x32xbf16>, vector<64x64xf32> -> vector<64x64xf32>
    %cst_48 = arith.constant dense<0xFF800000> : vector<64xf32>
    %146 = vector.multi_reduction <maximumf>, %145, %cst_48 [1] : vector<64x64xf32> to vector<64xf32>
    %147 = vector.shape_cast %146 : vector<64xf32> to vector<64x1xf32>
    %148 = vector.broadcast %147 : vector<64x1xf32> to vector<64x64xf32>
    %149 = arith.subf %145, %148 : vector<64x64xf32>
    %150 = math.exp %149 : vector<64x64xf32>
    %cst_49 = arith.constant dense<0.000000e+00> : vector<64xf32>
    %151 = vector.multi_reduction <add>, %150, %cst_49 [1] : vector<64x64xf32> to vector<64xf32>
    %152 = vector.shape_cast %151 : vector<64xf32> to vector<64x1xf32>
    %153 = arith.truncf %150 : vector<64x64xf32> to vector<64x64xbf16>
    %cst_50 = arith.constant dense<0.000000e+00> : vector<64x32xf32>
    %154 = tpu.matmul %153, %144, %cst_50 {dimension_numbers = #tpu.dot_dimension_numbers<[1], [0], [0], [1], [0, 0, 1, 1], [], []>} : vector<64x64xbf16>, vector<64x32xbf16>, vector<64x32xf32> -> vector<64x32xf32>
    %155 = tpu.reciprocal %152 {approx = true} : vector<64x1xf32> -> vector<64x1xf32>
    %156 = vector.broadcast %155 : vector<64x1xf32> to vector<64x32xf32>
    %157 = arith.mulf %154, %156 : vector<64x32xf32>
    %c64_51 = arith.constant 64 : index
    %c96_52 = arith.constant 96 : index
    %158 = vector.load %arg5[%c64_51, %c96_52] : memref<128x128xf32, #tpu.memory_space<vmem>>, vector<64x32xf32>
    tpu.vector_store %arg5[%c64_51, %c96_52], %157 {strides = array<i32>} : memref<128x128xf32, #tpu.memory_space<vmem>>, vector<64x32xf32>,
    %c0_53 = arith.constant 0 : index
    %c0_54 = arith.constant 0 : index
    %159 = vector.load %arg5[%c0_53, %c0_54] : memref<128x128xf32, #tpu.memory_space<vmem>>, vector<128x128xf32>
    %160 = arith.truncf %159 : vector<128x128xf32> to vector<128x128xbf16>
    %c0_55 = arith.constant 0 : index
    %c384 = arith.constant 384 : index
    %161 = vector.load %arg2[%c0_55, %c384] : memref<128x512xbf16, #tpu.memory_space<vmem>>, vector<128x128xbf16>
    %cst_56 = arith.constant dense<0.000000e+00> : vector<128x128xf32>
    %162 = tpu.matmul %160, %161, %cst_56 {dimension_numbers = #tpu.dot_dimension_numbers<[1], [0], [0], [1], [0, 0, 1, 1], [], []>} : vector<128x128xbf16>, vector<128x128xbf16>, vector<128x128xf32> -> vector<128x128xf32>
    %163 = vector.extract_strided_slice %2 {offsets = [3, 0], sizes = [1, 128], strides = [1, 1]} : vector<6x128xf32> to vector<1x128xf32>
    %164 = vector.broadcast %163 : vector<1x128xf32> to vector<128x128xf32>
    %165 = arith.addf %162, %164 : vector<128x128xf32>
    %166 = arith.extf %1 : vector<128x128xbf16> to vector<128x128xf32>
    %167 = arith.addf %165, %166 : vector<128x128xf32>
    %168 = vector.extract_strided_slice %2 {offsets = [4, 0], sizes = [1, 128], strides = [1, 1]} : vector<6x128xf32> to vector<1x128xf32>
    %169 = vector.extract_strided_slice %2 {offsets = [5, 0], sizes = [1, 128], strides = [1, 1]} : vector<6x128xf32> to vector<1x128xf32>
    %170 = vector.extract_strided_slice %167 {offsets = [0, 0], sizes = [64, 128], strides = [1, 1]} : vector<128x128xf32> to vector<64x128xf32>
    %cst_57 = arith.constant dense<0.000000e+00> : vector<128xf32>
    %171 = vector.multi_reduction <add>, %170, %cst_57 [0] : vector<64x128xf32> to vector<128xf32>
    %172 = vector.shape_cast %171 : vector<128xf32> to vector<1x128xf32>
    %cst_58 = arith.constant dense<0.000000e+00> : vector<1x32xf32>
    %173 = tpu.matmul %172, %3, %cst_58 {dimension_numbers = #tpu.dot_dimension_numbers<[1], [1], [0], [0], [0, 0, 1, 0], [], []>} : vector<1x128xf32>, vector<32x128xf32>, vector<1x32xf32> -> vector<1x32xf32>
    %cst_59 = arith.constant 2.560000e+02 : f32
    %174 = vector.broadcast %cst_59 : f32 to vector<1x32xf32>
    %175 = arith.divf %173, %174 : vector<1x32xf32>
    %cst_60 = arith.constant dense<0.000000e+00> : vector<1x128xf32>
    %176 = tpu.matmul %175, %3, %cst_60 {dimension_numbers = #tpu.dot_dimension_numbers<[1], [0], [0], [1], [0, 0, 1, 1], [], []>} : vector<1x32xf32>, vector<32x128xf32>, vector<1x128xf32> -> vector<1x128xf32>
    %177 = vector.broadcast %176 : vector<1x128xf32> to vector<64x128xf32>
    %178 = arith.subf %170, %177 : vector<64x128xf32>
    %179 = arith.mulf %178, %178 : vector<64x128xf32>
    %cst_61 = arith.constant dense<0.000000e+00> : vector<128xf32>
    %180 = vector.multi_reduction <add>, %179, %cst_61 [0] : vector<64x128xf32> to vector<128xf32>
    %181 = vector.shape_cast %180 : vector<128xf32> to vector<1x128xf32>
    %cst_62 = arith.constant dense<0.000000e+00> : vector<1x32xf32>
    %182 = tpu.matmul %181, %3, %cst_62 {dimension_numbers = #tpu.dot_dimension_numbers<[1], [1], [0], [0], [0, 0, 1, 0], [], []>} : vector<1x128xf32>, vector<32x128xf32>, vector<1x32xf32> -> vector<1x32xf32>
    %cst_63 = arith.constant 2.560000e+02 : f32
    %183 = vector.broadcast %cst_63 : f32 to vector<1x32xf32>
    %184 = arith.divf %182, %183 : vector<1x32xf32>
    %cst_64 = arith.constant 9.99999974E-6 : f32
    %185 = vector.broadcast %cst_64 : f32 to vector<1x32xf32>
    %186 = arith.addf %184, %185 : vector<1x32xf32>
    %187 = math.rsqrt %186 : vector<1x32xf32>
    %cst_65 = arith.constant dense<0.000000e+00> : vector<1x128xf32>
    %188 = tpu.matmul %187, %3, %cst_65 {dimension_numbers = #tpu.dot_dimension_numbers<[1], [0], [0], [1], [0, 0, 1, 1], [], []>} : vector<1x32xf32>, vector<32x128xf32>, vector<1x128xf32> -> vector<1x128xf32>
    %189 = arith.mulf %188, %168 : vector<1x128xf32>
    %190 = vector.broadcast %189 : vector<1x128xf32> to vector<64x128xf32>
    %191 = arith.mulf %178, %190 : vector<64x128xf32>
    %192 = vector.broadcast %169 : vector<1x128xf32> to vector<64x128xf32>
    %193 = arith.addf %191, %192 : vector<64x128xf32>
    %c0_66 = arith.constant 0 : index
    %c0_67 = arith.constant 0 : index
    %c0_68 = arith.constant 0 : index
    %194 = vector.load %arg4[%c0_66, %c0_67, %c0_68] : memref<2x64x128xf32, #tpu.memory_space<vmem>>, vector<1x64x128xf32>
    %195 = vector.shape_cast %194 : vector<1x64x128xf32> to vector<64x128xf32>
    %196 = vector.shape_cast %193 : vector<64x128xf32> to vector<1x64x128xf32>
    tpu.vector_store %arg4[%c0_66, %c0_67, %c0_68], %196 {strides = array<i32>} : memref<2x64x128xf32, #tpu.memory_space<vmem>>, vector<1x64x128xf32>,
    %197 = vector.extract_strided_slice %167 {offsets = [64, 0], sizes = [64, 128], strides = [1, 1]} : vector<128x128xf32> to vector<64x128xf32>
    %cst_69 = arith.constant dense<0.000000e+00> : vector<128xf32>
    %198 = vector.multi_reduction <add>, %197, %cst_69 [0] : vector<64x128xf32> to vector<128xf32>
    %199 = vector.shape_cast %198 : vector<128xf32> to vector<1x128xf32>
    %cst_70 = arith.constant dense<0.000000e+00> : vector<1x32xf32>
    %200 = tpu.matmul %199, %3, %cst_70 {dimension_numbers = #tpu.dot_dimension_numbers<[1], [1], [0], [0], [0, 0, 1, 0], [], []>} : vector<1x128xf32>, vector<32x128xf32>, vector<1x32xf32> -> vector<1x32xf32>
    %cst_71 = arith.constant 2.560000e+02 : f32
    %201 = vector.broadcast %cst_71 : f32 to vector<1x32xf32>
    %202 = arith.divf %200, %201 : vector<1x32xf32>
    %cst_72 = arith.constant dense<0.000000e+00> : vector<1x128xf32>
    %203 = tpu.matmul %202, %3, %cst_72 {dimension_numbers = #tpu.dot_dimension_numbers<[1], [0], [0], [1], [0, 0, 1, 1], [], []>} : vector<1x32xf32>, vector<32x128xf32>, vector<1x128xf32> -> vector<1x128xf32>
    %204 = vector.broadcast %203 : vector<1x128xf32> to vector<64x128xf32>
    %205 = arith.subf %197, %204 : vector<64x128xf32>
    %206 = arith.mulf %205, %205 : vector<64x128xf32>
    %cst_73 = arith.constant dense<0.000000e+00> : vector<128xf32>
    %207 = vector.multi_reduction <add>, %206, %cst_73 [0] : vector<64x128xf32> to vector<128xf32>
    %208 = vector.shape_cast %207 : vector<128xf32> to vector<1x128xf32>
    %cst_74 = arith.constant dense<0.000000e+00> : vector<1x32xf32>
    %209 = tpu.matmul %208, %3, %cst_74 {dimension_numbers = #tpu.dot_dimension_numbers<[1], [1], [0], [0], [0, 0, 1, 0], [], []>} : vector<1x128xf32>, vector<32x128xf32>, vector<1x32xf32> -> vector<1x32xf32>
    %cst_75 = arith.constant 2.560000e+02 : f32
    %210 = vector.broadcast %cst_75 : f32 to vector<1x32xf32>
    %211 = arith.divf %209, %210 : vector<1x32xf32>
    %cst_76 = arith.constant 9.99999974E-6 : f32
    %212 = vector.broadcast %cst_76 : f32 to vector<1x32xf32>
    %213 = arith.addf %211, %212 : vector<1x32xf32>
    %214 = math.rsqrt %213 : vector<1x32xf32>
    %cst_77 = arith.constant dense<0.000000e+00> : vector<1x128xf32>
    %215 = tpu.matmul %214, %3, %cst_77 {dimension_numbers = #tpu.dot_dimension_numbers<[1], [0], [0], [1], [0, 0, 1, 1], [], []>} : vector<1x32xf32>, vector<32x128xf32>, vector<1x128xf32> -> vector<1x128xf32>
    %216 = arith.mulf %215, %168 : vector<1x128xf32>
    %217 = vector.broadcast %216 : vector<1x128xf32> to vector<64x128xf32>
    %218 = arith.mulf %205, %217 : vector<64x128xf32>
    %219 = vector.broadcast %169 : vector<1x128xf32> to vector<64x128xf32>
    %220 = arith.addf %218, %219 : vector<64x128xf32>
    %c1 = arith.constant 1 : index
    %c0_78 = arith.constant 0 : index
    %c0_79 = arith.constant 0 : index
    %221 = vector.load %arg4[%c1, %c0_78, %c0_79] : memref<2x64x128xf32, #tpu.memory_space<vmem>>, vector<1x64x128xf32>
    %222 = vector.shape_cast %221 : vector<1x64x128xf32> to vector<64x128xf32>
    %223 = vector.shape_cast %220 : vector<64x128xf32> to vector<1x64x128xf32>
    tpu.vector_store %arg4[%c1, %c0_78, %c0_79], %223 {strides = array<i32>} : memref<2x64x128xf32, #tpu.memory_space<vmem>>, vector<1x64x128xf32>,
    return
  }
  func.func @transform_0(%arg0: i32) -> (i32, i32, i32) {
    %c0_i32 = arith.constant 0 : i32
    %c0_i32_0 = arith.constant 0 : i32
    %c0_i32_1 = arith.constant 0 : i32
    return %arg0, %c0_i32, %c0_i32_0 : i32, i32, i32
  }
  func.func @transform_1(%arg0: i32) -> (i32, i32) {
    %c0_i32 = arith.constant 0 : i32
    %c0_i32_0 = arith.constant 0 : i32
    %c0_i32_1 = arith.constant 0 : i32
    return %c0_i32, %c0_i32_0 : i32, i32
  }
  func.func @transform_2(%arg0: i32) -> (i32, i32) {
    %c0_i32 = arith.constant 0 : i32
    %c0_i32_0 = arith.constant 0 : i32
    %c0_i32_1 = arith.constant 0 : i32
    return %c0_i32, %c0_i32_0 : i32, i32
  }
  func.func @transform_3(%arg0: i32) -> (i32, i32, i32) {
    %c0_i32 = arith.constant 0 : i32
    %c0_i32_0 = arith.constant 0 : i32
    %c0_i32_1 = arith.constant 0 : i32
    return %arg0, %c0_i32, %c0_i32_0 : i32, i32, i32
  }
}

</mosaic_0001>

<llo_original>
// kernel: tpu_custom_call.1
$region0: #{tpu_custom_call.1}
  #allocation0 [shape = 'u32[]', space=smem, size = 0x4, offset = 0x4, fixed_abs, tag = 'smem constant byte address 0x4 - core index']
  #allocation1 [shape = 'u32[144,128]{1,0:T(1,128)}', space=vmem, size = 0x12000, scoped, tag = 'internal scratch']
  #allocation2 [shape = 'f32[128,128]{1,0:T(8,128)}', space=vmem, size = 0x10000, scoped, tag = 'scratch operand']
  %s0 = inlined_call_operand.hbm [shape: bf16[4,64,128], index: 0, kind: input, shape index: {}]
  %s1 = inlined_call_operand.hbm [shape: bf16[128,512], index: 1, kind: input, shape index: {}]
  %s2 = inlined_call_operand.hbm [shape: f32[38,128], index: 2, kind: input, shape index: {}]
  %s3 = inlined_call_operand.hbm [shape: f32[4,64,128], index: 3, kind: output, shape index: {}]
  %s4 = sld [smem:[#allocation0]]
  $region57: #{tpu_custom_call.1} parent=0
    _
  %s6 = ssub.s32 1, %s4
  %s7 = scalar_select 0, %s6, %s4
  $region1: #{tpu_custom_call.1} parent=0
    #allocation3 [shape = 'u8[65536]{0}', space=vmem, size = 0x10000, scoped, tag = 'input window, operand 0']
    #allocation4 [shape = 's32[2]{0}', space=sflag, size = 0x8, scoped, tag = 'scoped memory for tpu_custom_call.1']
    #allocation5 [shape = 's32[2]{0}', space=sflag, size = 0x8, scoped, tag = 'scoped memory for tpu_custom_call.1']
    #allocation6 [shape = 'u8[131072]{0}', space=vmem, size = 0x20000, scoped, tag = 'input window, operand 1, single buffered']
    #allocation7 [shape = 's32[1]{0}', space=sflag, size = 0x4, scoped, tag = 'scoped memory for tpu_custom_call.1']
    #allocation8 [shape = 'u8[20480]{0}', space=vmem, size = 0x5000, scoped, tag = 'input window, operand 2, single buffered']
    #allocation9 [shape = 'u8[131072]{0}', space=vmem, size = 0x20000, scoped, tag = 'output window, operand 0']
    %8 = vsyncpa [#allocation4], 0
    %s9 = scalar_lea.sflag [#allocation4], 1
    %10 = vsyncpa %s9, 0
    %11 = vsyncpa [#allocation7], 0
    %12 = vsyncpa [#allocation5], 0
    %s13 = scalar_lea.sflag [#allocation5], 1
    %14 = vsyncpa %s13, 0
    loop: start=0, step=1, limit=4
    $region2: #{tpu_custom_call.1} parent=1 // loop_pre_header
      _
    $region3: #{tpu_custom_call.1} parent=1 // loop_header
      %s16 = sphi 0, %s20
      %p17 = scmp.ge.s32.totalorder %s16, 4
      %s26 = sphi 0, %s28
      %s29 = sphi 0, %s26
      %s30 = sphi 0, %s29
      %s46 = sphi 0, %s30
      %s50 = sphi 0, %s50
      %s52 = sphi 0, %s50
      %s53 = sphi 0, %s52
      %s67 = sphi 0, %s53
      %s71 = sphi 0, %s71
      %s73 = sphi 0, %s71
      %s74 = sphi 0, %s73
      %s88 = sphi 0, %s74
      %s94 = sphi 0, %s96
      %s97 = sphi 0, %s94
      %s98 = sphi 0, %s97
      %s114 = sphi 0, %s98
    $region4: #{tpu_custom_call.1} parent=1 // loop_header_branch
      %19 = sbr.rel (%p17) target = $region8
    $region5: #{tpu_custom_call.1} parent=1 // loop_body
      %s21 = ssub.s32 %s16, 1
      %s22 = ssub.s32 %s16, 2
      %s23 = sadd.s32 %s16, 1
      %s24 = ssub.s32 %s16, %s23
      %p25 = scmp.eq.s32.totalorder %s24, 0
      %s27 = sadd.s32 %s26, 1
      %s28 = scalar_select %p25, %s26, %s27
      %p31 = pneg %p25
      %p32 = scmp.eq.s32.totalorder %s16, 1
      %p33 = por %p31, %p32
      %p34 = scmp.ne.s32.totalorder %s26, %s29
      %p35 = scmp.eq.s32.totalorder %s16, 0
      %p36 = por %p34, %p35
      %p37 = scmp.ne.s32.totalorder %s26, %s29
      %p38 = scmp.eq.s32.totalorder %s21, 1
      %p39 = por %p37, %p38
      %p40 = scmp.ne.s32.totalorder %s29, %s30
      %p41 = scmp.eq.s32.totalorder %s21, 0
      %p42 = por %p40, %p41
      %p43 = scmp.ne.s32.totalorder %s29, %s30
      %p44 = scmp.eq.s32.totalorder %s22, 1
      %p45 = por %p43, %p44
      %p47 = scmp.ne.s32.totalorder %s30, %s46
      %p48 = scmp.eq.s32.totalorder %s22, 0
      %p49 = por %p47, %p48
      %s51 = sadd.s32 %s50, 1
      %p54 = scmp.eq.s32.totalorder %s16, 1
      %p55 = scmp.ne.s32.totalorder %s50, %s52
      %p56 = scmp.eq.s32.totalorder %s16, 0
      %p57 = por %p55, %p56
      %p58 = scmp.ne.s32.totalorder %s50, %s52
      %p59 = scmp.eq.s32.totalorder %s21, 1
      %p60 = por %p58, %p59
      %p61 = scmp.ne.s32.totalorder %s52, %s53
      %p62 = scmp.eq.s32.totalorder %s21, 0
      %p63 = por %p61, %p62
      %p64 = scmp.ne.s32.totalorder %s52, %s53
      %p65 = scmp.eq.s32.totalorder %s22, 1
      %p66 = por %p64, %p65
      %p68 = scmp.ne.s32.totalorder %s53, %s67
      %p69 = scmp.eq.s32.totalorder %s22, 0
      %p70 = por %p68, %p69
      %s72 = sadd.s32 %s71, 1
      %p75 = scmp.eq.s32.totalorder %s16, 1
      %p76 = scmp.ne.s32.totalorder %s71, %s73
      %p77 = scmp.eq.s32.totalorder %s16, 0
      %p78 = por %p76, %p77
      %p79 = scmp.ne.s32.totalorder %s71, %s73
      %p80 = scmp.eq.s32.totalorder %s21, 1
      %p81 = por %p79, %p80
      %p82 = scmp.ne.s32.totalorder %s73, %s74
      %p83 = scmp.eq.s32.totalorder %s21, 0
      %p84 = por %p82, %p83
      %p85 = scmp.ne.s32.totalorder %s73, %s74
      %p86 = scmp.eq.s32.totalorder %s22, 1
      %p87 = por %p85, %p86
      %p89 = scmp.ne.s32.totalorder %s74, %s88
      %p90 = scmp.eq.s32.totalorder %s22, 0
      %p91 = por %p89, %p90
      %s92 = ssub.s32 %s16, %s23
      %p93 = scmp.eq.s32.totalorder %s92, 0
      %s95 = sadd.s32 %s94, 1
      %s96 = scalar_select %p93, %s94, %s95
      %p99 = pneg %p93
      %p100 = scmp.eq.s32.totalorder %s16, 1
      %p101 = por %p99, %p100
      %p102 = scmp.ne.s32.totalorder %s94, %s97
      %p103 = scmp.eq.s32.totalorder %s16, 0
      %p104 = por %p102, %p103
      %p105 = scmp.ne.s32.totalorder %s94, %s97
      %p106 = scmp.eq.s32.totalorder %s21, 1
      %p107 = por %p105, %p106
      %p108 = scmp.ne.s32.totalorder %s97, %s98
      %p109 = scmp.eq.s32.totalorder %s21, 0
      %p110 = por %p108, %p109
      %p111 = scmp.ne.s32.totalorder %s97, %s98
      %p112 = scmp.eq.s32.totalorder %s22, 1
      %p113 = por %p111, %p112
      %p115 = scmp.ne.s32.totalorder %s98, %s114
      %p116 = scmp.eq.s32.totalorder %s22, 0
      %p117 = por %p115, %p116
      %p118 = scmp.le.s32.totalorder 1, %s16
      %p119 = scmp.lt.s32.totalorder %s16, 3
      %p120 = pnand %p118, %p119
      %p121 = pneg %p120
      // Predicated region
      $region9: #{tpu_custom_call.1} parent=5 // pred_check
        _
      $region10: #{tpu_custom_call.1} parent=5 // pred_check_branch
        %123 = sbr.rel (%p120) target = $region12
      $region11: #{tpu_custom_call.1} parent=5 // pred_region
        %s124 = ssub.s32 %s16, 1
        // Predicated region
        $region13: #{tpu_custom_call.1} parent=11 // pred_check
          %p125 = pneg %p63
        $region14: #{tpu_custom_call.1} parent=11 // pred_check_branch
          %127 = sbr.rel (%p125) target = $region16
        $region15: #{tpu_custom_call.1} parent=11 // pred_region
          %s129 = ssub.s32 4096, 4096
          %130 = vsyncadd [#allocation7], %s129
          %s131 = sshll.u32 [#allocation6], 4
          %s132 = int_to_ptr.vmem [resolvable:$true] %s131
          %137 = dma.hbm_to_vmem [thread:$0]  %s1, 4096, %s132, [#allocation7], 256, 256, 16
        $region16: #{tpu_custom_call.1} parent=11 // pred_fallthru
          _
        // Predicated region
        $region17: #{tpu_custom_call.1} parent=11 // pred_check
          %p138 = pneg %p84
        $region18: #{tpu_custom_call.1} parent=11 // pred_check_branch
          %140 = sbr.rel (%p138) target = $region20
        $region19: #{tpu_custom_call.1} parent=11 // pred_region
          %s142 = ssub.s32 640, 640
          %143 = vsyncadd [#allocation7], %s142
          %s144 = sshll.u32 [#allocation8], 4
          %s145 = int_to_ptr.vmem [resolvable:$true] %s144
          %150 = dma.hbm_to_vmem [thread:$0]  %s2, 640, %s145, [#allocation7], 128, 128, 8
        $region20: #{tpu_custom_call.1} parent=11 // pred_fallthru
          _
      $region12: #{tpu_custom_call.1} parent=5 // pred_fallthru
        _
      %p151 = scmp.lt.s32.totalorder %s16, 2
      // Predicated region
      $region21: #{tpu_custom_call.1} parent=5 // pred_check
        %p152 = pneg %p151
      $region22: #{tpu_custom_call.1} parent=5 // pred_check_branch
        %154 = sbr.rel (%p152) target = $region24
      $region23: #{tpu_custom_call.1} parent=5 // pred_region
        // Predicated region
        $region25: #{tpu_custom_call.1} parent=23 // pred_check
          %p155 = pneg %p36
        $region26: #{tpu_custom_call.1} parent=23 // pred_check_branch
          %157 = sbr.rel (%p155) target = $region28
        $region27: #{tpu_custom_call.1} parent=23 // pred_region
          %s158 = sand.u32 %s26, 1
          %s159 = scalar_lea.sflag [#allocation4], %s158
          %s160 = sand.u32 %s26, 1
          %s161 = smul.addr %s160, 64
          %s162 = scalar_lea.vmem [#allocation3], %s161
          %s163 = smul.u32 2, %s16
          %s165 = ssub.s32 1024, 1024
          %166 = vsyncadd %s159, %s165
          %s167 = smul.addr %s163, 8
          %s168 = smul.addr %s167, 64
          %s169 = scalar_lea.hbm %s0, %s168
          %s170 = sshll.u32 %s162, 4
          %s171 = int_to_ptr.vmem [resolvable:$true] %s170
          %176 = dma.hbm_to_vmem [thread:$0]  %s169, 1024, %s171, %s159, 64, 64, 4
        $region28: #{tpu_custom_call.1} parent=23 // pred_fallthru
          _
      $region24: #{tpu_custom_call.1} parent=5 // pred_fallthru
        _
      %p177 = scmp.le.s32.totalorder 1, %s16
      %p178 = scmp.lt.s32.totalorder %s16, 3
      %p179 = pnand %p177, %p178
      %p180 = pneg %p179
      // Predicated region
      $region29: #{tpu_custom_call.1} parent=5 // pred_check
        _
      $region30: #{tpu_custom_call.1} parent=5 // pred_check_branch
        %182 = sbr.rel (%p179) target = $region32
      $region31: #{tpu_custom_call.1} parent=5 // pred_region
        %s183 = ssub.s32 %s16, 1
        %s184 = sand.u32 %s29, 1
        %s185 = scalar_lea.sflag [#allocation4], %s184
        %s186 = sand.u32 %s29, 1
        %s187 = smul.addr %s186, 64
        %s188 = scalar_lea.vmem [#allocation3], %s187
        // Predicated region
        $region33: #{tpu_custom_call.1} parent=31 // pred_check
          %p189 = pneg %p42
        $region34: #{tpu_custom_call.1} parent=31 // pred_check_branch
          %191 = sbr.rel (%p189) target = $region36
        $region35: #{tpu_custom_call.1} parent=31 // pred_region
          %192 = dma.done %s185, 1024
        $region36: #{tpu_custom_call.1} parent=31 // pred_fallthru
          _
        // Predicated region
        $region37: #{tpu_custom_call.1} parent=31 // pred_check
          %p193 = pneg %p63
        $region38: #{tpu_custom_call.1} parent=31 // pred_check_branch
          %195 = sbr.rel (%p193) target = $region40
        $region39: #{tpu_custom_call.1} parent=31 // pred_region
          %196 = dma.done [#allocation7], 4096
        $region40: #{tpu_custom_call.1} parent=31 // pred_fallthru
          _
        // Predicated region
        $region41: #{tpu_custom_call.1} parent=31 // pred_check
          %p197 = pneg %p84
        $region42: #{tpu_custom_call.1} parent=31 // pred_check_branch
          %199 = sbr.rel (%p197) target = $region44
        $region43: #{tpu_custom_call.1} parent=31 // pred_region
          %200 = dma.done [#allocation7], 640
        $region44: #{tpu_custom_call.1} parent=31 // pred_fallthru
          _
        %s201 = sand.u32 %s29, 1
        %s202 = scalar_lea.sflag [#allocation4], %s201
        %s203 = sand.u32 %s29, 1
        %s204 = smul.addr %s203, 64
        %s205 = scalar_lea.vmem [#allocation3], %s204
        %p206 = pneg %p42
        %p207 = pneg %p39
        %p208 = pneg %p63
        %p209 = pneg %p60
        %p210 = pneg %p84
        %p211 = pneg %p81
        %p212 = pneg %p110
        %p213 = pneg %p107
        %s214 = sand.u32 %s97, 1
        %s215 = scalar_lea.sflag [#allocation5], %s214
        %s216 = sand.u32 %s97, 1
        %s217 = smul.addr %s216, 128
        %s218 = scalar_lea.vmem [#allocation9], %s217
        %s219 = smul.u32 2, %s21
        %s220 = smul.u32 2, %s21
        %v222 = vld [vmem:[%s188] sm:$0xf]
        %v223 = vld [vmem:[%s188 + $0x4] sm:$0xf]
        %v224 = vld [vmem:[%s188 + $0x8] sm:$0xf]
        %v225 = vld [vmem:[%s188 + $0xc] sm:$0xf]
        %v226 = vld [vmem:[%s188 + $0x10] sm:$0xf]
        %v227 = vld [vmem:[%s188 + $0x14] sm:$0xf]
        %v228 = vld [vmem:[%s188 + $0x18] sm:$0xf]
        %v229 = vld [vmem:[%s188 + $0x1c] sm:$0xf]
        %v230 = vld [vmem:[%s188 + $0x20] sm:$0xf]
        %v231 = vld [vmem:[%s188 + $0x24] sm:$0xf]
        %v232 = vld [vmem:[%s188 + $0x28] sm:$0xf]
        %v233 = vld [vmem:[%s188 + $0x2c] sm:$0xf]
        %v234 = vld [vmem:[%s188 + $0x30] sm:$0xf]
        %v235 = vld [vmem:[%s188 + $0x34] sm:$0xf]
        %v236 = vld [vmem:[%s188 + $0x38] sm:$0xf]
        %v237 = vld [vmem:[%s188 + $0x3c] sm:$0xf]
        %v238 = vld [vmem:[#allocation8] sm:$0x3f]
        %v239 = vld [vmem:[#allocation8 + $0x6] sm:$0xff]
        %v240 = vld [vmem:[#allocation8 + $0xe] sm:$0xff]
        %v241 = vld [vmem:[#allocation8 + $0x16] sm:$0xff]
        %v242 = vld [vmem:[#allocation8 + $0x1e] sm:$0xff]
        %v243 = vld [vmem:[#allocation6] sm:$0xff]
        %v244 = vld [vmem:[#allocation6 + $0x8] sm:$0xf]
        %v245 = vld [vmem:[#allocation6 + $0x10] sm:$0xff]
        %v246 = vld [vmem:[#allocation6 + $0x18] sm:$0xf]
        %v247 = vld [vmem:[#allocation6 + $0x20] sm:$0xff]
        %v248 = vld [vmem:[#allocation6 + $0x28] sm:$0xf]
        %v249 = vld [vmem:[#allocation6 + $0x30] sm:$0xff]
        %v250 = vld [vmem:[#allocation6 + $0x38] sm:$0xf]
        %v251 = vld [vmem:[#allocation6 + $0x40] sm:$0xff]
        %v252 = vld [vmem:[#allocation6 + $0x48] sm:$0xf]
        %v253 = vld [vmem:[#allocation6 + $0x50] sm:$0xff]
        %v254 = vld [vmem:[#allocation6 + $0x58] sm:$0xf]
        %v255 = vld [vmem:[#allocation6 + $0x60] sm:$0xff]
        %v256 = vld [vmem:[#allocation6 + $0x68] sm:$0xf]
        %v257 = vld [vmem:[#allocation6 + $0x70] sm:$0xff]
        %v258 = vld [vmem:[#allocation6 + $0x78] sm:$0xf]
        %v259 = vld [vmem:[#allocation6 + $0x80] sm:$0xff]
        %v260 = vld [vmem:[#allocation6 + $0x88] sm:$0xf]
        %v261 = vld [vmem:[#allocation6 + $0x90] sm:$0xff]
        %v262 = vld [vmem:[#allocation6 + $0x98] sm:$0xf]
        %v263 = vld [vmem:[#allocation6 + $0xa0] sm:$0xff]
        %v264 = vld [vmem:[#allocation6 + $0xa8] sm:$0xf]
        %v265 = vld [vmem:[#allocation6 + $0xb0] sm:$0xff]
        %v266 = vld [vmem:[#allocation6 + $0xb8] sm:$0xf]
        %v267 = vld [vmem:[#allocation6 + $0xc0] sm:$0xff]
        %v268 = vld [vmem:[#allocation6 + $0xc8] sm:$0xf]
        %v269 = vld [vmem:[#allocation6 + $0xd0] sm:$0xff]
        %v270 = vld [vmem:[#allocation6 + $0xd8] sm:$0xf]
        %v271 = vld [vmem:[#allocation6 + $0xe0] sm:$0xff]
        %v272 = vld [vmem:[#allocation6 + $0xe8] sm:$0xf]
        %v273 = vld [vmem:[#allocation6 + $0xf0] sm:$0xff]
        %v274 = vld [vmem:[#allocation6 + $0xf8] sm:$0xf]
        %v291 = vunpack.c.l.b16 %v222
        %v292 = vunpack.c.l.b16 %v223
        %v293 = vunpack.c.l.b16 %v224
        %v294 = vunpack.c.l.b16 %v225
        %v295 = vunpack.c.l.b16 %v226
        %v296 = vunpack.c.l.b16 %v227
        %v297 = vunpack.c.l.b16 %v228
        %v298 = vunpack.c.l.b16 %v229
        %v299 = vunpack.c.l.b16 %v230
        %v300 = vunpack.c.l.b16 %v231
        %v301 = vunpack.c.l.b16 %v232
        %v302 = vunpack.c.l.b16 %v233
        %v303 = vunpack.c.l.b16 %v234
        %v304 = vunpack.c.l.b16 %v235
        %v305 = vunpack.c.l.b16 %v236
        %v306 = vunpack.c.l.b16 %v237
        %v307 = vpack.c.b16 %v292, %v291
        %v308 = vpack.c.b16 %v294, %v293
        %v309 = vpack.c.b16 %v296, %v295
        %v310 = vpack.c.b16 %v298, %v297
        %v311 = vpack.c.b16 %v300, %v299
        %v312 = vpack.c.b16 %v302, %v301
        %v313 = vpack.c.b16 %v304, %v303
        %v314 = vpack.c.b16 %v306, %v305
        %v355 = vunpack.c.l.b16 %v243
        %v356 = vunpack.c.h.b16 %v243
        %v357 = vunpack.c.l.b16 %v244
        %v358 = vunpack.c.l.b16 %v245
        %v359 = vunpack.c.h.b16 %v245
        %v360 = vunpack.c.l.b16 %v246
        %v361 = vunpack.c.l.b16 %v247
        %v362 = vunpack.c.h.b16 %v247
        %v363 = vunpack.c.l.b16 %v248
        %v364 = vunpack.c.l.b16 %v249
        %v365 = vunpack.c.h.b16 %v249
        %v366 = vunpack.c.l.b16 %v250
        %v367 = vunpack.c.l.b16 %v251
        %v368 = vunpack.c.h.b16 %v251
        %v369 = vunpack.c.l.b16 %v252
        %v370 = vunpack.c.l.b16 %v253
        %v371 = vunpack.c.h.b16 %v253
        %v372 = vunpack.c.l.b16 %v254
        %v373 = vunpack.c.l.b16 %v255
        %v374 = vunpack.c.h.b16 %v255
        %v375 = vunpack.c.l.b16 %v256
        %v376 = vunpack.c.l.b16 %v257
        %v377 = vunpack.c.h.b16 %v257
        %v378 = vunpack.c.l.b16 %v258
        %v379 = vunpack.c.l.b16 %v259
        %v380 = vunpack.c.h.b16 %v259
        %v381 = vunpack.c.l.b16 %v260
        %v382 = vunpack.c.l.b16 %v261
        %v383 = vunpack.c.h.b16 %v261
        %v384 = vunpack.c.l.b16 %v262
        %v385 = vunpack.c.l.b16 %v263
        %v386 = vunpack.c.h.b16 %v263
        %v387 = vunpack.c.l.b16 %v264
        %v388 = vunpack.c.l.b16 %v265
        %v389 = vunpack.c.h.b16 %v265
        %v390 = vunpack.c.l.b16 %v266
        %v391 = vunpack.c.l.b16 %v267
        %v392 = vunpack.c.h.b16 %v267
        %v393 = vunpack.c.l.b16 %v268
        %v394 = vunpack.c.l.b16 %v269
        %v395 = vunpack.c.h.b16 %v269
        %v396 = vunpack.c.l.b16 %v270
        %v397 = vunpack.c.l.b16 %v271
        %v398 = vunpack.c.h.b16 %v271
        %v399 = vunpack.c.l.b16 %v272
        %v400 = vunpack.c.l.b16 %v273
        %v401 = vunpack.c.h.b16 %v273
        %v402 = vunpack.c.l.b16 %v274
        %v403 = vpack.c.b16 %v358, %v355
        %v404 = vpack.c.b16 %v359, %v356
        %v405 = vpack.c.b16 %v360, %v357
        %v406 = vpack.c.b16 %v364, %v361
        %v407 = vpack.c.b16 %v365, %v362
        %v408 = vpack.c.b16 %v366, %v363
        %v409 = vpack.c.b16 %v370, %v367
        %v410 = vpack.c.b16 %v371, %v368
        %v411 = vpack.c.b16 %v372, %v369
        %v412 = vpack.c.b16 %v376, %v373
        %v413 = vpack.c.b16 %v377, %v374
        %v414 = vpack.c.b16 %v378, %v375
        %v415 = vpack.c.b16 %v382, %v379
        %v416 = vpack.c.b16 %v383, %v380
        %v417 = vpack.c.b16 %v384, %v381
        %v418 = vpack.c.b16 %v388, %v385
        %v419 = vpack.c.b16 %v389, %v386
        %v420 = vpack.c.b16 %v390, %v387
        %v421 = vpack.c.b16 %v394, %v391
        %v422 = vpack.c.b16 %v395, %v392
        %v423 = vpack.c.b16 %v396, %v393
        %v424 = vpack.c.b16 %v400, %v397
        %v425 = vpack.c.b16 %v401, %v398
        %v426 = vpack.c.b16 %v402, %v399
        %451 = vmatprep.subr.bf16.mxu0 %v404
        %452 = vmatpush1.bf16.msra.mxu0 %v403
        %453 = vmatprep.subr.bf16.mxu0 %v407
        %454 = vmatpush1.bf16.msra.mxu0 %v406
        %455 = vmatprep.subr.bf16.mxu0 %v410
        %456 = vmatpush1.bf16.msra.mxu0 %v409
        %457 = vmatprep.subr.bf16.mxu0 %v413
        %458 = vmatpush1.bf16.msra.mxu0 %v412
        %459 = vmatprep.subr.bf16.mxu0 %v416
        %460 = vmatpush1.bf16.msra.mxu0 %v415
        %461 = vmatprep.subr.bf16.mxu0 %v419
        %462 = vmatpush1.bf16.msra.mxu0 %v418
        %463 = vmatprep.subr.bf16.mxu0 %v422
        %464 = vmatpush1.bf16.msra.mxu0 %v421
        %465 = vmatprep.subr.bf16.mxu0 %v425
        %466 = vmatpush1.bf16.msra.mxu0 %v424
        %467 = vmatprep.subr.bf16.mxu0 0
        %468 = vmatpush1.bf16.msra.mxu0 0
        %469 = vmatprep.subr.bf16.mxu0 0
        %470 = vmatpush1.bf16.msra.mxu0 0
        %471 = vmatprep.subr.bf16.mxu0 0
        %472 = vmatpush1.bf16.msra.mxu0 0
        %473 = vmatprep.subr.bf16.mxu0 0
        %474 = vmatpush1.bf16.msra.mxu0 0
        %475 = vmatprep.subr.bf16.mxu0 0
        %476 = vmatpush1.bf16.msra.mxu0 0
        %477 = vmatprep.subr.bf16.mxu0 0
        %478 = vmatpush1.bf16.msra.mxu0 0
        %479 = vmatprep.subr.bf16.mxu0 0
        %480 = vmatpush1.bf16.msra.mxu0 0
        %481 = vmatprep.subr.bf16.mxu0 0
        %482 = vmatpush1.bf16.msra.mxu0 0
        %483 = vmatprep.mubr.bf16.mxu0 0
        %484 = vmatmul.mubr.bf16.gmra.mrb[0].mxu0 %v307
        %v485 = vpop.f32.mrb[0].mxu0
        %v486 = vadd.f32 0.0, %v485
        %v487 = vpop.f32.mrb[0].mxu0
        %v488 = vadd.f32 0.0, %v487
        %v489 = vpop.f32.mrb[0].mxu0
        %v490 = vadd.f32 0.0, %v489
        %v491 = vpop.f32.mrb[0].mxu0
        %v492 = vadd.f32 0.0, %v491
        %493 = vmatprep.mubr.bf16.mxu0 0
        %494 = vmatmul.mubr.bf16.gmra.mrb[0].mxu0 %v308
        %v495 = vpop.f32.mrb[0].mxu0
        %v496 = vadd.f32 0.0, %v495
        %v497 = vpop.f32.mrb[0].mxu0
        %v498 = vadd.f32 0.0, %v497
        %v499 = vpop.f32.mrb[0].mxu0
        %v500 = vadd.f32 0.0, %v499
        %v501 = vpop.f32.mrb[0].mxu0
        %v502 = vadd.f32 0.0, %v501
        %503 = vmatprep.mubr.bf16.mxu0 0
        %504 = vmatmul.mubr.bf16.gmra.mrb[0].mxu0 %v309
        %v505 = vpop.f32.mrb[0].mxu0
        %v506 = vadd.f32 0.0, %v505
        %v507 = vpop.f32.mrb[0].mxu0
        %v508 = vadd.f32 0.0, %v507
        %v509 = vpop.f32.mrb[0].mxu0
        %v510 = vadd.f32 0.0, %v509
        %v511 = vpop.f32.mrb[0].mxu0
        %v512 = vadd.f32 0.0, %v511
        %513 = vmatprep.mubr.bf16.mxu0 0
        %514 = vmatmul.mubr.bf16.gmra.mrb[0].mxu0 %v310
        %v515 = vpop.f32.mrb[0].mxu0
        %v516 = vadd.f32 0.0, %v515
        %v517 = vpop.f32.mrb[0].mxu0
        %v518 = vadd.f32 0.0, %v517
        %v519 = vpop.f32.mrb[0].mxu0
        %v520 = vadd.f32 0.0, %v519
        %v521 = vpop.f32.mrb[0].mxu0
        %v522 = vadd.f32 0.0, %v521
        %523 = vmatprep.mubr.bf16.mxu0 0
        %524 = vmatmul.mubr.bf16.gmra.mrb[0].mxu0 %v311
        %v525 = vpop.f32.mrb[0].mxu0
        %v526 = vadd.f32 0.0, %v525
        %v527 = vpop.f32.mrb[0].mxu0
        %v528 = vadd.f32 0.0, %v527
        %v529 = vpop.f32.mrb[0].mxu0
        %v530 = vadd.f32 0.0, %v529
        %v531 = vpop.f32.mrb[0].mxu0
        %v532 = vadd.f32 0.0, %v531
        %533 = vmatprep.mubr.bf16.mxu0 0
        %534 = vmatmul.mubr.bf16.gmra.mrb[0].mxu0 %v312
        %v535 = vpop.f32.mrb[0].mxu0
        %v536 = vadd.f32 0.0, %v535
        %v537 = vpop.f32.mrb[0].mxu0
        %v538 = vadd.f32 0.0, %v537
        %v539 = vpop.f32.mrb[0].mxu0
        %v540 = vadd.f32 0.0, %v539
        %v541 = vpop.f32.mrb[0].mxu0
        %v542 = vadd.f32 0.0, %v541
        %543 = vmatprep.mubr.bf16.mxu0 0
        %544 = vmatmul.mubr.bf16.gmra.mrb[0].mxu0 %v313
        %v545 = vpop.f32.mrb[0].mxu0
        %v546 = vadd.f32 0.0, %v545
        %v547 = vpop.f32.mrb[0].mxu0
        %v548 = vadd.f32 0.0, %v547
        %v549 = vpop.f32.mrb[0].mxu0
        %v550 = vadd.f32 0.0, %v549
        %v551 = vpop.f32.mrb[0].mxu0
        %v552 = vadd.f32 0.0, %v551
        %553 = vmatprep.mubr.bf16.mxu0 0
        %554 = vmatmul.mubr.bf16.gmra.mrb[0].mxu0 %v314
        %v555 = vpop.f32.mrb[0].mxu0
        %v556 = vadd.f32 0.0, %v555
        %v557 = vpop.f32.mrb[0].mxu0
        %v558 = vadd.f32 0.0, %v557
        %v559 = vpop.f32.mrb[0].mxu0
        %v560 = vadd.f32 0.0, %v559
        %v561 = vpop.f32.mrb[0].mxu0
        %v562 = vadd.f32 0.0, %v561
        %563 = vdwg.mxu0
        %564 = vmatprep.subr.bf16.mxu0 0
        %565 = vmatpush1.bf16.msra.mxu0 %v405
        %566 = vmatprep.subr.bf16.mxu0 0
        %567 = vmatpush1.bf16.msra.mxu0 %v408
        %568 = vmatprep.subr.bf16.mxu0 0
        %569 = vmatpush1.bf16.msra.mxu0 %v411
        %570 = vmatprep.subr.bf16.mxu0 0
        %571 = vmatpush1.bf16.msra.mxu0 %v414
        %572 = vmatprep.subr.bf16.mxu0 0
        %573 = vmatpush1.bf16.msra.mxu0 %v417
        %574 = vmatprep.subr.bf16.mxu0 0
        %575 = vmatpush1.bf16.msra.mxu0 %v420
        %576 = vmatprep.subr.bf16.mxu0 0
        %577 = vmatpush1.bf16.msra.mxu0 %v423
        %578 = vmatprep.subr.bf16.mxu0 0
        %579 = vmatpush1.bf16.msra.mxu0 %v426
        %580 = vmatprep.subr.bf16.mxu0 0
        %581 = vmatpush1.bf16.msra.mxu0 0
        %582 = vmatprep.subr.bf16.mxu0 0
        %583 = vmatpush1.bf16.msra.mxu0 0
        %584 = vmatprep.subr.bf16.mxu0 0
        %585 = vmatpush1.bf16.msra.mxu0 0
        %586 = vmatprep.subr.bf16.mxu0 0
        %587 = vmatpush1.bf16.msra.mxu0 0
        %588 = vmatprep.subr.bf16.mxu0 0
        %589 = vmatpush1.bf16.msra.mxu0 0
        %590 = vmatprep.subr.bf16.mxu0 0
        %591 = vmatpush1.bf16.msra.mxu0 0
        %592 = vmatprep.subr.bf16.mxu0 0
        %593 = vmatpush1.bf16.msra.mxu0 0
        %594 = vmatprep.subr.bf16.mxu0 0
        %595 = vmatpush1.bf16.msra.mxu0 0
        %596 = vmatprep.mubr.bf16.mxu0 0
        %597 = vmatmul.mubr.bf16.gmra.mrb[0].mxu0 %v307
        %v598 = vpop.f32.mrb[0].mxu0
        %v599 = vadd.f32 0.0, %v598
        %v600 = vpop.f32.mrb[0].mxu0
        %v601 = vpop.f32.mrb[0].mxu0
        %v602 = vadd.f32 0.0, %v601
        %v603 = vpop.f32.mrb[0].mxu0
        %604 = vmatprep.mubr.bf16.mxu0 0
        %605 = vmatmul.mubr.bf16.gmra.mrb[0].mxu0 %v308
        %v606 = vpop.f32.mrb[0].mxu0
        %v607 = vadd.f32 0.0, %v606
        %v608 = vpop.f32.mrb[0].mxu0
        %v609 = vpop.f32.mrb[0].mxu0
        %v610 = vadd.f32 0.0, %v609
        %v611 = vpop.f32.mrb[0].mxu0
        %612 = vmatprep.mubr.bf16.mxu0 0
        %613 = vmatmul.mubr.bf16.gmra.mrb[0].mxu0 %v309
        %v614 = vpop.f32.mrb[0].mxu0
        %v615 = vadd.f32 0.0, %v614
        %v616 = vpop.f32.mrb[0].mxu0
        %v617 = vpop.f32.mrb[0].mxu0
        %v618 = vadd.f32 0.0, %v617
        %v619 = vpop.f32.mrb[0].mxu0
        %620 = vmatprep.mubr.bf16.mxu0 0
        %621 = vmatmul.mubr.bf16.gmra.mrb[0].mxu0 %v310
        %v622 = vpop.f32.mrb[0].mxu0
        %v623 = vadd.f32 0.0, %v622
        %v624 = vpop.f32.mrb[0].mxu0
        %v625 = vpop.f32.mrb[0].mxu0
        %v626 = vadd.f32 0.0, %v625
        %v627 = vpop.f32.mrb[0].mxu0
        %628 = vmatprep.mubr.bf16.mxu0 0
        %629 = vmatmul.mubr.bf16.gmra.mrb[0].mxu0 %v311
        %v630 = vpop.f32.mrb[0].mxu0
        %v631 = vadd.f32 0.0, %v630
        %v632 = vpop.f32.mrb[0].mxu0
        %v633 = vpop.f32.mrb[0].mxu0
        %v634 = vadd.f32 0.0, %v633
        %v635 = vpop.f32.mrb[0].mxu0
        %636 = vmatprep.mubr.bf16.mxu0 0
        %637 = vmatmul.mubr.bf16.gmra.mrb[0].mxu0 %v312
        %v638 = vpop.f32.mrb[0].mxu0
        %v639 = vadd.f32 0.0, %v638
        %v640 = vpop.f32.mrb[0].mxu0
        %v641 = vpop.f32.mrb[0].mxu0
        %v642 = vadd.f32 0.0, %v641
        %v643 = vpop.f32.mrb[0].mxu0
        %644 = vmatprep.mubr.bf16.mxu0 0
        %645 = vmatmul.mubr.bf16.gmra.mrb[0].mxu0 %v313
        %v646 = vpop.f32.mrb[0].mxu0
        %v647 = vadd.f32 0.0, %v646
        %v648 = vpop.f32.mrb[0].mxu0
        %v649 = vpop.f32.mrb[0].mxu0
        %v650 = vadd.f32 0.0, %v649
        %v651 = vpop.f32.mrb[0].mxu0
        %652 = vmatprep.mubr.bf16.mxu0 0
        %653 = vmatmul.mubr.bf16.gmra.mrb[0].mxu0 %v314
        %v654 = vpop.f32.mrb[0].mxu0
        %v655 = vadd.f32 0.0, %v654
        %v656 = vpop.f32.mrb[0].mxu0
        %v657 = vpop.f32.mrb[0].mxu0
        %v658 = vadd.f32 0.0, %v657
        %v659 = vpop.f32.mrb[0].mxu0
        %660 = vdwg.mxu0
        %v661 = vlaneseq
        %v662 = vshrl.u32 %v661, 7
        %v663 = vsub.s32 0, %v662
        %v664 = vrot.slane %v238, %v663
        %v665 = vadd.f32 %v486, %v664
        %v666 = vadd.f32 %v490, %v664
        %v667 = vadd.f32 %v496, %v664
        %v668 = vadd.f32 %v500, %v664
        %v669 = vadd.f32 %v506, %v664
        %v670 = vadd.f32 %v510, %v664
        %v671 = vadd.f32 %v516, %v664
        %v672 = vadd.f32 %v520, %v664
        %v673 = vadd.f32 %v526, %v664
        %v674 = vadd.f32 %v530, %v664
        %v675 = vadd.f32 %v536, %v664
        %v676 = vadd.f32 %v540, %v664
        %v677 = vadd.f32 %v546, %v664
        %v678 = vadd.f32 %v550, %v664
        %v679 = vadd.f32 %v556, %v664
        %v680 = vadd.f32 %v560, %v664
        %v681 = vmul.f32 %v665, 0.17677669
        %v682 = vmul.f32 %v666, 0.17677669
        %v683 = vmul.f32 %v667, 0.17677669
        %v684 = vmul.f32 %v668, 0.17677669
        %v685 = vmul.f32 %v669, 0.17677669
        %v686 = vmul.f32 %v670, 0.17677669
        %v687 = vmul.f32 %v671, 0.17677669
        %v688 = vmul.f32 %v672, 0.17677669
        %v689 = vmul.f32 %v673, 0.17677669
        %v690 = vmul.f32 %v674, 0.17677669
        %v691 = vmul.f32 %v675, 0.17677669
        %v692 = vmul.f32 %v676, 0.17677669
        %v693 = vmul.f32 %v677, 0.17677669
        %v694 = vmul.f32 %v678, 0.17677669
        %v695 = vmul.f32 %v679, 0.17677669
        %v696 = vmul.f32 %v680, 0.17677669
        %v697 = vpack.c.bf16 %v682, %v681
        %v698 = vpack.c.bf16 %v684, %v683
        %v699 = vpack.c.bf16 %v686, %v685
        %v700 = vpack.c.bf16 %v688, %v687
        %v701 = vpack.c.bf16 %v690, %v689
        %v702 = vpack.c.bf16 %v692, %v691
        %v703 = vpack.c.bf16 %v694, %v693
        %v704 = vpack.c.bf16 %v696, %v695
        %v705 = vlaneseq
        %v706 = vshrl.u32 %v705, 7
        %v707 = vsub.s32 1, %v706
        %v708 = vrot.slane %v238, %v707
        %v709 = vadd.f32 %v488, %v708
        %v710 = vadd.f32 %v492, %v708
        %v711 = vadd.f32 %v498, %v708
        %v712 = vadd.f32 %v502, %v708
        %v713 = vadd.f32 %v508, %v708
        %v714 = vadd.f32 %v512, %v708
        %v715 = vadd.f32 %v518, %v708
        %v716 = vadd.f32 %v522, %v708
        %v717 = vadd.f32 %v528, %v708
        %v718 = vadd.f32 %v532, %v708
        %v719 = vadd.f32 %v538, %v708
        %v720 = vadd.f32 %v542, %v708
        %v721 = vadd.f32 %v548, %v708
        %v722 = vadd.f32 %v552, %v708
        %v723 = vadd.f32 %v558, %v708
        %v724 = vadd.f32 %v562, %v708
        %v725 = vpack.c.bf16 %v710, %v709
        %v726 = vpack.c.bf16 %v712, %v711
        %v727 = vpack.c.bf16 %v714, %v713
        %v728 = vpack.c.bf16 %v716, %v715
        %v729 = vpack.c.bf16 %v718, %v717
        %v730 = vpack.c.bf16 %v720, %v719
        %v731 = vpack.c.bf16 %v722, %v721
        %v732 = vpack.c.bf16 %v724, %v723
        %v733 = vlaneseq
        %v734 = vshrl.u32 %v733, 7
        %v735 = vsub.s32 2, %v734
        %v736 = vrot.slane %v238, %v735
        %v737 = vadd.f32 %v599, %v736
        %v738 = vadd.f32 %v602, %v736
        %v739 = vadd.f32 %v607, %v736
        %v740 = vadd.f32 %v610, %v736
        %v741 = vadd.f32 %v615, %v736
        %v742 = vadd.f32 %v618, %v736
        %v743 = vadd.f32 %v623, %v736
        %v744 = vadd.f32 %v626, %v736
        %v745 = vadd.f32 %v631, %v736
        %v746 = vadd.f32 %v634, %v736
        %v747 = vadd.f32 %v639, %v736
        %v748 = vadd.f32 %v642, %v736
        %v749 = vadd.f32 %v647, %v736
        %v750 = vadd.f32 %v650, %v736
        %v751 = vadd.f32 %v655, %v736
        %v752 = vadd.f32 %v658, %v736
        %v753 = vpack.c.bf16 %v738, %v737
        %v754 = vpack.c.bf16 %v740, %v739
        %v755 = vpack.c.bf16 %v742, %v741
        %v756 = vpack.c.bf16 %v744, %v743
        %v757 = vpack.c.bf16 %v746, %v745
        %v758 = vpack.c.bf16 %v748, %v747
        %v759 = vpack.c.bf16 %v750, %v749
        %v760 = vpack.c.bf16 %v752, %v751
        %vm761 = vcmask 261120
        %v763 = vsel %vm761, %v697, 0
        %v766 = vsel %vm761, %v698, 0
        %v769 = vsel %vm761, %v699, 0
        %v772 = vsel %vm761, %v700, 0
        %v775 = vsel %vm761, %v725, 0
        %v778 = vsel %vm761, %v726, 0
        %v781 = vsel %vm761, %v727, 0
        %v784 = vsel %vm761, %v728, 0
        %786 = vmatprep.subr.bf16.mxu0 0
        %787 = vmatpush1.bf16.xpose.msra.mxu0 %v775
        %788 = vmatprep.subr.bf16.mxu0 0
        %789 = vmatpush1.bf16.xpose.msra.mxu0 %v778
        %790 = vmatprep.subr.bf16.mxu0 0
        %791 = vmatpush1.bf16.xpose.msra.mxu0 %v781
        %792 = vmatprep.subr.bf16.mxu0 0
        %793 = vmatpush1.bf16.xpose.msra.mxu0 %v784
        %794 = vmatprep.subr.bf16.mxu0 0
        %795 = vmatpush1.bf16.xpose.msra.mxu0 0
        %796 = vmatprep.subr.bf16.mxu0 0
        %797 = vmatpush1.bf16.xpose.msra.mxu0 0
        %798 = vmatprep.subr.bf16.mxu0 0
        %799 = vmatpush1.bf16.xpose.msra.mxu0 0
        %800 = vmatprep.subr.bf16.mxu0 0
        %801 = vmatpush1.bf16.xpose.msra.mxu0 0
        %802 = vmatprep.subr.bf16.mxu0 0
        %803 = vmatpush1.bf16.xpose.msra.mxu0 0
        %804 = vmatprep.subr.bf16.mxu0 0
        %805 = vmatpush1.bf16.xpose.msra.mxu0 0
        %806 = vmatprep.subr.bf16.mxu0 0
        %807 = vmatpush1.bf16.xpose.msra.mxu0 0
        %808 = vmatprep.subr.bf16.mxu0 0
        %809 = vmatpush1.bf16.xpose.msra.mxu0 0
        %810 = vmatprep.subr.bf16.mxu0 0
        %811 = vmatpush1.bf16.xpose.msra.mxu0 0
        %812 = vmatprep.subr.bf16.mxu0 0
        %813 = vmatpush1.bf16.xpose.msra.mxu0 0
        %814 = vmatprep.subr.bf16.mxu0 0
        %815 = vmatpush1.bf16.xpose.msra.mxu0 0
        %816 = vmatprep.subr.bf16.mxu0 0
        %817 = vmatpush1.bf16.xpose.msra.mxu0 0
        %818 = vmatprep.mubr.bf16.mxu0 0
        %819 = vmatmul.mubr.bf16.gmra.mrb[0].mxu0 %v763
        %v820 = vpop.f32.mrb[0].mxu0
        %v821 = vadd.f32 0.0, %v820
        %v822 = vpop.f32.mrb[0].mxu0
        %v823 = vpop.f32.mrb[0].mxu0
        %v824 = vadd.f32 0.0, %v823
        %v825 = vpop.f32.mrb[0].mxu0
        %826 = vmatprep.mubr.bf16.mxu0 0
        %827 = vmatmul.mubr.bf16.gmra.mrb[0].mxu0 %v766
        %v828 = vpop.f32.mrb[0].mxu0
        %v829 = vadd.f32 0.0, %v828
        %v830 = vpop.f32.mrb[0].mxu0
        %v831 = vpop.f32.mrb[0].mxu0
        %v832 = vadd.f32 0.0, %v831
        %v833 = vpop.f32.mrb[0].mxu0
        %834 = vmatprep.mubr.bf16.mxu0 0
        %835 = vmatmul.mubr.bf16.gmra.mrb[0].mxu0 %v769
        %v836 = vpop.f32.mrb[0].mxu0
        %v837 = vadd.f32 0.0, %v836
        %v838 = vpop.f32.mrb[0].mxu0
        %v839 = vpop.f32.mrb[0].mxu0
        %v840 = vadd.f32 0.0, %v839
        %v841 = vpop.f32.mrb[0].mxu0
        %842 = vmatprep.mubr.bf16.mxu0 0
        %843 = vmatmul.mubr.bf16.gmra.mrb[0].mxu0 %v772
        %v844 = vpop.f32.mrb[0].mxu0
        %v845 = vadd.f32 0.0, %v844
        %v846 = vpop.f32.mrb[0].mxu0
        %v847 = vpop.f32.mrb[0].mxu0
        %v848 = vadd.f32 0.0, %v847
        %v849 = vpop.f32.mrb[0].mxu0
        %850 = vdwg.mxu0
        %vm851 = vcmask 523264
        %v852 = vsel %vm851, %v821, -inf
        %853 = vmax.xlane.f32.xlu0 %v852
        %v854 = vpop.xlane.xlu0 %853
        %v855 = vsel %vm851, %v824, -inf
        %856 = vmax.xlane.f32.xlu0 %v855
        %v857 = vpop.xlane.xlu0 %856
        %v858 = vsel %vm851, %v829, -inf
        %859 = vmax.xlane.f32.xlu0 %v858
        %v860 = vpop.xlane.xlu0 %859
        %v861 = vsel %vm851, %v832, -inf
        %862 = vmax.xlane.f32.xlu0 %v861
        %v863 = vpop.xlane.xlu0 %862
        %v864 = vsel %vm851, %v837, -inf
        %865 = vmax.xlane.f32.xlu0 %v864
        %v866 = vpop.xlane.xlu0 %865
        %v867 = vsel %vm851, %v840, -inf
        %868 = vmax.xlane.f32.xlu0 %v867
        %v869 = vpop.xlane.xlu0 %868
        %v870 = vsel %vm851, %v845, -inf
        %871 = vmax.xlane.f32.xlu0 %v870
        %v872 = vpop.xlane.xlu0 %871
        %v873 = vsel %vm851, %v848, -inf
        %874 = vmax.xlane.f32.xlu0 %v873
        %v875 = vpop.xlane.xlu0 %874
        %v876 = vsub.f32 %v821, %v854
        %v877 = vsub.f32 %v824, %v857
        %v878 = vsub.f32 %v829, %v860
        %v879 = vsub.f32 %v832, %v863
        %v880 = vsub.f32 %v837, %v866
        %v881 = vsub.f32 %v840, %v869
        %v882 = vsub.f32 %v845, %v872
        %v883 = vsub.f32 %v848, %v875
        %v884 = vmul.f32 %v876, 1.442695
        %v885 = vpow.pop %v884
        %v886 = vmul.f32 %v877, 1.442695
        %v887 = vpow.pop %v886
        %v888 = vmul.f32 %v878, 1.442695
        %v889 = vpow.pop %v888
        %v890 = vmul.f32 %v879, 1.442695
        %v891 = vpow.pop %v890
        %v892 = vmul.f32 %v880, 1.442695
        %v893 = vpow.pop %v892
        %v894 = vmul.f32 %v881, 1.442695
        %v895 = vpow.pop %v894
        %v896 = vmul.f32 %v882, 1.442695
        %v897 = vpow.pop %v896
        %v898 = vmul.f32 %v883, 1.442695
        %v899 = vpow.pop %v898
        %v900 = vsel %vm851, %v885, 0.0
        %901 = vadd.xlane.f32.xlu0 %v900
        %v902 = vpop.xlane.xlu0 %901
        %v903 = vsel %vm851, %v887, 0.0
        %904 = vadd.xlane.f32.xlu0 %v903
        %v905 = vpop.xlane.xlu0 %904
        %v906 = vsel %vm851, %v889, 0.0
        %907 = vadd.xlane.f32.xlu0 %v906
        %v908 = vpop.xlane.xlu0 %907
        %v909 = vsel %vm851, %v891, 0.0
        %910 = vadd.xlane.f32.xlu0 %v909
        %v911 = vpop.xlane.xlu0 %910
        %v912 = vsel %vm851, %v893, 0.0
        %913 = vadd.xlane.f32.xlu0 %v912
        %v914 = vpop.xlane.xlu0 %913
        %v915 = vsel %vm851, %v895, 0.0
        %916 = vadd.xlane.f32.xlu0 %v915
        %v917 = vpop.xlane.xlu0 %916
        %v918 = vsel %vm851, %v897, 0.0
        %919 = vadd.xlane.f32.xlu0 %v918
        %v920 = vpop.xlane.xlu0 %919
        %v921 = vsel %vm851, %v899, 0.0
        %922 = vadd.xlane.f32.xlu0 %v921
        %v923 = vpop.xlane.xlu0 %922
        %v924 = vpack.c.bf16 %v887, %v885
        %v925 = vpack.c.bf16 %v891, %v889
        %v926 = vpack.c.bf16 %v895, %v893
        %v927 = vpack.c.bf16 %v899, %v897
        %v929 = vsel %vm851, %v924, 0
        %v932 = vsel %vm851, %v925, 0
        %v935 = vsel %vm851, %v926, 0
        %v938 = vsel %vm851, %v927, 0
        %940 = vmatprep.subr.bf16.mxu0 0
        %941 = vmatpush1.bf16.msra.mxu0 %v753
        %942 = vmatprep.subr.bf16.mxu0 0
        %943 = vmatpush1.bf16.msra.mxu0 %v754
        %944 = vmatprep.subr.bf16.mxu0 0
        %945 = vmatpush1.bf16.msra.mxu0 %v755
        %946 = vmatprep.subr.bf16.mxu0 0
        %947 = vmatpush1.bf16.msra.mxu0 %v756
        %948 = vmatprep.subr.bf16.mxu0 0
        %949 = vmatpush1.bf16.msra.mxu0 0
        %950 = vmatprep.subr.bf16.mxu0 0
        %951 = vmatpush1.bf16.msra.mxu0 0
        %952 = vmatprep.subr.bf16.mxu0 0
        %953 = vmatpush1.bf16.msra.mxu0 0
        %954 = vmatprep.subr.bf16.mxu0 0
        %955 = vmatpush1.bf16.msra.mxu0 0
        %956 = vmatprep.subr.bf16.mxu0 0
        %957 = vmatpush1.bf16.msra.mxu0 0
        %958 = vmatprep.subr.bf16.mxu0 0
        %959 = vmatpush1.bf16.msra.mxu0 0
        %960 = vmatprep.subr.bf16.mxu0 0
        %961 = vmatpush1.bf16.msra.mxu0 0
        %962 = vmatprep.subr.bf16.mxu0 0
        %963 = vmatpush1.bf16.msra.mxu0 0
        %964 = vmatprep.subr.bf16.mxu0 0
        %965 = vmatpush1.bf16.msra.mxu0 0
        %966 = vmatprep.subr.bf16.mxu0 0
        %967 = vmatpush1.bf16.msra.mxu0 0
        %968 = vmatprep.subr.bf16.mxu0 0
        %969 = vmatpush1.bf16.msra.mxu0 0
        %970 = vmatprep.subr.bf16.mxu0 0
        %971 = vmatpush1.bf16.msra.mxu0 0
        %972 = vmatprep.mubr.bf16.mxu0 0
        %973 = vmatmul.mubr.bf16.gmra.mrb[0].mxu0 %v929
        %v974 = vpop.f32.mrb[0].mxu0
        %v975 = vadd.f32 0.0, %v974
        %v976 = vpop.f32.mrb[0].mxu0
        %v977 = vpop.f32.mrb[0].mxu0
        %v978 = vadd.f32 0.0, %v977
        %v979 = vpop.f32.mrb[0].mxu0
        %980 = vmatprep.mubr.bf16.mxu0 0
        %981 = vmatmul.mubr.bf16.gmra.mrb[0].mxu0 %v932
        %v982 = vpop.f32.mrb[0].mxu0
        %v983 = vadd.f32 0.0, %v982
        %v984 = vpop.f32.mrb[0].mxu0
        %v985 = vpop.f32.mrb[0].mxu0
        %v986 = vadd.f32 0.0, %v985
        %v987 = vpop.f32.mrb[0].mxu0
        %988 = vmatprep.mubr.bf16.mxu0 0
        %989 = vmatmul.mubr.bf16.gmra.mrb[0].mxu0 %v935
        %v990 = vpop.f32.mrb[0].mxu0
        %v991 = vadd.f32 0.0, %v990
        %v992 = vpop.f32.mrb[0].mxu0
        %v993 = vpop.f32.mrb[0].mxu0
        %v994 = vadd.f32 0.0, %v993
        %v995 = vpop.f32.mrb[0].mxu0
        %996 = vmatprep.mubr.bf16.mxu0 0
        %997 = vmatmul.mubr.bf16.gmra.mrb[0].mxu0 %v938
        %v998 = vpop.f32.mrb[0].mxu0
        %v999 = vadd.f32 0.0, %v998
        %v1000 = vpop.f32.mrb[0].mxu0
        %v1001 = vpop.f32.mrb[0].mxu0
        %v1002 = vadd.f32 0.0, %v1001
        %v1003 = vpop.f32.mrb[0].mxu0
        %1004 = vdwg.mxu0
        %v1005 = vrcp.pop %v902
        %v1006 = vrcp.pop %v905
        %v1007 = vrcp.pop %v908
        %v1008 = vrcp.pop %v911
        %v1009 = vrcp.pop %v914
        %v1010 = vrcp.pop %v917
        %v1011 = vrcp.pop %v920
        %v1012 = vrcp.pop %v923
        %v1013 = vmul.f32 %v975, %v1005
        %v1014 = vmul.f32 %v978, %v1006
        %v1015 = vmul.f32 %v983, %v1007
        %v1016 = vmul.f32 %v986, %v1008
        %v1017 = vmul.f32 %v991, %v1009
        %v1018 = vmul.f32 %v994, %v1010
        %v1019 = vmul.f32 %v999, %v1011
        %v1020 = vmul.f32 %v1002, %v1012
        %1021 = vst.msk [vmem:[#allocation2] sm:$0xff] %vm761, %v1013
        %1022 = vst.msk [vmem:[#allocation2 + $0x8] sm:$0xff] %vm761, %v1014
        %1023 = vst.msk [vmem:[#allocation2 + $0x10] sm:$0xff] %vm761, %v1015
        %1024 = vst.msk [vmem:[#allocation2 + $0x18] sm:$0xff] %vm761, %v1016
        %1025 = vst.msk [vmem:[#allocation2 + $0x20] sm:$0xff] %vm761, %v1017
        %1026 = vst.msk [vmem:[#allocation2 + $0x28] sm:$0xff] %vm761, %v1018
        %1027 = vst.msk [vmem:[#allocation2 + $0x30] sm:$0xff] %vm761, %v1019
        %1028 = vst.msk [vmem:[#allocation2 + $0x38] sm:$0xff] %vm761, %v1020
        %1033 = vrot.lane.b32.xlu0 %v697, 96
        %v1034 = vpop.permute.xlu0 %1033
        %1035 = vrot.lane.b32.xlu0 %v698, 96
        %v1036 = vpop.permute.xlu0 %1035
        %1037 = vrot.lane.b32.xlu0 %v699, 96
        %v1038 = vpop.permute.xlu0 %1037
        %1039 = vrot.lane.b32.xlu0 %v700, 96
        %v1040 = vpop.permute.xlu0 %1039
        %1045 = vrot.lane.b32.xlu0 %v725, 96
        %v1046 = vpop.permute.xlu0 %1045
        %1047 = vrot.lane.b32.xlu0 %v726, 96
        %v1048 = vpop.permute.xlu0 %1047
        %1049 = vrot.lane.b32.xlu0 %v727, 96
        %v1050 = vpop.permute.xlu0 %1049
        %1051 = vrot.lane.b32.xlu0 %v728, 96
        %v1052 = vpop.permute.xlu0 %1051
        %v1054 = vsel %vm761, %v1034, 0
        %v1057 = vsel %vm761, %v1036, 0
        %v1060 = vsel %vm761, %v1038, 0
        %v1063 = vsel %vm761, %v1040, 0
        %v1066 = vsel %vm761, %v1046, 0
        %v1069 = vsel %vm761, %v1048, 0
        %v1072 = vsel %vm761, %v1050, 0
        %v1075 = vsel %vm761, %v1052, 0
        %1077 = vmatprep.subr.bf16.mxu0 0
        %1078 = vmatpush1.bf16.xpose.msra.mxu0 %v1066
        %1079 = vmatprep.subr.bf16.mxu0 0
        %1080 = vmatpush1.bf16.xpose.msra.mxu0 %v1069
        %1081 = vmatprep.subr.bf16.mxu0 0
        %1082 = vmatpush1.bf16.xpose.msra.mxu0 %v1072
        %1083 = vmatprep.subr.bf16.mxu0 0
        %1084 = vmatpush1.bf16.xpose.msra.mxu0 %v1075
        %1085 = vmatprep.subr.bf16.mxu0 0
        %1086 = vmatpush1.bf16.xpose.msra.mxu0 0
        %1087 = vmatprep.subr.bf16.mxu0 0
        %1088 = vmatpush1.bf16.xpose.msra.mxu0 0
        %1089 = vmatprep.subr.bf16.mxu0 0
        %1090 = vmatpush1.bf16.xpose.msra.mxu0 0
        %1091 = vmatprep.subr.bf16.mxu0 0
        %1092 = vmatpush1.bf16.xpose.msra.mxu0 0
        %1093 = vmatprep.subr.bf16.mxu0 0
        %1094 = vmatpush1.bf16.xpose.msra.mxu0 0
        %1095 = vmatprep.subr.bf16.mxu0 0
        %1096 = vmatpush1.bf16.xpose.msra.mxu0 0
        %1097 = vmatprep.subr.bf16.mxu0 0
        %1098 = vmatpush1.bf16.xpose.msra.mxu0 0
        %1099 = vmatprep.subr.bf16.mxu0 0
        %1100 = vmatpush1.bf16.xpose.msra.mxu0 0
        %1101 = vmatprep.subr.bf16.mxu0 0
        %1102 = vmatpush1.bf16.xpose.msra.mxu0 0
        %1103 = vmatprep.subr.bf16.mxu0 0
        %1104 = vmatpush1.bf16.xpose.msra.mxu0 0
        %1105 = vmatprep.subr.bf16.mxu0 0
        %1106 = vmatpush1.bf16.xpose.msra.mxu0 0
        %1107 = vmatprep.subr.bf16.mxu0 0
        %1108 = vmatpush1.bf16.xpose.msra.mxu0 0
        %1109 = vmatprep.mubr.bf16.mxu0 0
        %1110 = vmatmul.mubr.bf16.gmra.mrb[0].mxu0 %v1054
        %v1111 = vpop.f32.mrb[0].mxu0
        %v1112 = vadd.f32 0.0, %v1111
        %v1113 = vpop.f32.mrb[0].mxu0
        %v1114 = vpop.f32.mrb[0].mxu0
        %v1115 = vadd.f32 0.0, %v1114
        %v1116 = vpop.f32.mrb[0].mxu0
        %1117 = vmatprep.mubr.bf16.mxu0 0
        %1118 = vmatmul.mubr.bf16.gmra.mrb[0].mxu0 %v1057
        %v1119 = vpop.f32.mrb[0].mxu0
        %v1120 = vadd.f32 0.0, %v1119
        %v1121 = vpop.f32.mrb[0].mxu0
        %v1122 = vpop.f32.mrb[0].mxu0
        %v1123 = vadd.f32 0.0, %v1122
        %v1124 = vpop.f32.mrb[0].mxu0
        %1125 = vmatprep.mubr.bf16.mxu0 0
        %1126 = vmatmul.mubr.bf16.gmra.mrb[0].mxu0 %v1060
        %v1127 = vpop.f32.mrb[0].mxu0
        %v1128 = vadd.f32 0.0, %v1127
        %v1129 = vpop.f32.mrb[0].mxu0
        %v1130 = vpop.f32.mrb[0].mxu0
        %v1131 = vadd.f32 0.0, %v1130
        %v1132 = vpop.f32.mrb[0].mxu0
        %1133 = vmatprep.mubr.bf16.mxu0 0
        %1134 = vmatmul.mubr.bf16.gmra.mrb[0].mxu0 %v1063
        %v1135 = vpop.f32.mrb[0].mxu0
        %v1136 = vadd.f32 0.0, %v1135
        %v1137 = vpop.f32.mrb[0].mxu0
        %v1138 = vpop.f32.mrb[0].mxu0
        %v1139 = vadd.f32 0.0, %v1138
        %v1140 = vpop.f32.mrb[0].mxu0
        %1141 = vdwg.mxu0
        %v1142 = vsel %vm851, %v1112, -inf
        %1143 = vmax.xlane.f32.xlu0 %v1142
        %v1144 = vpop.xlane.xlu0 %1143
        %v1145 = vsel %vm851, %v1115, -inf
        %1146 = vmax.xlane.f32.xlu0 %v1145
        %v1147 = vpop.xlane.xlu0 %1146
        %v1148 = vsel %vm851, %v1120, -inf
        %1149 = vmax.xlane.f32.xlu0 %v1148
        %v1150 = vpop.xlane.xlu0 %1149
        %v1151 = vsel %vm851, %v1123, -inf
        %1152 = vmax.xlane.f32.xlu0 %v1151
        %v1153 = vpop.xlane.xlu0 %1152
        %v1154 = vsel %vm851, %v1128, -inf
        %1155 = vmax.xlane.f32.xlu0 %v1154
        %v1156 = vpop.xlane.xlu0 %1155
        %v1157 = vsel %vm851, %v1131, -inf
        %1158 = vmax.xlane.f32.xlu0 %v1157
        %v1159 = vpop.xlane.xlu0 %1158
        %v1160 = vsel %vm851, %v1136, -inf
        %1161 = vmax.xlane.f32.xlu0 %v1160
        %v1162 = vpop.xlane.xlu0 %1161
        %v1163 = vsel %vm851, %v1139, -inf
        %1164 = vmax.xlane.f32.xlu0 %v1163
        %v1165 = vpop.xlane.xlu0 %1164
        %v1166 = vsub.f32 %v1112, %v1144
        %v1167 = vsub.f32 %v1115, %v1147
        %v1168 = vsub.f32 %v1120, %v1150
        %v1169 = vsub.f32 %v1123, %v1153
        %v1170 = vsub.f32 %v1128, %v1156
        %v1171 = vsub.f32 %v1131, %v1159
        %v1172 = vsub.f32 %v1136, %v1162
        %v1173 = vsub.f32 %v1139, %v1165
        %v1174 = vmul.f32 %v1166, 1.442695
        %v1175 = vpow.pop %v1174
        %v1176 = vmul.f32 %v1167, 1.442695
        %v1177 = vpow.pop %v1176
        %v1178 = vmul.f32 %v1168, 1.442695
        %v1179 = vpow.pop %v1178
        %v1180 = vmul.f32 %v1169, 1.442695
        %v1181 = vpow.pop %v1180
        %v1182 = vmul.f32 %v1170, 1.442695
        %v1183 = vpow.pop %v1182
        %v1184 = vmul.f32 %v1171, 1.442695
        %v1185 = vpow.pop %v1184
        %v1186 = vmul.f32 %v1172, 1.442695
        %v1187 = vpow.pop %v1186
        %v1188 = vmul.f32 %v1173, 1.442695
        %v1189 = vpow.pop %v1188
        %v1190 = vsel %vm851, %v1175, 0.0
        %1191 = vadd.xlane.f32.xlu0 %v1190
        %v1192 = vpop.xlane.xlu0 %1191
        %v1193 = vsel %vm851, %v1177, 0.0
        %1194 = vadd.xlane.f32.xlu0 %v1193
        %v1195 = vpop.xlane.xlu0 %1194
        %v1196 = vsel %vm851, %v1179, 0.0
        %1197 = vadd.xlane.f32.xlu0 %v1196
        %v1198 = vpop.xlane.xlu0 %1197
        %v1199 = vsel %vm851, %v1181, 0.0
        %1200 = vadd.xlane.f32.xlu0 %v1199
        %v1201 = vpop.xlane.xlu0 %1200
        %v1202 = vsel %vm851, %v1183, 0.0
        %1203 = vadd.xlane.f32.xlu0 %v1202
        %v1204 = vpop.xlane.xlu0 %1203
        %v1205 = vsel %vm851, %v1185, 0.0
        %1206 = vadd.xlane.f32.xlu0 %v1205
        %v1207 = vpop.xlane.xlu0 %1206
        %v1208 = vsel %vm851, %v1187, 0.0
        %1209 = vadd.xlane.f32.xlu0 %v1208
        %v1210 = vpop.xlane.xlu0 %1209
        %v1211 = vsel %vm851, %v1189, 0.0
        %1212 = vadd.xlane.f32.xlu0 %v1211
        %v1213 = vpop.xlane.xlu0 %1212
        %v1214 = vpack.c.bf16 %v1177, %v1175
        %v1215 = vpack.c.bf16 %v1181, %v1179
        %v1216 = vpack.c.bf16 %v1185, %v1183
        %v1217 = vpack.c.bf16 %v1189, %v1187
        %1222 = vrot.lane.b32.xlu0 %v753, 96
        %v1223 = vpop.permute.xlu0 %1222
        %1224 = vrot.lane.b32.xlu0 %v754, 96
        %v1225 = vpop.permute.xlu0 %1224
        %1226 = vrot.lane.b32.xlu0 %v755, 96
        %v1227 = vpop.permute.xlu0 %1226
        %1228 = vrot.lane.b32.xlu0 %v756, 96
        %v1229 = vpop.permute.xlu0 %1228
        %v1235 = vsel %vm851, %v1214, 0
        %v1238 = vsel %vm851, %v1215, 0
        %v1241 = vsel %vm851, %v1216, 0
        %v1244 = vsel %vm851, %v1217, 0
        %1246 = vmatprep.subr.bf16.mxu0 0
        %1247 = vmatpush1.bf16.msra.mxu0 %v1223
        %1248 = vmatprep.subr.bf16.mxu0 0
        %1249 = vmatpush1.bf16.msra.mxu0 %v1225
        %1250 = vmatprep.subr.bf16.mxu0 0
        %1251 = vmatpush1.bf16.msra.mxu0 %v1227
        %1252 = vmatprep.subr.bf16.mxu0 0
        %1253 = vmatpush1.bf16.msra.mxu0 %v1229
        %1254 = vmatprep.subr.bf16.mxu0 0
        %1255 = vmatpush1.bf16.msra.mxu0 0
        %1256 = vmatprep.subr.bf16.mxu0 0
        %1257 = vmatpush1.bf16.msra.mxu0 0
        %1258 = vmatprep.subr.bf16.mxu0 0
        %1259 = vmatpush1.bf16.msra.mxu0 0
        %1260 = vmatprep.subr.bf16.mxu0 0
        %1261 = vmatpush1.bf16.msra.mxu0 0
        %1262 = vmatprep.subr.bf16.mxu0 0
        %1263 = vmatpush1.bf16.msra.mxu0 0
        %1264 = vmatprep.subr.bf16.mxu0 0
        %1265 = vmatpush1.bf16.msra.mxu0 0
        %1266 = vmatprep.subr.bf16.mxu0 0
        %1267 = vmatpush1.bf16.msra.mxu0 0
        %1268 = vmatprep.subr.bf16.mxu0 0
        %1269 = vmatpush1.bf16.msra.mxu0 0
        %1270 = vmatprep.subr.bf16.mxu0 0
        %1271 = vmatpush1.bf16.msra.mxu0 0
        %1272 = vmatprep.subr.bf16.mxu0 0
        %1273 = vmatpush1.bf16.msra.mxu0 0
        %1274 = vmatprep.subr.bf16.mxu0 0
        %1275 = vmatpush1.bf16.msra.mxu0 0
        %1276 = vmatprep.subr.bf16.mxu0 0
        %1277 = vmatpush1.bf16.msra.mxu0 0
        %1278 = vmatprep.mubr.bf16.mxu0 0
        %1279 = vmatmul.mubr.bf16.gmra.mrb[0].mxu0 %v1235
        %v1280 = vpop.f32.mrb[0].mxu0
        %v1281 = vadd.f32 0.0, %v1280
        %v1282 = vpop.f32.mrb[0].mxu0
        %v1283 = vpop.f32.mrb[0].mxu0
        %v1284 = vadd.f32 0.0, %v1283
        %v1285 = vpop.f32.mrb[0].mxu0
        %1286 = vmatprep.mubr.bf16.mxu0 0
        %1287 = vmatmul.mubr.bf16.gmra.mrb[0].mxu0 %v1238
        %v1288 = vpop.f32.mrb[0].mxu0
        %v1289 = vadd.f32 0.0, %v1288
        %v1290 = vpop.f32.mrb[0].mxu0
        %v1291 = vpop.f32.mrb[0].mxu0
        %v1292 = vadd.f32 0.0, %v1291
        %v1293 = vpop.f32.mrb[0].mxu0
        %1294 = vmatprep.mubr.bf16.mxu0 0
        %1295 = vmatmul.mubr.bf16.gmra.mrb[0].mxu0 %v1241
        %v1296 = vpop.f32.mrb[0].mxu0
        %v1297 = vadd.f32 0.0, %v1296
        %v1298 = vpop.f32.mrb[0].mxu0
        %v1299 = vpop.f32.mrb[0].mxu0
        %v1300 = vadd.f32 0.0, %v1299
        %v1301 = vpop.f32.mrb[0].mxu0
        %1302 = vmatprep.mubr.bf16.mxu0 0
        %1303 = vmatmul.mubr.bf16.gmra.mrb[0].mxu0 %v1244
        %v1304 = vpop.f32.mrb[0].mxu0
        %v1305 = vadd.f32 0.0, %v1304
        %v1306 = vpop.f32.mrb[0].mxu0
        %v1307 = vpop.f32.mrb[0].mxu0
        %v1308 = vadd.f32 0.0, %v1307
        %v1309 = vpop.f32.mrb[0].mxu0
        %1310 = vdwg.mxu0
        %v1311 = vrcp.pop %v1192
        %v1312 = vrcp.pop %v1195
        %v1313 = vrcp.pop %v1198
        %v1314 = vrcp.pop %v1201
        %v1315 = vrcp.pop %v1204
        %v1316 = vrcp.pop %v1207
        %v1317 = vrcp.pop %v1210
        %v1318 = vrcp.pop %v1213
        %v1319 = vmul.f32 %v1281, %v1311
        %v1320 = vmul.f32 %v1284, %v1312
        %v1321 = vmul.f32 %v1289, %v1313
        %v1322 = vmul.f32 %v1292, %v1314
        %v1323 = vmul.f32 %v1297, %v1315
        %v1324 = vmul.f32 %v1300, %v1316
        %v1325 = vmul.f32 %v1305, %v1317
        %v1326 = vmul.f32 %v1308, %v1318
        %1335 = vrot.lane.b32.xlu0 %v1319, 32
        %v1336 = vpop.permute.xlu0 %1335
        %1337 = vrot.lane.b32.xlu0 %v1320, 32
        %v1338 = vpop.permute.xlu0 %1337
        %1339 = vrot.lane.b32.xlu0 %v1321, 32
        %v1340 = vpop.permute.xlu0 %1339
        %1341 = vrot.lane.b32.xlu0 %v1322, 32
        %v1342 = vpop.permute.xlu0 %1341
        %1343 = vrot.lane.b32.xlu0 %v1323, 32
        %v1344 = vpop.permute.xlu0 %1343
        %1345 = vrot.lane.b32.xlu0 %v1324, 32
        %v1346 = vpop.permute.xlu0 %1345
        %1347 = vrot.lane.b32.xlu0 %v1325, 32
        %v1348 = vpop.permute.xlu0 %1347
        %1349 = vrot.lane.b32.xlu0 %v1326, 32
        %v1350 = vpop.permute.xlu0 %1349
        %vm1359 = vcmask 523520
        %1360 = vst.msk [vmem:[#allocation2] sm:$0xff] %vm1359, %v1336
        %1361 = vst.msk [vmem:[#allocation2 + $0x8] sm:$0xff] %vm1359, %v1338
        %1362 = vst.msk [vmem:[#allocation2 + $0x10] sm:$0xff] %vm1359, %v1340
        %1363 = vst.msk [vmem:[#allocation2 + $0x18] sm:$0xff] %vm1359, %v1342
        %1364 = vst.msk [vmem:[#allocation2 + $0x20] sm:$0xff] %vm1359, %v1344
        %1365 = vst.msk [vmem:[#allocation2 + $0x28] sm:$0xff] %vm1359, %v1346
        %1366 = vst.msk [vmem:[#allocation2 + $0x30] sm:$0xff] %vm1359, %v1348
        %1367 = vst.msk [vmem:[#allocation2 + $0x38] sm:$0xff] %vm1359, %v1350
        %1368 = vrot.lane.b32.xlu0 %v697, 64
        %v1369 = vpop.permute.xlu0 %1368
        %1370 = vrot.lane.b32.xlu0 %v698, 64
        %v1371 = vpop.permute.xlu0 %1370
        %1372 = vrot.lane.b32.xlu0 %v699, 64
        %v1373 = vpop.permute.xlu0 %1372
        %1374 = vrot.lane.b32.xlu0 %v700, 64
        %v1375 = vpop.permute.xlu0 %1374
        %1376 = vrot.lane.b32.xlu0 %v725, 64
        %v1377 = vpop.permute.xlu0 %1376
        %1378 = vrot.lane.b32.xlu0 %v726, 64
        %v1379 = vpop.permute.xlu0 %1378
        %1380 = vrot.lane.b32.xlu0 %v727, 64
        %v1381 = vpop.permute.xlu0 %1380
        %1382 = vrot.lane.b32.xlu0 %v728, 64
        %v1383 = vpop.permute.xlu0 %1382
        %v1385 = vsel %vm761, %v1369, 0
        %v1388 = vsel %vm761, %v1371, 0
        %v1391 = vsel %vm761, %v1373, 0
        %v1394 = vsel %vm761, %v1375, 0
        %v1397 = vsel %vm761, %v1377, 0
        %v1400 = vsel %vm761, %v1379, 0
        %v1403 = vsel %vm761, %v1381, 0
        %v1406 = vsel %vm761, %v1383, 0
        %1408 = vmatprep.subr.bf16.mxu0 0
        %1409 = vmatpush1.bf16.xpose.msra.mxu0 %v1397
        %1410 = vmatprep.subr.bf16.mxu0 0
        %1411 = vmatpush1.bf16.xpose.msra.mxu0 %v1400
        %1412 = vmatprep.subr.bf16.mxu0 0
        %1413 = vmatpush1.bf16.xpose.msra.mxu0 %v1403
        %1414 = vmatprep.subr.bf16.mxu0 0
        %1415 = vmatpush1.bf16.xpose.msra.mxu0 %v1406
        %1416 = vmatprep.subr.bf16.mxu0 0
        %1417 = vmatpush1.bf16.xpose.msra.mxu0 0
        %1418 = vmatprep.subr.bf16.mxu0 0
        %1419 = vmatpush1.bf16.xpose.msra.mxu0 0
        %1420 = vmatprep.subr.bf16.mxu0 0
        %1421 = vmatpush1.bf16.xpose.msra.mxu0 0
        %1422 = vmatprep.subr.bf16.mxu0 0
        %1423 = vmatpush1.bf16.xpose.msra.mxu0 0
        %1424 = vmatprep.subr.bf16.mxu0 0
        %1425 = vmatpush1.bf16.xpose.msra.mxu0 0
        %1426 = vmatprep.subr.bf16.mxu0 0
        %1427 = vmatpush1.bf16.xpose.msra.mxu0 0
        %1428 = vmatprep.subr.bf16.mxu0 0
        %1429 = vmatpush1.bf16.xpose.msra.mxu0 0
        %1430 = vmatprep.subr.bf16.mxu0 0
        %1431 = vmatpush1.bf16.xpose.msra.mxu0 0
        %1432 = vmatprep.subr.bf16.mxu0 0
        %1433 = vmatpush1.bf16.xpose.msra.mxu0 0
        %1434 = vmatprep.subr.bf16.mxu0 0
        %1435 = vmatpush1.bf16.xpose.msra.mxu0 0
        %1436 = vmatprep.subr.bf16.mxu0 0
        %1437 = vmatpush1.bf16.xpose.msra.mxu0 0
        %1438 = vmatprep.subr.bf16.mxu0 0
        %1439 = vmatpush1.bf16.xpose.msra.mxu0 0
        %1440 = vmatprep.mubr.bf16.mxu0 0
        %1441 = vmatmul.mubr.bf16.gmra.mrb[0].mxu0 %v1385
        %v1442 = vpop.f32.mrb[0].mxu0
        %v1443 = vadd.f32 0.0, %v1442
        %v1444 = vpop.f32.mrb[0].mxu0
        %v1445 = vpop.f32.mrb[0].mxu0
        %v1446 = vadd.f32 0.0, %v1445
        %v1447 = vpop.f32.mrb[0].mxu0
        %1448 = vmatprep.mubr.bf16.mxu0 0
        %1449 = vmatmul.mubr.bf16.gmra.mrb[0].mxu0 %v1388
        %v1450 = vpop.f32.mrb[0].mxu0
        %v1451 = vadd.f32 0.0, %v1450
        %v1452 = vpop.f32.mrb[0].mxu0
        %v1453 = vpop.f32.mrb[0].mxu0
        %v1454 = vadd.f32 0.0, %v1453
        %v1455 = vpop.f32.mrb[0].mxu0
        %1456 = vmatprep.mubr.bf16.mxu0 0
        %1457 = vmatmul.mubr.bf16.gmra.mrb[0].mxu0 %v1391
        %v1458 = vpop.f32.mrb[0].mxu0
        %v1459 = vadd.f32 0.0, %v1458
        %v1460 = vpop.f32.mrb[0].mxu0
        %v1461 = vpop.f32.mrb[0].mxu0
        %v1462 = vadd.f32 0.0, %v1461
        %v1463 = vpop.f32.mrb[0].mxu0
        %1464 = vmatprep.mubr.bf16.mxu0 0
        %1465 = vmatmul.mubr.bf16.gmra.mrb[0].mxu0 %v1394
        %v1466 = vpop.f32.mrb[0].mxu0
        %v1467 = vadd.f32 0.0, %v1466
        %v1468 = vpop.f32.mrb[0].mxu0
        %v1469 = vpop.f32.mrb[0].mxu0
        %v1470 = vadd.f32 0.0, %v1469
        %v1471 = vpop.f32.mrb[0].mxu0
        %1472 = vdwg.mxu0
        %v1473 = vsel %vm851, %v1443, -inf
        %1474 = vmax.xlane.f32.xlu0 %v1473
        %v1475 = vpop.xlane.xlu0 %1474
        %v1476 = vsel %vm851, %v1446, -inf
        %1477 = vmax.xlane.f32.xlu0 %v1476
        %v1478 = vpop.xlane.xlu0 %1477
        %v1479 = vsel %vm851, %v1451, -inf
        %1480 = vmax.xlane.f32.xlu0 %v1479
        %v1481 = vpop.xlane.xlu0 %1480
        %v1482 = vsel %vm851, %v1454, -inf
        %1483 = vmax.xlane.f32.xlu0 %v1482
        %v1484 = vpop.xlane.xlu0 %1483
        %v1485 = vsel %vm851, %v1459, -inf
        %1486 = vmax.xlane.f32.xlu0 %v1485
        %v1487 = vpop.xlane.xlu0 %1486
        %v1488 = vsel %vm851, %v1462, -inf
        %1489 = vmax.xlane.f32.xlu0 %v1488
        %v1490 = vpop.xlane.xlu0 %1489
        %v1491 = vsel %vm851, %v1467, -inf
        %1492 = vmax.xlane.f32.xlu0 %v1491
        %v1493 = vpop.xlane.xlu0 %1492
        %v1494 = vsel %vm851, %v1470, -inf
        %1495 = vmax.xlane.f32.xlu0 %v1494
        %v1496 = vpop.xlane.xlu0 %1495
        %v1497 = vsub.f32 %v1443, %v1475
        %v1498 = vsub.f32 %v1446, %v1478
        %v1499 = vsub.f32 %v1451, %v1481
        %v1500 = vsub.f32 %v1454, %v1484
        %v1501 = vsub.f32 %v1459, %v1487
        %v1502 = vsub.f32 %v1462, %v1490
        %v1503 = vsub.f32 %v1467, %v1493
        %v1504 = vsub.f32 %v1470, %v1496
        %v1505 = vmul.f32 %v1497, 1.442695
        %v1506 = vpow.pop %v1505
        %v1507 = vmul.f32 %v1498, 1.442695
        %v1508 = vpow.pop %v1507
        %v1509 = vmul.f32 %v1499, 1.442695
        %v1510 = vpow.pop %v1509
        %v1511 = vmul.f32 %v1500, 1.442695
        %v1512 = vpow.pop %v1511
        %v1513 = vmul.f32 %v1501, 1.442695
        %v1514 = vpow.pop %v1513
        %v1515 = vmul.f32 %v1502, 1.442695
        %v1516 = vpow.pop %v1515
        %v1517 = vmul.f32 %v1503, 1.442695
        %v1518 = vpow.pop %v1517
        %v1519 = vmul.f32 %v1504, 1.442695
        %v1520 = vpow.pop %v1519
        %v1521 = vsel %vm851, %v1506, 0.0
        %1522 = vadd.xlane.f32.xlu0 %v1521
        %v1523 = vpop.xlane.xlu0 %1522
        %v1524 = vsel %vm851, %v1508, 0.0
        %1525 = vadd.xlane.f32.xlu0 %v1524
        %v1526 = vpop.xlane.xlu0 %1525
        %v1527 = vsel %vm851, %v1510, 0.0
        %1528 = vadd.xlane.f32.xlu0 %v1527
        %v1529 = vpop.xlane.xlu0 %1528
        %v1530 = vsel %vm851, %v1512, 0.0
        %1531 = vadd.xlane.f32.xlu0 %v1530
        %v1532 = vpop.xlane.xlu0 %1531
        %v1533 = vsel %vm851, %v1514, 0.0
        %1534 = vadd.xlane.f32.xlu0 %v1533
        %v1535 = vpop.xlane.xlu0 %1534
        %v1536 = vsel %vm851, %v1516, 0.0
        %1537 = vadd.xlane.f32.xlu0 %v1536
        %v1538 = vpop.xlane.xlu0 %1537
        %v1539 = vsel %vm851, %v1518, 0.0
        %1540 = vadd.xlane.f32.xlu0 %v1539
        %v1541 = vpop.xlane.xlu0 %1540
        %v1542 = vsel %vm851, %v1520, 0.0
        %1543 = vadd.xlane.f32.xlu0 %v1542
        %v1544 = vpop.xlane.xlu0 %1543
        %v1545 = vpack.c.bf16 %v1508, %v1506
        %v1546 = vpack.c.bf16 %v1512, %v1510
        %v1547 = vpack.c.bf16 %v1516, %v1514
        %v1548 = vpack.c.bf16 %v1520, %v1518
        %1549 = vrot.lane.b32.xlu0 %v753, 64
        %v1550 = vpop.permute.xlu0 %1549
        %1551 = vrot.lane.b32.xlu0 %v754, 64
        %v1552 = vpop.permute.xlu0 %1551
        %1553 = vrot.lane.b32.xlu0 %v755, 64
        %v1554 = vpop.permute.xlu0 %1553
        %1555 = vrot.lane.b32.xlu0 %v756, 64
        %v1556 = vpop.permute.xlu0 %1555
        %v1562 = vsel %vm851, %v1545, 0
        %v1565 = vsel %vm851, %v1546, 0
        %v1568 = vsel %vm851, %v1547, 0
        %v1571 = vsel %vm851, %v1548, 0
        %1573 = vmatprep.subr.bf16.mxu0 0
        %1574 = vmatpush1.bf16.msra.mxu0 %v1550
        %1575 = vmatprep.subr.bf16.mxu0 0
        %1576 = vmatpush1.bf16.msra.mxu0 %v1552
        %1577 = vmatprep.subr.bf16.mxu0 0
        %1578 = vmatpush1.bf16.msra.mxu0 %v1554
        %1579 = vmatprep.subr.bf16.mxu0 0
        %1580 = vmatpush1.bf16.msra.mxu0 %v1556
        %1581 = vmatprep.subr.bf16.mxu0 0
        %1582 = vmatpush1.bf16.msra.mxu0 0
        %1583 = vmatprep.subr.bf16.mxu0 0
        %1584 = vmatpush1.bf16.msra.mxu0 0
        %1585 = vmatprep.subr.bf16.mxu0 0
        %1586 = vmatpush1.bf16.msra.mxu0 0
        %1587 = vmatprep.subr.bf16.mxu0 0
        %1588 = vmatpush1.bf16.msra.mxu0 0
        %1589 = vmatprep.subr.bf16.mxu0 0
        %1590 = vmatpush1.bf16.msra.mxu0 0
        %1591 = vmatprep.subr.bf16.mxu0 0
        %1592 = vmatpush1.bf16.msra.mxu0 0
        %1593 = vmatprep.subr.bf16.mxu0 0
        %1594 = vmatpush1.bf16.msra.mxu0 0
        %1595 = vmatprep.subr.bf16.mxu0 0
        %1596 = vmatpush1.bf16.msra.mxu0 0
        %1597 = vmatprep.subr.bf16.mxu0 0
        %1598 = vmatpush1.bf16.msra.mxu0 0
        %1599 = vmatprep.subr.bf16.mxu0 0
        %1600 = vmatpush1.bf16.msra.mxu0 0
        %1601 = vmatprep.subr.bf16.mxu0 0
        %1602 = vmatpush1.bf16.msra.mxu0 0
        %1603 = vmatprep.subr.bf16.mxu0 0
        %1604 = vmatpush1.bf16.msra.mxu0 0
        %1605 = vmatprep.mubr.bf16.mxu0 0
        %1606 = vmatmul.mubr.bf16.gmra.mrb[0].mxu0 %v1562
        %v1607 = vpop.f32.mrb[0].mxu0
        %v1608 = vadd.f32 0.0, %v1607
        %v1609 = vpop.f32.mrb[0].mxu0
        %v1610 = vpop.f32.mrb[0].mxu0
        %v1611 = vadd.f32 0.0, %v1610
        %v1612 = vpop.f32.mrb[0].mxu0
        %1613 = vmatprep.mubr.bf16.mxu0 0
        %1614 = vmatmul.mubr.bf16.gmra.mrb[0].mxu0 %v1565
        %v1615 = vpop.f32.mrb[0].mxu0
        %v1616 = vadd.f32 0.0, %v1615
        %v1617 = vpop.f32.mrb[0].mxu0
        %v1618 = vpop.f32.mrb[0].mxu0
        %v1619 = vadd.f32 0.0, %v1618
        %v1620 = vpop.f32.mrb[0].mxu0
        %1621 = vmatprep.mubr.bf16.mxu0 0
        %1622 = vmatmul.mubr.bf16.gmra.mrb[0].mxu0 %v1568
        %v1623 = vpop.f32.mrb[0].mxu0
        %v1624 = vadd.f32 0.0, %v1623
        %v1625 = vpop.f32.mrb[0].mxu0
        %v1626 = vpop.f32.mrb[0].mxu0
        %v1627 = vadd.f32 0.0, %v1626
        %v1628 = vpop.f32.mrb[0].mxu0
        %1629 = vmatprep.mubr.bf16.mxu0 0
        %1630 = vmatmul.mubr.bf16.gmra.mrb[0].mxu0 %v1571
        %v1631 = vpop.f32.mrb[0].mxu0
        %v1632 = vadd.f32 0.0, %v1631
        %v1633 = vpop.f32.mrb[0].mxu0
        %v1634 = vpop.f32.mrb[0].mxu0
        %v1635 = vadd.f32 0.0, %v1634
        %v1636 = vpop.f32.mrb[0].mxu0
        %1637 = vdwg.mxu0
        %v1638 = vrcp.pop %v1523
        %v1639 = vrcp.pop %v1526
        %v1640 = vrcp.pop %v1529
        %v1641 = vrcp.pop %v1532
        %v1642 = vrcp.pop %v1535
        %v1643 = vrcp.pop %v1538
        %v1644 = vrcp.pop %v1541
        %v1645 = vrcp.pop %v1544
        %v1646 = vmul.f32 %v1608, %v1638
        %v1647 = vmul.f32 %v1611, %v1639
        %v1648 = vmul.f32 %v1616, %v1640
        %v1649 = vmul.f32 %v1619, %v1641
        %v1650 = vmul.f32 %v1624, %v1642
        %v1651 = vmul.f32 %v1627, %v1643
        %v1652 = vmul.f32 %v1632, %v1644
        %v1653 = vmul.f32 %v1635, %v1645
        %1662 = vrot.lane.b32.xlu0 %v1646, 64
        %v1663 = vpop.permute.xlu0 %1662
        %1664 = vrot.lane.b32.xlu0 %v1647, 64
        %v1665 = vpop.permute.xlu0 %1664
        %1666 = vrot.lane.b32.xlu0 %v1648, 64
        %v1667 = vpop.permute.xlu0 %1666
        %1668 = vrot.lane.b32.xlu0 %v1649, 64
        %v1669 = vpop.permute.xlu0 %1668
        %1670 = vrot.lane.b32.xlu0 %v1650, 64
        %v1671 = vpop.permute.xlu0 %1670
        %1672 = vrot.lane.b32.xlu0 %v1651, 64
        %v1673 = vpop.permute.xlu0 %1672
        %1674 = vrot.lane.b32.xlu0 %v1652, 64
        %v1675 = vpop.permute.xlu0 %1674
        %1676 = vrot.lane.b32.xlu0 %v1653, 64
        %v1677 = vpop.permute.xlu0 %1676
        %vm1686 = vcmask 785920
        %1687 = vst.msk [vmem:[#allocation2] sm:$0xff] %vm1686, %v1663
        %1688 = vst.msk [vmem:[#allocation2 + $0x8] sm:$0xff] %vm1686, %v1665
        %1689 = vst.msk [vmem:[#allocation2 + $0x10] sm:$0xff] %vm1686, %v1667
        %1690 = vst.msk [vmem:[#allocation2 + $0x18] sm:$0xff] %vm1686, %v1669
        %1691 = vst.msk [vmem:[#allocation2 + $0x20] sm:$0xff] %vm1686, %v1671
        %1692 = vst.msk [vmem:[#allocation2 + $0x28] sm:$0xff] %vm1686, %v1673
        %1693 = vst.msk [vmem:[#allocation2 + $0x30] sm:$0xff] %vm1686, %v1675
        %1694 = vst.msk [vmem:[#allocation2 + $0x38] sm:$0xff] %vm1686, %v1677
        %1695 = vrot.lane.b32.xlu0 %v697, 32
        %v1696 = vpop.permute.xlu0 %1695
        %1697 = vrot.lane.b32.xlu0 %v698, 32
        %v1698 = vpop.permute.xlu0 %1697
        %1699 = vrot.lane.b32.xlu0 %v699, 32
        %v1700 = vpop.permute.xlu0 %1699
        %1701 = vrot.lane.b32.xlu0 %v700, 32
        %v1702 = vpop.permute.xlu0 %1701
        %1703 = vrot.lane.b32.xlu0 %v725, 32
        %v1704 = vpop.permute.xlu0 %1703
        %1705 = vrot.lane.b32.xlu0 %v726, 32
        %v1706 = vpop.permute.xlu0 %1705
        %1707 = vrot.lane.b32.xlu0 %v727, 32
        %v1708 = vpop.permute.xlu0 %1707
        %1709 = vrot.lane.b32.xlu0 %v728, 32
        %v1710 = vpop.permute.xlu0 %1709
        %v1712 = vsel %vm761, %v1696, 0
        %v1715 = vsel %vm761, %v1698, 0
        %v1718 = vsel %vm761, %v1700, 0
        %v1721 = vsel %vm761, %v1702, 0
        %v1724 = vsel %vm761, %v1704, 0
        %v1727 = vsel %vm761, %v1706, 0
        %v1730 = vsel %vm761, %v1708, 0
        %v1733 = vsel %vm761, %v1710, 0
        %1735 = vmatprep.subr.bf16.mxu0 0
        %1736 = vmatpush1.bf16.xpose.msra.mxu0 %v1724
        %1737 = vmatprep.subr.bf16.mxu0 0
        %1738 = vmatpush1.bf16.xpose.msra.mxu0 %v1727
        %1739 = vmatprep.subr.bf16.mxu0 0
        %1740 = vmatpush1.bf16.xpose.msra.mxu0 %v1730
        %1741 = vmatprep.subr.bf16.mxu0 0
        %1742 = vmatpush1.bf16.xpose.msra.mxu0 %v1733
        %1743 = vmatprep.subr.bf16.mxu0 0
        %1744 = vmatpush1.bf16.xpose.msra.mxu0 0
        %1745 = vmatprep.subr.bf16.mxu0 0
        %1746 = vmatpush1.bf16.xpose.msra.mxu0 0
        %1747 = vmatprep.subr.bf16.mxu0 0
        %1748 = vmatpush1.bf16.xpose.msra.mxu0 0
        %1749 = vmatprep.subr.bf16.mxu0 0
        %1750 = vmatpush1.bf16.xpose.msra.mxu0 0
        %1751 = vmatprep.subr.bf16.mxu0 0
        %1752 = vmatpush1.bf16.xpose.msra.mxu0 0
        %1753 = vmatprep.subr.bf16.mxu0 0
        %1754 = vmatpush1.bf16.xpose.msra.mxu0 0
        %1755 = vmatprep.subr.bf16.mxu0 0
        %1756 = vmatpush1.bf16.xpose.msra.mxu0 0
        %1757 = vmatprep.subr.bf16.mxu0 0
        %1758 = vmatpush1.bf16.xpose.msra.mxu0 0
        %1759 = vmatprep.subr.bf16.mxu0 0
        %1760 = vmatpush1.bf16.xpose.msra.mxu0 0
        %1761 = vmatprep.subr.bf16.mxu0 0
        %1762 = vmatpush1.bf16.xpose.msra.mxu0 0
        %1763 = vmatprep.subr.bf16.mxu0 0
        %1764 = vmatpush1.bf16.xpose.msra.mxu0 0
        %1765 = vmatprep.subr.bf16.mxu0 0
        %1766 = vmatpush1.bf16.xpose.msra.mxu0 0
        %1767 = vmatprep.mubr.bf16.mxu0 0
        %1768 = vmatmul.mubr.bf16.gmra.mrb[0].mxu0 %v1712
        %v1769 = vpop.f32.mrb[0].mxu0
        %v1770 = vadd.f32 0.0, %v1769
        %v1771 = vpop.f32.mrb[0].mxu0
        %v1772 = vpop.f32.mrb[0].mxu0
        %v1773 = vadd.f32 0.0, %v1772
        %v1774 = vpop.f32.mrb[0].mxu0
        %1775 = vmatprep.mubr.bf16.mxu0 0
        %1776 = vmatmul.mubr.bf16.gmra.mrb[0].mxu0 %v1715
        %v1777 = vpop.f32.mrb[0].mxu0
        %v1778 = vadd.f32 0.0, %v1777
        %v1779 = vpop.f32.mrb[0].mxu0
        %v1780 = vpop.f32.mrb[0].mxu0
        %v1781 = vadd.f32 0.0, %v1780
        %v1782 = vpop.f32.mrb[0].mxu0
        %1783 = vmatprep.mubr.bf16.mxu0 0
        %1784 = vmatmul.mubr.bf16.gmra.mrb[0].mxu0 %v1718
        %v1785 = vpop.f32.mrb[0].mxu0
        %v1786 = vadd.f32 0.0, %v1785
        %v1787 = vpop.f32.mrb[0].mxu0
        %v1788 = vpop.f32.mrb[0].mxu0
        %v1789 = vadd.f32 0.0, %v1788
        %v1790 = vpop.f32.mrb[0].mxu0
        %1791 = vmatprep.mubr.bf16.mxu0 0
        %1792 = vmatmul.mubr.bf16.gmra.mrb[0].mxu0 %v1721
        %v1793 = vpop.f32.mrb[0].mxu0
        %v1794 = vadd.f32 0.0, %v1793
        %v1795 = vpop.f32.mrb[0].mxu0
        %v1796 = vpop.f32.mrb[0].mxu0
        %v1797 = vadd.f32 0.0, %v1796
        %v1798 = vpop.f32.mrb[0].mxu0
        %1799 = vdwg.mxu0
        %v1800 = vsel %vm851, %v1770, -inf
        %1801 = vmax.xlane.f32.xlu0 %v1800
        %v1802 = vpop.xlane.xlu0 %1801
        %v1803 = vsel %vm851, %v1773, -inf
        %1804 = vmax.xlane.f32.xlu0 %v1803
        %v1805 = vpop.xlane.xlu0 %1804
        %v1806 = vsel %vm851, %v1778, -inf
        %1807 = vmax.xlane.f32.xlu0 %v1806
        %v1808 = vpop.xlane.xlu0 %1807
        %v1809 = vsel %vm851, %v1781, -inf
        %1810 = vmax.xlane.f32.xlu0 %v1809
        %v1811 = vpop.xlane.xlu0 %1810
        %v1812 = vsel %vm851, %v1786, -inf
        %1813 = vmax.xlane.f32.xlu0 %v1812
        %v1814 = vpop.xlane.xlu0 %1813
        %v1815 = vsel %vm851, %v1789, -inf
        %1816 = vmax.xlane.f32.xlu0 %v1815
        %v1817 = vpop.xlane.xlu0 %1816
        %v1818 = vsel %vm851, %v1794, -inf
        %1819 = vmax.xlane.f32.xlu0 %v1818
        %v1820 = vpop.xlane.xlu0 %1819
        %v1821 = vsel %vm851, %v1797, -inf
        %1822 = vmax.xlane.f32.xlu0 %v1821
        %v1823 = vpop.xlane.xlu0 %1822
        %v1824 = vsub.f32 %v1770, %v1802
        %v1825 = vsub.f32 %v1773, %v1805
        %v1826 = vsub.f32 %v1778, %v1808
        %v1827 = vsub.f32 %v1781, %v1811
        %v1828 = vsub.f32 %v1786, %v1814
        %v1829 = vsub.f32 %v1789, %v1817
        %v1830 = vsub.f32 %v1794, %v1820
        %v1831 = vsub.f32 %v1797, %v1823
        %v1832 = vmul.f32 %v1824, 1.442695
        %v1833 = vpow.pop %v1832
        %v1834 = vmul.f32 %v1825, 1.442695
        %v1835 = vpow.pop %v1834
        %v1836 = vmul.f32 %v1826, 1.442695
        %v1837 = vpow.pop %v1836
        %v1838 = vmul.f32 %v1827, 1.442695
        %v1839 = vpow.pop %v1838
        %v1840 = vmul.f32 %v1828, 1.442695
        %v1841 = vpow.pop %v1840
        %v1842 = vmul.f32 %v1829, 1.442695
        %v1843 = vpow.pop %v1842
        %v1844 = vmul.f32 %v1830, 1.442695
        %v1845 = vpow.pop %v1844
        %v1846 = vmul.f32 %v1831, 1.442695
        %v1847 = vpow.pop %v1846
        %v1848 = vsel %vm851, %v1833, 0.0
        %1849 = vadd.xlane.f32.xlu0 %v1848
        %v1850 = vpop.xlane.xlu0 %1849
        %v1851 = vsel %vm851, %v1835, 0.0
        %1852 = vadd.xlane.f32.xlu0 %v1851
        %v1853 = vpop.xlane.xlu0 %1852
        %v1854 = vsel %vm851, %v1837, 0.0
        %1855 = vadd.xlane.f32.xlu0 %v1854
        %v1856 = vpop.xlane.xlu0 %1855
        %v1857 = vsel %vm851, %v1839, 0.0
        %1858 = vadd.xlane.f32.xlu0 %v1857
        %v1859 = vpop.xlane.xlu0 %1858
        %v1860 = vsel %vm851, %v1841, 0.0
        %1861 = vadd.xlane.f32.xlu0 %v1860
        %v1862 = vpop.xlane.xlu0 %1861
        %v1863 = vsel %vm851, %v1843, 0.0
        %1864 = vadd.xlane.f32.xlu0 %v1863
        %v1865 = vpop.xlane.xlu0 %1864
        %v1866 = vsel %vm851, %v1845, 0.0
        %1867 = vadd.xlane.f32.xlu0 %v1866
        %v1868 = vpop.xlane.xlu0 %1867
        %v1869 = vsel %vm851, %v1847, 0.0
        %1870 = vadd.xlane.f32.xlu0 %v1869
        %v1871 = vpop.xlane.xlu0 %1870
        %v1872 = vpack.c.bf16 %v1835, %v1833
        %v1873 = vpack.c.bf16 %v1839, %v1837
        %v1874 = vpack.c.bf16 %v1843, %v1841
        %v1875 = vpack.c.bf16 %v1847, %v1845
        %1876 = vrot.lane.b32.xlu0 %v753, 32
        %v1877 = vpop.permute.xlu0 %1876
        %1878 = vrot.lane.b32.xlu0 %v754, 32
        %v1879 = vpop.permute.xlu0 %1878
        %1880 = vrot.lane.b32.xlu0 %v755, 32
        %v1881 = vpop.permute.xlu0 %1880
        %1882 = vrot.lane.b32.xlu0 %v756, 32
        %v1883 = vpop.permute.xlu0 %1882
        %v1889 = vsel %vm851, %v1872, 0
        %v1892 = vsel %vm851, %v1873, 0
        %v1895 = vsel %vm851, %v1874, 0
        %v1898 = vsel %vm851, %v1875, 0
        %1900 = vmatprep.subr.bf16.mxu0 0
        %1901 = vmatpush1.bf16.msra.mxu0 %v1877
        %1902 = vmatprep.subr.bf16.mxu0 0
        %1903 = vmatpush1.bf16.msra.mxu0 %v1879
        %1904 = vmatprep.subr.bf16.mxu0 0
        %1905 = vmatpush1.bf16.msra.mxu0 %v1881
        %1906 = vmatprep.subr.bf16.mxu0 0
        %1907 = vmatpush1.bf16.msra.mxu0 %v1883
        %1908 = vmatprep.subr.bf16.mxu0 0
        %1909 = vmatpush1.bf16.msra.mxu0 0
        %1910 = vmatprep.subr.bf16.mxu0 0
        %1911 = vmatpush1.bf16.msra.mxu0 0
        %1912 = vmatprep.subr.bf16.mxu0 0
        %1913 = vmatpush1.bf16.msra.mxu0 0
        %1914 = vmatprep.subr.bf16.mxu0 0
        %1915 = vmatpush1.bf16.msra.mxu0 0
        %1916 = vmatprep.subr.bf16.mxu0 0
        %1917 = vmatpush1.bf16.msra.mxu0 0
        %1918 = vmatprep.subr.bf16.mxu0 0
        %1919 = vmatpush1.bf16.msra.mxu0 0
        %1920 = vmatprep.subr.bf16.mxu0 0
        %1921 = vmatpush1.bf16.msra.mxu0 0
        %1922 = vmatprep.subr.bf16.mxu0 0
        %1923 = vmatpush1.bf16.msra.mxu0 0
        %1924 = vmatprep.subr.bf16.mxu0 0
        %1925 = vmatpush1.bf16.msra.mxu0 0
        %1926 = vmatprep.subr.bf16.mxu0 0
        %1927 = vmatpush1.bf16.msra.mxu0 0
        %1928 = vmatprep.subr.bf16.mxu0 0
        %1929 = vmatpush1.bf16.msra.mxu0 0
        %1930 = vmatprep.subr.bf16.mxu0 0
        %1931 = vmatpush1.bf16.msra.mxu0 0
        %1932 = vmatprep.mubr.bf16.mxu0 0
        %1933 = vmatmul.mubr.bf16.gmra.mrb[0].mxu0 %v1889
        %v1934 = vpop.f32.mrb[0].mxu0
        %v1935 = vadd.f32 0.0, %v1934
        %v1936 = vpop.f32.mrb[0].mxu0
        %v1937 = vpop.f32.mrb[0].mxu0
        %v1938 = vadd.f32 0.0, %v1937
        %v1939 = vpop.f32.mrb[0].mxu0
        %1940 = vmatprep.mubr.bf16.mxu0 0
        %1941 = vmatmul.mubr.bf16.gmra.mrb[0].mxu0 %v1892
        %v1942 = vpop.f32.mrb[0].mxu0
        %v1943 = vadd.f32 0.0, %v1942
        %v1944 = vpop.f32.mrb[0].mxu0
        %v1945 = vpop.f32.mrb[0].mxu0
        %v1946 = vadd.f32 0.0, %v1945
        %v1947 = vpop.f32.mrb[0].mxu0
        %1948 = vmatprep.mubr.bf16.mxu0 0
        %1949 = vmatmul.mubr.bf16.gmra.mrb[0].mxu0 %v1895
        %v1950 = vpop.f32.mrb[0].mxu0
        %v1951 = vadd.f32 0.0, %v1950
        %v1952 = vpop.f32.mrb[0].mxu0
        %v1953 = vpop.f32.mrb[0].mxu0
        %v1954 = vadd.f32 0.0, %v1953
        %v1955 = vpop.f32.mrb[0].mxu0
        %1956 = vmatprep.mubr.bf16.mxu0 0
        %1957 = vmatmul.mubr.bf16.gmra.mrb[0].mxu0 %v1898
        %v1958 = vpop.f32.mrb[0].mxu0
        %v1959 = vadd.f32 0.0, %v1958
        %v1960 = vpop.f32.mrb[0].mxu0
        %v1961 = vpop.f32.mrb[0].mxu0
        %v1962 = vadd.f32 0.0, %v1961
        %v1963 = vpop.f32.mrb[0].mxu0
        %1964 = vdwg.mxu0
        %v1965 = vrcp.pop %v1850
        %v1966 = vrcp.pop %v1853
        %v1967 = vrcp.pop %v1856
        %v1968 = vrcp.pop %v1859
        %v1969 = vrcp.pop %v1862
        %v1970 = vrcp.pop %v1865
        %v1971 = vrcp.pop %v1868
        %v1972 = vrcp.pop %v1871
        %v1973 = vmul.f32 %v1935, %v1965
        %v1974 = vmul.f32 %v1938, %v1966
        %v1975 = vmul.f32 %v1943, %v1967
        %v1976 = vmul.f32 %v1946, %v1968
        %v1977 = vmul.f32 %v1951, %v1969
        %v1978 = vmul.f32 %v1954, %v1970
        %v1979 = vmul.f32 %v1959, %v1971
        %v1980 = vmul.f32 %v1962, %v1972
        %1989 = vrot.lane.b32.xlu0 %v1973, 96
        %v1990 = vpop.permute.xlu0 %1989
        %1991 = vrot.lane.b32.xlu0 %v1974, 96
        %v1992 = vpop.permute.xlu0 %1991
        %1993 = vrot.lane.b32.xlu0 %v1975, 96
        %v1994 = vpop.permute.xlu0 %1993
        %1995 = vrot.lane.b32.xlu0 %v1976, 96
        %v1996 = vpop.permute.xlu0 %1995
        %1997 = vrot.lane.b32.xlu0 %v1977, 96
        %v1998 = vpop.permute.xlu0 %1997
        %1999 = vrot.lane.b32.xlu0 %v1978, 96
        %v2000 = vpop.permute.xlu0 %1999
        %2001 = vrot.lane.b32.xlu0 %v1979, 96
        %v2002 = vpop.permute.xlu0 %2001
        %2003 = vrot.lane.b32.xlu0 %v1980, 96
        %v2004 = vpop.permute.xlu0 %2003
        %vm2013 = vcmask 1048320
        %2014 = vst.msk [vmem:[#allocation2] sm:$0xff] %vm2013, %v1990
        %2015 = vst.msk [vmem:[#allocation2 + $0x8] sm:$0xff] %vm2013, %v1992
        %2016 = vst.msk [vmem:[#allocation2 + $0x10] sm:$0xff] %vm2013, %v1994
        %2017 = vst.msk [vmem:[#allocation2 + $0x18] sm:$0xff] %vm2013, %v1996
        %2018 = vst.msk [vmem:[#allocation2 + $0x20] sm:$0xff] %vm2013, %v1998
        %2019 = vst.msk [vmem:[#allocation2 + $0x28] sm:$0xff] %vm2013, %v2000
        %2020 = vst.msk [vmem:[#allocation2 + $0x30] sm:$0xff] %vm2013, %v2002
        %2021 = vst.msk [vmem:[#allocation2 + $0x38] sm:$0xff] %vm2013, %v2004
        %v2023 = vsel %vm761, %v701, 0
        %v2026 = vsel %vm761, %v702, 0
        %v2029 = vsel %vm761, %v703, 0
        %v2032 = vsel %vm761, %v704, 0
        %v2035 = vsel %vm761, %v729, 0
        %v2038 = vsel %vm761, %v730, 0
        %v2041 = vsel %vm761, %v731, 0
        %v2044 = vsel %vm761, %v732, 0
        %2046 = vmatprep.subr.bf16.mxu0 0
        %2047 = vmatpush1.bf16.xpose.msra.mxu0 %v2035
        %2048 = vmatprep.subr.bf16.mxu0 0
        %2049 = vmatpush1.bf16.xpose.msra.mxu0 %v2038
        %2050 = vmatprep.subr.bf16.mxu0 0
        %2051 = vmatpush1.bf16.xpose.msra.mxu0 %v2041
        %2052 = vmatprep.subr.bf16.mxu0 0
        %2053 = vmatpush1.bf16.xpose.msra.mxu0 %v2044
        %2054 = vmatprep.subr.bf16.mxu0 0
        %2055 = vmatpush1.bf16.xpose.msra.mxu0 0
        %2056 = vmatprep.subr.bf16.mxu0 0
        %2057 = vmatpush1.bf16.xpose.msra.mxu0 0
        %2058 = vmatprep.subr.bf16.mxu0 0
        %2059 = vmatpush1.bf16.xpose.msra.mxu0 0
        %2060 = vmatprep.subr.bf16.mxu0 0
        %2061 = vmatpush1.bf16.xpose.msra.mxu0 0
        %2062 = vmatprep.subr.bf16.mxu0 0
        %2063 = vmatpush1.bf16.xpose.msra.mxu0 0
        %2064 = vmatprep.subr.bf16.mxu0 0
        %2065 = vmatpush1.bf16.xpose.msra.mxu0 0
        %2066 = vmatprep.subr.bf16.mxu0 0
        %2067 = vmatpush1.bf16.xpose.msra.mxu0 0
        %2068 = vmatprep.subr.bf16.mxu0 0
        %2069 = vmatpush1.bf16.xpose.msra.mxu0 0
        %2070 = vmatprep.subr.bf16.mxu0 0
        %2071 = vmatpush1.bf16.xpose.msra.mxu0 0
        %2072 = vmatprep.subr.bf16.mxu0 0
        %2073 = vmatpush1.bf16.xpose.msra.mxu0 0
        %2074 = vmatprep.subr.bf16.mxu0 0
        %2075 = vmatpush1.bf16.xpose.msra.mxu0 0
        %2076 = vmatprep.subr.bf16.mxu0 0
        %2077 = vmatpush1.bf16.xpose.msra.mxu0 0
        %2078 = vmatprep.mubr.bf16.mxu0 0
        %2079 = vmatmul.mubr.bf16.gmra.mrb[0].mxu0 %v2023
        %v2080 = vpop.f32.mrb[0].mxu0
        %v2081 = vadd.f32 0.0, %v2080
        %v2082 = vpop.f32.mrb[0].mxu0
        %v2083 = vpop.f32.mrb[0].mxu0
        %v2084 = vadd.f32 0.0, %v2083
        %v2085 = vpop.f32.mrb[0].mxu0
        %2086 = vmatprep.mubr.bf16.mxu0 0
        %2087 = vmatmul.mubr.bf16.gmra.mrb[0].mxu0 %v2026
        %v2088 = vpop.f32.mrb[0].mxu0
        %v2089 = vadd.f32 0.0, %v2088
        %v2090 = vpop.f32.mrb[0].mxu0
        %v2091 = vpop.f32.mrb[0].mxu0
        %v2092 = vadd.f32 0.0, %v2091
        %v2093 = vpop.f32.mrb[0].mxu0
        %2094 = vmatprep.mubr.bf16.mxu0 0
        %2095 = vmatmul.mubr.bf16.gmra.mrb[0].mxu0 %v2029
        %v2096 = vpop.f32.mrb[0].mxu0
        %v2097 = vadd.f32 0.0, %v2096
        %v2098 = vpop.f32.mrb[0].mxu0
        %v2099 = vpop.f32.mrb[0].mxu0
        %v2100 = vadd.f32 0.0, %v2099
        %v2101 = vpop.f32.mrb[0].mxu0
        %2102 = vmatprep.mubr.bf16.mxu0 0
        %2103 = vmatmul.mubr.bf16.gmra.mrb[0].mxu0 %v2032
        %v2104 = vpop.f32.mrb[0].mxu0
        %v2105 = vadd.f32 0.0, %v2104
        %v2106 = vpop.f32.mrb[0].mxu0
        %v2107 = vpop.f32.mrb[0].mxu0
        %v2108 = vadd.f32 0.0, %v2107
        %v2109 = vpop.f32.mrb[0].mxu0
        %2110 = vdwg.mxu0
        %v2111 = vsel %vm851, %v2081, -inf
        %2112 = vmax.xlane.f32.xlu0 %v2111
        %v2113 = vpop.xlane.xlu0 %2112
        %v2114 = vsel %vm851, %v2084, -inf
        %2115 = vmax.xlane.f32.xlu0 %v2114
        %v2116 = vpop.xlane.xlu0 %2115
        %v2117 = vsel %vm851, %v2089, -inf
        %2118 = vmax.xlane.f32.xlu0 %v2117
        %v2119 = vpop.xlane.xlu0 %2118
        %v2120 = vsel %vm851, %v2092, -inf
        %2121 = vmax.xlane.f32.xlu0 %v2120
        %v2122 = vpop.xlane.xlu0 %2121
        %v2123 = vsel %vm851, %v2097, -inf
        %2124 = vmax.xlane.f32.xlu0 %v2123
        %v2125 = vpop.xlane.xlu0 %2124
        %v2126 = vsel %vm851, %v2100, -inf
        %2127 = vmax.xlane.f32.xlu0 %v2126
        %v2128 = vpop.xlane.xlu0 %2127
        %v2129 = vsel %vm851, %v2105, -inf
        %2130 = vmax.xlane.f32.xlu0 %v2129
        %v2131 = vpop.xlane.xlu0 %2130
        %v2132 = vsel %vm851, %v2108, -inf
        %2133 = vmax.xlane.f32.xlu0 %v2132
        %v2134 = vpop.xlane.xlu0 %2133
        %v2135 = vsub.f32 %v2081, %v2113
        %v2136 = vsub.f32 %v2084, %v2116
        %v2137 = vsub.f32 %v2089, %v2119
        %v2138 = vsub.f32 %v2092, %v2122
        %v2139 = vsub.f32 %v2097, %v2125
        %v2140 = vsub.f32 %v2100, %v2128
        %v2141 = vsub.f32 %v2105, %v2131
        %v2142 = vsub.f32 %v2108, %v2134
        %v2143 = vmul.f32 %v2135, 1.442695
        %v2144 = vpow.pop %v2143
        %v2145 = vmul.f32 %v2136, 1.442695
        %v2146 = vpow.pop %v2145
        %v2147 = vmul.f32 %v2137, 1.442695
        %v2148 = vpow.pop %v2147
        %v2149 = vmul.f32 %v2138, 1.442695
        %v2150 = vpow.pop %v2149
        %v2151 = vmul.f32 %v2139, 1.442695
        %v2152 = vpow.pop %v2151
        %v2153 = vmul.f32 %v2140, 1.442695
        %v2154 = vpow.pop %v2153
        %v2155 = vmul.f32 %v2141, 1.442695
        %v2156 = vpow.pop %v2155
        %v2157 = vmul.f32 %v2142, 1.442695
        %v2158 = vpow.pop %v2157
        %v2159 = vsel %vm851, %v2144, 0.0
        %2160 = vadd.xlane.f32.xlu0 %v2159
        %v2161 = vpop.xlane.xlu0 %2160
        %v2162 = vsel %vm851, %v2146, 0.0
        %2163 = vadd.xlane.f32.xlu0 %v2162
        %v2164 = vpop.xlane.xlu0 %2163
        %v2165 = vsel %vm851, %v2148, 0.0
        %2166 = vadd.xlane.f32.xlu0 %v2165
        %v2167 = vpop.xlane.xlu0 %2166
        %v2168 = vsel %vm851, %v2150, 0.0
        %2169 = vadd.xlane.f32.xlu0 %v2168
        %v2170 = vpop.xlane.xlu0 %2169
        %v2171 = vsel %vm851, %v2152, 0.0
        %2172 = vadd.xlane.f32.xlu0 %v2171
        %v2173 = vpop.xlane.xlu0 %2172
        %v2174 = vsel %vm851, %v2154, 0.0
        %2175 = vadd.xlane.f32.xlu0 %v2174
        %v2176 = vpop.xlane.xlu0 %2175
        %v2177 = vsel %vm851, %v2156, 0.0
        %2178 = vadd.xlane.f32.xlu0 %v2177
        %v2179 = vpop.xlane.xlu0 %2178
        %v2180 = vsel %vm851, %v2158, 0.0
        %2181 = vadd.xlane.f32.xlu0 %v2180
        %v2182 = vpop.xlane.xlu0 %2181
        %v2183 = vpack.c.bf16 %v2146, %v2144
        %v2184 = vpack.c.bf16 %v2150, %v2148
        %v2185 = vpack.c.bf16 %v2154, %v2152
        %v2186 = vpack.c.bf16 %v2158, %v2156
        %v2188 = vsel %vm851, %v2183, 0
        %v2191 = vsel %vm851, %v2184, 0
        %v2194 = vsel %vm851, %v2185, 0
        %v2197 = vsel %vm851, %v2186, 0
        %2199 = vmatprep.subr.bf16.mxu0 0
        %2200 = vmatpush1.bf16.msra.mxu0 %v757
        %2201 = vmatprep.subr.bf16.mxu0 0
        %2202 = vmatpush1.bf16.msra.mxu0 %v758
        %2203 = vmatprep.subr.bf16.mxu0 0
        %2204 = vmatpush1.bf16.msra.mxu0 %v759
        %2205 = vmatprep.subr.bf16.mxu0 0
        %2206 = vmatpush1.bf16.msra.mxu0 %v760
        %2207 = vmatprep.subr.bf16.mxu0 0
        %2208 = vmatpush1.bf16.msra.mxu0 0
        %2209 = vmatprep.subr.bf16.mxu0 0
        %2210 = vmatpush1.bf16.msra.mxu0 0
        %2211 = vmatprep.subr.bf16.mxu0 0
        %2212 = vmatpush1.bf16.msra.mxu0 0
        %2213 = vmatprep.subr.bf16.mxu0 0
        %2214 = vmatpush1.bf16.msra.mxu0 0
        %2215 = vmatprep.subr.bf16.mxu0 0
        %2216 = vmatpush1.bf16.msra.mxu0 0
        %2217 = vmatprep.subr.bf16.mxu0 0
        %2218 = vmatpush1.bf16.msra.mxu0 0
        %2219 = vmatprep.subr.bf16.mxu0 0
        %2220 = vmatpush1.bf16.msra.mxu0 0
        %2221 = vmatprep.subr.bf16.mxu0 0
        %2222 = vmatpush1.bf16.msra.mxu0 0
        %2223 = vmatprep.subr.bf16.mxu0 0
        %2224 = vmatpush1.bf16.msra.mxu0 0
        %2225 = vmatprep.subr.bf16.mxu0 0
        %2226 = vmatpush1.bf16.msra.mxu0 0
        %2227 = vmatprep.subr.bf16.mxu0 0
        %2228 = vmatpush1.bf16.msra.mxu0 0
        %2229 = vmatprep.subr.bf16.mxu0 0
        %2230 = vmatpush1.bf16.msra.mxu0 0
        %2231 = vmatprep.mubr.bf16.mxu0 0
        %2232 = vmatmul.mubr.bf16.gmra.mrb[0].mxu0 %v2188
        %v2233 = vpop.f32.mrb[0].mxu0
        %v2234 = vadd.f32 0.0, %v2233
        %v2235 = vpop.f32.mrb[0].mxu0
        %v2236 = vpop.f32.mrb[0].mxu0
        %v2237 = vadd.f32 0.0, %v2236
        %v2238 = vpop.f32.mrb[0].mxu0
        %2239 = vmatprep.mubr.bf16.mxu0 0
        %2240 = vmatmul.mubr.bf16.gmra.mrb[0].mxu0 %v2191
        %v2241 = vpop.f32.mrb[0].mxu0
        %v2242 = vadd.f32 0.0, %v2241
        %v2243 = vpop.f32.mrb[0].mxu0
        %v2244 = vpop.f32.mrb[0].mxu0
        %v2245 = vadd.f32 0.0, %v2244
        %v2246 = vpop.f32.mrb[0].mxu0
        %2247 = vmatprep.mubr.bf16.mxu0 0
        %2248 = vmatmul.mubr.bf16.gmra.mrb[0].mxu0 %v2194
        %v2249 = vpop.f32.mrb[0].mxu0
        %v2250 = vadd.f32 0.0, %v2249
        %v2251 = vpop.f32.mrb[0].mxu0
        %v2252 = vpop.f32.mrb[0].mxu0
        %v2253 = vadd.f32 0.0, %v2252
        %v2254 = vpop.f32.mrb[0].mxu0
        %2255 = vmatprep.mubr.bf16.mxu0 0
        %2256 = vmatmul.mubr.bf16.gmra.mrb[0].mxu0 %v2197
        %v2257 = vpop.f32.mrb[0].mxu0
        %v2258 = vadd.f32 0.0, %v2257
        %v2259 = vpop.f32.mrb[0].mxu0
        %v2260 = vpop.f32.mrb[0].mxu0
        %v2261 = vadd.f32 0.0, %v2260
        %v2262 = vpop.f32.mrb[0].mxu0
        %2263 = vdwg.mxu0
        %v2264 = vrcp.pop %v2161
        %v2265 = vrcp.pop %v2164
        %v2266 = vrcp.pop %v2167
        %v2267 = vrcp.pop %v2170
        %v2268 = vrcp.pop %v2173
        %v2269 = vrcp.pop %v2176
        %v2270 = vrcp.pop %v2179
        %v2271 = vrcp.pop %v2182
        %v2272 = vmul.f32 %v2234, %v2264
        %v2273 = vmul.f32 %v2237, %v2265
        %v2274 = vmul.f32 %v2242, %v2266
        %v2275 = vmul.f32 %v2245, %v2267
        %v2276 = vmul.f32 %v2250, %v2268
        %v2277 = vmul.f32 %v2253, %v2269
        %v2278 = vmul.f32 %v2258, %v2270
        %v2279 = vmul.f32 %v2261, %v2271
        %2280 = vst.msk [vmem:[#allocation2 + $0x40] sm:$0xff] %vm761, %v2272
        %2281 = vst.msk [vmem:[#allocation2 + $0x48] sm:$0xff] %vm761, %v2273
        %2282 = vst.msk [vmem:[#allocation2 + $0x50] sm:$0xff] %vm761, %v2274
        %2283 = vst.msk [vmem:[#allocation2 + $0x58] sm:$0xff] %vm761, %v2275
        %2284 = vst.msk [vmem:[#allocation2 + $0x60] sm:$0xff] %vm761, %v2276
        %2285 = vst.msk [vmem:[#allocation2 + $0x68] sm:$0xff] %vm761, %v2277
        %2286 = vst.msk [vmem:[#allocation2 + $0x70] sm:$0xff] %vm761, %v2278
        %2287 = vst.msk [vmem:[#allocation2 + $0x78] sm:$0xff] %vm761, %v2279
        %2292 = vrot.lane.b32.xlu0 %v701, 96
        %v2293 = vpop.permute.xlu0 %2292
        %2294 = vrot.lane.b32.xlu0 %v702, 96
        %v2295 = vpop.permute.xlu0 %2294
        %2296 = vrot.lane.b32.xlu0 %v703, 96
        %v2297 = vpop.permute.xlu0 %2296
        %2298 = vrot.lane.b32.xlu0 %v704, 96
        %v2299 = vpop.permute.xlu0 %2298
        %2304 = vrot.lane.b32.xlu0 %v729, 96
        %v2305 = vpop.permute.xlu0 %2304
        %2306 = vrot.lane.b32.xlu0 %v730, 96
        %v2307 = vpop.permute.xlu0 %2306
        %2308 = vrot.lane.b32.xlu0 %v731, 96
        %v2309 = vpop.permute.xlu0 %2308
        %2310 = vrot.lane.b32.xlu0 %v732, 96
        %v2311 = vpop.permute.xlu0 %2310
        %v2313 = vsel %vm761, %v2293, 0
        %v2316 = vsel %vm761, %v2295, 0
        %v2319 = vsel %vm761, %v2297, 0
        %v2322 = vsel %vm761, %v2299, 0
        %v2325 = vsel %vm761, %v2305, 0
        %v2328 = vsel %vm761, %v2307, 0
        %v2331 = vsel %vm761, %v2309, 0
        %v2334 = vsel %vm761, %v2311, 0
        %2336 = vmatprep.subr.bf16.mxu0 0
        %2337 = vmatpush1.bf16.xpose.msra.mxu0 %v2325
        %2338 = vmatprep.subr.bf16.mxu0 0
        %2339 = vmatpush1.bf16.xpose.msra.mxu0 %v2328
        %2340 = vmatprep.subr.bf16.mxu0 0
        %2341 = vmatpush1.bf16.xpose.msra.mxu0 %v2331
        %2342 = vmatprep.subr.bf16.mxu0 0
        %2343 = vmatpush1.bf16.xpose.msra.mxu0 %v2334
        %2344 = vmatprep.subr.bf16.mxu0 0
        %2345 = vmatpush1.bf16.xpose.msra.mxu0 0
        %2346 = vmatprep.subr.bf16.mxu0 0
        %2347 = vmatpush1.bf16.xpose.msra.mxu0 0
        %2348 = vmatprep.subr.bf16.mxu0 0
        %2349 = vmatpush1.bf16.xpose.msra.mxu0 0
        %2350 = vmatprep.subr.bf16.mxu0 0
        %2351 = vmatpush1.bf16.xpose.msra.mxu0 0
        %2352 = vmatprep.subr.bf16.mxu0 0
        %2353 = vmatpush1.bf16.xpose.msra.mxu0 0
        %2354 = vmatprep.subr.bf16.mxu0 0
        %2355 = vmatpush1.bf16.xpose.msra.mxu0 0
        %2356 = vmatprep.subr.bf16.mxu0 0
        %2357 = vmatpush1.bf16.xpose.msra.mxu0 0
        %2358 = vmatprep.subr.bf16.mxu0 0
        %2359 = vmatpush1.bf16.xpose.msra.mxu0 0
        %2360 = vmatprep.subr.bf16.mxu0 0
        %2361 = vmatpush1.bf16.xpose.msra.mxu0 0
        %2362 = vmatprep.subr.bf16.mxu0 0
        %2363 = vmatpush1.bf16.xpose.msra.mxu0 0
        %2364 = vmatprep.subr.bf16.mxu0 0
        %2365 = vmatpush1.bf16.xpose.msra.mxu0 0
        %2366 = vmatprep.subr.bf16.mxu0 0
        %2367 = vmatpush1.bf16.xpose.msra.mxu0 0
        %2368 = vmatprep.mubr.bf16.mxu0 0
        %2369 = vmatmul.mubr.bf16.gmra.mrb[0].mxu0 %v2313
        %v2370 = vpop.f32.mrb[0].mxu0
        %v2371 = vadd.f32 0.0, %v2370
        %v2372 = vpop.f32.mrb[0].mxu0
        %v2373 = vpop.f32.mrb[0].mxu0
        %v2374 = vadd.f32 0.0, %v2373
        %v2375 = vpop.f32.mrb[0].mxu0
        %2376 = vmatprep.mubr.bf16.mxu0 0
        %2377 = vmatmul.mubr.bf16.gmra.mrb[0].mxu0 %v2316
        %v2378 = vpop.f32.mrb[0].mxu0
        %v2379 = vadd.f32 0.0, %v2378
        %v2380 = vpop.f32.mrb[0].mxu0
        %v2381 = vpop.f32.mrb[0].mxu0
        %v2382 = vadd.f32 0.0, %v2381
        %v2383 = vpop.f32.mrb[0].mxu0
        %2384 = vmatprep.mubr.bf16.mxu0 0
        %2385 = vmatmul.mubr.bf16.gmra.mrb[0].mxu0 %v2319
        %v2386 = vpop.f32.mrb[0].mxu0
        %v2387 = vadd.f32 0.0, %v2386
        %v2388 = vpop.f32.mrb[0].mxu0
        %v2389 = vpop.f32.mrb[0].mxu0
        %v2390 = vadd.f32 0.0, %v2389
        %v2391 = vpop.f32.mrb[0].mxu0
        %2392 = vmatprep.mubr.bf16.mxu0 0
        %2393 = vmatmul.mubr.bf16.gmra.mrb[0].mxu0 %v2322
        %v2394 = vpop.f32.mrb[0].mxu0
        %v2395 = vadd.f32 0.0, %v2394
        %v2396 = vpop.f32.mrb[0].mxu0
        %v2397 = vpop.f32.mrb[0].mxu0
        %v2398 = vadd.f32 0.0, %v2397
        %v2399 = vpop.f32.mrb[0].mxu0
        %2400 = vdwg.mxu0
        %v2401 = vsel %vm851, %v2371, -inf
        %2402 = vmax.xlane.f32.xlu0 %v2401
        %v2403 = vpop.xlane.xlu0 %2402
        %v2404 = vsel %vm851, %v2374, -inf
        %2405 = vmax.xlane.f32.xlu0 %v2404
        %v2406 = vpop.xlane.xlu0 %2405
        %v2407 = vsel %vm851, %v2379, -inf
        %2408 = vmax.xlane.f32.xlu0 %v2407
        %v2409 = vpop.xlane.xlu0 %2408
        %v2410 = vsel %vm851, %v2382, -inf
        %2411 = vmax.xlane.f32.xlu0 %v2410
        %v2412 = vpop.xlane.xlu0 %2411
        %v2413 = vsel %vm851, %v2387, -inf
        %2414 = vmax.xlane.f32.xlu0 %v2413
        %v2415 = vpop.xlane.xlu0 %2414
        %v2416 = vsel %vm851, %v2390, -inf
        %2417 = vmax.xlane.f32.xlu0 %v2416
        %v2418 = vpop.xlane.xlu0 %2417
        %v2419 = vsel %vm851, %v2395, -inf
        %2420 = vmax.xlane.f32.xlu0 %v2419
        %v2421 = vpop.xlane.xlu0 %2420
        %v2422 = vsel %vm851, %v2398, -inf
        %2423 = vmax.xlane.f32.xlu0 %v2422
        %v2424 = vpop.xlane.xlu0 %2423
        %v2425 = vsub.f32 %v2371, %v2403
        %v2426 = vsub.f32 %v2374, %v2406
        %v2427 = vsub.f32 %v2379, %v2409
        %v2428 = vsub.f32 %v2382, %v2412
        %v2429 = vsub.f32 %v2387, %v2415
        %v2430 = vsub.f32 %v2390, %v2418
        %v2431 = vsub.f32 %v2395, %v2421
        %v2432 = vsub.f32 %v2398, %v2424
        %v2433 = vmul.f32 %v2425, 1.442695
        %v2434 = vpow.pop %v2433
        %v2435 = vmul.f32 %v2426, 1.442695
        %v2436 = vpow.pop %v2435
        %v2437 = vmul.f32 %v2427, 1.442695
        %v2438 = vpow.pop %v2437
        %v2439 = vmul.f32 %v2428, 1.442695
        %v2440 = vpow.pop %v2439
        %v2441 = vmul.f32 %v2429, 1.442695
        %v2442 = vpow.pop %v2441
        %v2443 = vmul.f32 %v2430, 1.442695
        %v2444 = vpow.pop %v2443
        %v2445 = vmul.f32 %v2431, 1.442695
        %v2446 = vpow.pop %v2445
        %v2447 = vmul.f32 %v2432, 1.442695
        %v2448 = vpow.pop %v2447
        %v2449 = vsel %vm851, %v2434, 0.0
        %2450 = vadd.xlane.f32.xlu0 %v2449
        %v2451 = vpop.xlane.xlu0 %2450
        %v2452 = vsel %vm851, %v2436, 0.0
        %2453 = vadd.xlane.f32.xlu0 %v2452
        %v2454 = vpop.xlane.xlu0 %2453
        %v2455 = vsel %vm851, %v2438, 0.0
        %2456 = vadd.xlane.f32.xlu0 %v2455
        %v2457 = vpop.xlane.xlu0 %2456
        %v2458 = vsel %vm851, %v2440, 0.0
        %2459 = vadd.xlane.f32.xlu0 %v2458
        %v2460 = vpop.xlane.xlu0 %2459
        %v2461 = vsel %vm851, %v2442, 0.0
        %2462 = vadd.xlane.f32.xlu0 %v2461
        %v2463 = vpop.xlane.xlu0 %2462
        %v2464 = vsel %vm851, %v2444, 0.0
        %2465 = vadd.xlane.f32.xlu0 %v2464
        %v2466 = vpop.xlane.xlu0 %2465
        %v2467 = vsel %vm851, %v2446, 0.0
        %2468 = vadd.xlane.f32.xlu0 %v2467
        %v2469 = vpop.xlane.xlu0 %2468
        %v2470 = vsel %vm851, %v2448, 0.0
        %2471 = vadd.xlane.f32.xlu0 %v2470
        %v2472 = vpop.xlane.xlu0 %2471
        %v2473 = vpack.c.bf16 %v2436, %v2434
        %v2474 = vpack.c.bf16 %v2440, %v2438
        %v2475 = vpack.c.bf16 %v2444, %v2442
        %v2476 = vpack.c.bf16 %v2448, %v2446
        %2481 = vrot.lane.b32.xlu0 %v757, 96
        %v2482 = vpop.permute.xlu0 %2481
        %2483 = vrot.lane.b32.xlu0 %v758, 96
        %v2484 = vpop.permute.xlu0 %2483
        %2485 = vrot.lane.b32.xlu0 %v759, 96
        %v2486 = vpop.permute.xlu0 %2485
        %2487 = vrot.lane.b32.xlu0 %v760, 96
        %v2488 = vpop.permute.xlu0 %2487
        %v2494 = vsel %vm851, %v2473, 0
        %v2497 = vsel %vm851, %v2474, 0
        %v2500 = vsel %vm851, %v2475, 0
        %v2503 = vsel %vm851, %v2476, 0
        %2505 = vmatprep.subr.bf16.mxu0 0
        %2506 = vmatpush1.bf16.msra.mxu0 %v2482
        %2507 = vmatprep.subr.bf16.mxu0 0
        %2508 = vmatpush1.bf16.msra.mxu0 %v2484
        %2509 = vmatprep.subr.bf16.mxu0 0
        %2510 = vmatpush1.bf16.msra.mxu0 %v2486
        %2511 = vmatprep.subr.bf16.mxu0 0
        %2512 = vmatpush1.bf16.msra.mxu0 %v2488
        %2513 = vmatprep.subr.bf16.mxu0 0
        %2514 = vmatpush1.bf16.msra.mxu0 0
        %2515 = vmatprep.subr.bf16.mxu0 0
        %2516 = vmatpush1.bf16.msra.mxu0 0
        %2517 = vmatprep.subr.bf16.mxu0 0
        %2518 = vmatpush1.bf16.msra.mxu0 0
        %2519 = vmatprep.subr.bf16.mxu0 0
        %2520 = vmatpush1.bf16.msra.mxu0 0
        %2521 = vmatprep.subr.bf16.mxu0 0
        %2522 = vmatpush1.bf16.msra.mxu0 0
        %2523 = vmatprep.subr.bf16.mxu0 0
        %2524 = vmatpush1.bf16.msra.mxu0 0
        %2525 = vmatprep.subr.bf16.mxu0 0
        %2526 = vmatpush1.bf16.msra.mxu0 0
        %2527 = vmatprep.subr.bf16.mxu0 0
        %2528 = vmatpush1.bf16.msra.mxu0 0
        %2529 = vmatprep.subr.bf16.mxu0 0
        %2530 = vmatpush1.bf16.msra.mxu0 0
        %2531 = vmatprep.subr.bf16.mxu0 0
        %2532 = vmatpush1.bf16.msra.mxu0 0
        %2533 = vmatprep.subr.bf16.mxu0 0
        %2534 = vmatpush1.bf16.msra.mxu0 0
        %2535 = vmatprep.subr.bf16.mxu0 0
        %2536 = vmatpush1.bf16.msra.mxu0 0
        %2537 = vmatprep.mubr.bf16.mxu0 0
        %2538 = vmatmul.mubr.bf16.gmra.mrb[0].mxu0 %v2494
        %v2539 = vpop.f32.mrb[0].mxu0
        %v2540 = vadd.f32 0.0, %v2539
        %v2541 = vpop.f32.mrb[0].mxu0
        %v2542 = vpop.f32.mrb[0].mxu0
        %v2543 = vadd.f32 0.0, %v2542
        %v2544 = vpop.f32.mrb[0].mxu0
        %2545 = vmatprep.mubr.bf16.mxu0 0
        %2546 = vmatmul.mubr.bf16.gmra.mrb[0].mxu0 %v2497
        %v2547 = vpop.f32.mrb[0].mxu0
        %v2548 = vadd.f32 0.0, %v2547
        %v2549 = vpop.f32.mrb[0].mxu0
        %v2550 = vpop.f32.mrb[0].mxu0
        %v2551 = vadd.f32 0.0, %v2550
        %v2552 = vpop.f32.mrb[0].mxu0
        %2553 = vmatprep.mubr.bf16.mxu0 0
        %2554 = vmatmul.mubr.bf16.gmra.mrb[0].mxu0 %v2500
        %v2555 = vpop.f32.mrb[0].mxu0
        %v2556 = vadd.f32 0.0, %v2555
        %v2557 = vpop.f32.mrb[0].mxu0
        %v2558 = vpop.f32.mrb[0].mxu0
        %v2559 = vadd.f32 0.0, %v2558
        %v2560 = vpop.f32.mrb[0].mxu0
        %2561 = vmatprep.mubr.bf16.mxu0 0
        %2562 = vmatmul.mubr.bf16.gmra.mrb[0].mxu0 %v2503
        %v2563 = vpop.f32.mrb[0].mxu0
        %v2564 = vadd.f32 0.0, %v2563
        %v2565 = vpop.f32.mrb[0].mxu0
        %v2566 = vpop.f32.mrb[0].mxu0
        %v2567 = vadd.f32 0.0, %v2566
        %v2568 = vpop.f32.mrb[0].mxu0
        %2569 = vdwg.mxu0
        %v2570 = vrcp.pop %v2451
        %v2571 = vrcp.pop %v2454
        %v2572 = vrcp.pop %v2457
        %v2573 = vrcp.pop %v2460
        %v2574 = vrcp.pop %v2463
        %v2575 = vrcp.pop %v2466
        %v2576 = vrcp.pop %v2469
        %v2577 = vrcp.pop %v2472
        %v2578 = vmul.f32 %v2540, %v2570
        %v2579 = vmul.f32 %v2543, %v2571
        %v2580 = vmul.f32 %v2548, %v2572
        %v2581 = vmul.f32 %v2551, %v2573
        %v2582 = vmul.f32 %v2556, %v2574
        %v2583 = vmul.f32 %v2559, %v2575
        %v2584 = vmul.f32 %v2564, %v2576
        %v2585 = vmul.f32 %v2567, %v2577
        %2594 = vrot.lane.b32.xlu0 %v2578, 32
        %v2595 = vpop.permute.xlu0 %2594
        %2596 = vrot.lane.b32.xlu0 %v2579, 32
        %v2597 = vpop.permute.xlu0 %2596
        %2598 = vrot.lane.b32.xlu0 %v2580, 32
        %v2599 = vpop.permute.xlu0 %2598
        %2600 = vrot.lane.b32.xlu0 %v2581, 32
        %v2601 = vpop.permute.xlu0 %2600
        %2602 = vrot.lane.b32.xlu0 %v2582, 32
        %v2603 = vpop.permute.xlu0 %2602
        %2604 = vrot.lane.b32.xlu0 %v2583, 32
        %v2605 = vpop.permute.xlu0 %2604
        %2606 = vrot.lane.b32.xlu0 %v2584, 32
        %v2607 = vpop.permute.xlu0 %2606
        %2608 = vrot.lane.b32.xlu0 %v2585, 32
        %v2609 = vpop.permute.xlu0 %2608
        %2618 = vst.msk [vmem:[#allocation2 + $0x40] sm:$0xff] %vm1359, %v2595
        %2619 = vst.msk [vmem:[#allocation2 + $0x48] sm:$0xff] %vm1359, %v2597
        %2620 = vst.msk [vmem:[#allocation2 + $0x50] sm:$0xff] %vm1359, %v2599
        %2621 = vst.msk [vmem:[#allocation2 + $0x58] sm:$0xff] %vm1359, %v2601
        %2622 = vst.msk [vmem:[#allocation2 + $0x60] sm:$0xff] %vm1359, %v2603
        %2623 = vst.msk [vmem:[#allocation2 + $0x68] sm:$0xff] %vm1359, %v2605
        %2624 = vst.msk [vmem:[#allocation2 + $0x70] sm:$0xff] %vm1359, %v2607
        %2625 = vst.msk [vmem:[#allocation2 + $0x78] sm:$0xff] %vm1359, %v2609
        %2626 = vrot.lane.b32.xlu0 %v701, 64
        %v2627 = vpop.permute.xlu0 %2626
        %2628 = vrot.lane.b32.xlu0 %v702, 64
        %v2629 = vpop.permute.xlu0 %2628
        %2630 = vrot.lane.b32.xlu0 %v703, 64
        %v2631 = vpop.permute.xlu0 %2630
        %2632 = vrot.lane.b32.xlu0 %v704, 64
        %v2633 = vpop.permute.xlu0 %2632
        %2634 = vrot.lane.b32.xlu0 %v729, 64
        %v2635 = vpop.permute.xlu0 %2634
        %2636 = vrot.lane.b32.xlu0 %v730, 64
        %v2637 = vpop.permute.xlu0 %2636
        %2638 = vrot.lane.b32.xlu0 %v731, 64
        %v2639 = vpop.permute.xlu0 %2638
        %2640 = vrot.lane.b32.xlu0 %v732, 64
        %v2641 = vpop.permute.xlu0 %2640
        %v2643 = vsel %vm761, %v2627, 0
        %v2646 = vsel %vm761, %v2629, 0
        %v2649 = vsel %vm761, %v2631, 0
        %v2652 = vsel %vm761, %v2633, 0
        %v2655 = vsel %vm761, %v2635, 0
        %v2658 = vsel %vm761, %v2637, 0
        %v2661 = vsel %vm761, %v2639, 0
        %v2664 = vsel %vm761, %v2641, 0
        %2666 = vmatprep.subr.bf16.mxu0 0
        %2667 = vmatpush1.bf16.xpose.msra.mxu0 %v2655
        %2668 = vmatprep.subr.bf16.mxu0 0
        %2669 = vmatpush1.bf16.xpose.msra.mxu0 %v2658
        %2670 = vmatprep.subr.bf16.mxu0 0
        %2671 = vmatpush1.bf16.xpose.msra.mxu0 %v2661
        %2672 = vmatprep.subr.bf16.mxu0 0
        %2673 = vmatpush1.bf16.xpose.msra.mxu0 %v2664
        %2674 = vmatprep.subr.bf16.mxu0 0
        %2675 = vmatpush1.bf16.xpose.msra.mxu0 0
        %2676 = vmatprep.subr.bf16.mxu0 0
        %2677 = vmatpush1.bf16.xpose.msra.mxu0 0
        %2678 = vmatprep.subr.bf16.mxu0 0
        %2679 = vmatpush1.bf16.xpose.msra.mxu0 0
        %2680 = vmatprep.subr.bf16.mxu0 0
        %2681 = vmatpush1.bf16.xpose.msra.mxu0 0
        %2682 = vmatprep.subr.bf16.mxu0 0
        %2683 = vmatpush1.bf16.xpose.msra.mxu0 0
        %2684 = vmatprep.subr.bf16.mxu0 0
        %2685 = vmatpush1.bf16.xpose.msra.mxu0 0
        %2686 = vmatprep.subr.bf16.mxu0 0
        %2687 = vmatpush1.bf16.xpose.msra.mxu0 0
        %2688 = vmatprep.subr.bf16.mxu0 0
        %2689 = vmatpush1.bf16.xpose.msra.mxu0 0
        %2690 = vmatprep.subr.bf16.mxu0 0
        %2691 = vmatpush1.bf16.xpose.msra.mxu0 0
        %2692 = vmatprep.subr.bf16.mxu0 0
        %2693 = vmatpush1.bf16.xpose.msra.mxu0 0
        %2694 = vmatprep.subr.bf16.mxu0 0
        %2695 = vmatpush1.bf16.xpose.msra.mxu0 0
        %2696 = vmatprep.subr.bf16.mxu0 0
        %2697 = vmatpush1.bf16.xpose.msra.mxu0 0
        %2698 = vmatprep.mubr.bf16.mxu0 0
        %2699 = vmatmul.mubr.bf16.gmra.mrb[0].mxu0 %v2643
        %v2700 = vpop.f32.mrb[0].mxu0
        %v2701 = vadd.f32 0.0, %v2700
        %v2702 = vpop.f32.mrb[0].mxu0
        %v2703 = vpop.f32.mrb[0].mxu0
        %v2704 = vadd.f32 0.0, %v2703
        %v2705 = vpop.f32.mrb[0].mxu0
        %2706 = vmatprep.mubr.bf16.mxu0 0
        %2707 = vmatmul.mubr.bf16.gmra.mrb[0].mxu0 %v2646
        %v2708 = vpop.f32.mrb[0].mxu0
        %v2709 = vadd.f32 0.0, %v2708
        %v2710 = vpop.f32.mrb[0].mxu0
        %v2711 = vpop.f32.mrb[0].mxu0
        %v2712 = vadd.f32 0.0, %v2711
        %v2713 = vpop.f32.mrb[0].mxu0
        %2714 = vmatprep.mubr.bf16.mxu0 0
        %2715 = vmatmul.mubr.bf16.gmra.mrb[0].mxu0 %v2649
        %v2716 = vpop.f32.mrb[0].mxu0
        %v2717 = vadd.f32 0.0, %v2716
        %v2718 = vpop.f32.mrb[0].mxu0
        %v2719 = vpop.f32.mrb[0].mxu0
        %v2720 = vadd.f32 0.0, %v2719
        %v2721 = vpop.f32.mrb[0].mxu0
        %2722 = vmatprep.mubr.bf16.mxu0 0
        %2723 = vmatmul.mubr.bf16.gmra.mrb[0].mxu0 %v2652
        %v2724 = vpop.f32.mrb[0].mxu0
        %v2725 = vadd.f32 0.0, %v2724
        %v2726 = vpop.f32.mrb[0].mxu0
        %v2727 = vpop.f32.mrb[0].mxu0
        %v2728 = vadd.f32 0.0, %v2727
        %v2729 = vpop.f32.mrb[0].mxu0
        %2730 = vdwg.mxu0
        %v2731 = vsel %vm851, %v2701, -inf
        %2732 = vmax.xlane.f32.xlu0 %v2731
        %v2733 = vpop.xlane.xlu0 %2732
        %v2734 = vsel %vm851, %v2704, -inf
        %2735 = vmax.xlane.f32.xlu0 %v2734
        %v2736 = vpop.xlane.xlu0 %2735
        %v2737 = vsel %vm851, %v2709, -inf
        %2738 = vmax.xlane.f32.xlu0 %v2737
        %v2739 = vpop.xlane.xlu0 %2738
        %v2740 = vsel %vm851, %v2712, -inf
        %2741 = vmax.xlane.f32.xlu0 %v2740
        %v2742 = vpop.xlane.xlu0 %2741
        %v2743 = vsel %vm851, %v2717, -inf
        %2744 = vmax.xlane.f32.xlu0 %v2743
        %v2745 = vpop.xlane.xlu0 %2744
        %v2746 = vsel %vm851, %v2720, -inf
        %2747 = vmax.xlane.f32.xlu0 %v2746
        %v2748 = vpop.xlane.xlu0 %2747
        %v2749 = vsel %vm851, %v2725, -inf
        %2750 = vmax.xlane.f32.xlu0 %v2749
        %v2751 = vpop.xlane.xlu0 %2750
        %v2752 = vsel %vm851, %v2728, -inf
        %2753 = vmax.xlane.f32.xlu0 %v2752
        %v2754 = vpop.xlane.xlu0 %2753
        %v2755 = vsub.f32 %v2701, %v2733
        %v2756 = vsub.f32 %v2704, %v2736
        %v2757 = vsub.f32 %v2709, %v2739
        %v2758 = vsub.f32 %v2712, %v2742
        %v2759 = vsub.f32 %v2717, %v2745
        %v2760 = vsub.f32 %v2720, %v2748
        %v2761 = vsub.f32 %v2725, %v2751
        %v2762 = vsub.f32 %v2728, %v2754
        %v2763 = vmul.f32 %v2755, 1.442695
        %v2764 = vpow.pop %v2763
        %v2765 = vmul.f32 %v2756, 1.442695
        %v2766 = vpow.pop %v2765
        %v2767 = vmul.f32 %v2757, 1.442695
        %v2768 = vpow.pop %v2767
        %v2769 = vmul.f32 %v2758, 1.442695
        %v2770 = vpow.pop %v2769
        %v2771 = vmul.f32 %v2759, 1.442695
        %v2772 = vpow.pop %v2771
        %v2773 = vmul.f32 %v2760, 1.442695
        %v2774 = vpow.pop %v2773
        %v2775 = vmul.f32 %v2761, 1.442695
        %v2776 = vpow.pop %v2775
        %v2777 = vmul.f32 %v2762, 1.442695
        %v2778 = vpow.pop %v2777
        %v2779 = vsel %vm851, %v2764, 0.0
        %2780 = vadd.xlane.f32.xlu0 %v2779
        %v2781 = vpop.xlane.xlu0 %2780
        %v2782 = vsel %vm851, %v2766, 0.0
        %2783 = vadd.xlane.f32.xlu0 %v2782
        %v2784 = vpop.xlane.xlu0 %2783
        %v2785 = vsel %vm851, %v2768, 0.0
        %2786 = vadd.xlane.f32.xlu0 %v2785
        %v2787 = vpop.xlane.xlu0 %2786
        %v2788 = vsel %vm851, %v2770, 0.0
        %2789 = vadd.xlane.f32.xlu0 %v2788
        %v2790 = vpop.xlane.xlu0 %2789
        %v2791 = vsel %vm851, %v2772, 0.0
        %2792 = vadd.xlane.f32.xlu0 %v2791
        %v2793 = vpop.xlane.xlu0 %2792
        %v2794 = vsel %vm851, %v2774, 0.0
        %2795 = vadd.xlane.f32.xlu0 %v2794
        %v2796 = vpop.xlane.xlu0 %2795
        %v2797 = vsel %vm851, %v2776, 0.0
        %2798 = vadd.xlane.f32.xlu0 %v2797
        %v2799 = vpop.xlane.xlu0 %2798
        %v2800 = vsel %vm851, %v2778, 0.0
        %2801 = vadd.xlane.f32.xlu0 %v2800
        %v2802 = vpop.xlane.xlu0 %2801
        %v2803 = vpack.c.bf16 %v2766, %v2764
        %v2804 = vpack.c.bf16 %v2770, %v2768
        %v2805 = vpack.c.bf16 %v2774, %v2772
        %v2806 = vpack.c.bf16 %v2778, %v2776
        %2807 = vrot.lane.b32.xlu0 %v757, 64
        %v2808 = vpop.permute.xlu0 %2807
        %2809 = vrot.lane.b32.xlu0 %v758, 64
        %v2810 = vpop.permute.xlu0 %2809
        %2811 = vrot.lane.b32.xlu0 %v759, 64
        %v2812 = vpop.permute.xlu0 %2811
        %2813 = vrot.lane.b32.xlu0 %v760, 64
        %v2814 = vpop.permute.xlu0 %2813
        %v2820 = vsel %vm851, %v2803, 0
        %v2823 = vsel %vm851, %v2804, 0
        %v2826 = vsel %vm851, %v2805, 0
        %v2829 = vsel %vm851, %v2806, 0
        %2831 = vmatprep.subr.bf16.mxu0 0
        %2832 = vmatpush1.bf16.msra.mxu0 %v2808
        %2833 = vmatprep.subr.bf16.mxu0 0
        %2834 = vmatpush1.bf16.msra.mxu0 %v2810
        %2835 = vmatprep.subr.bf16.mxu0 0
        %2836 = vmatpush1.bf16.msra.mxu0 %v2812
        %2837 = vmatprep.subr.bf16.mxu0 0
        %2838 = vmatpush1.bf16.msra.mxu0 %v2814
        %2839 = vmatprep.subr.bf16.mxu0 0
        %2840 = vmatpush1.bf16.msra.mxu0 0
        %2841 = vmatprep.subr.bf16.mxu0 0
        %2842 = vmatpush1.bf16.msra.mxu0 0
        %2843 = vmatprep.subr.bf16.mxu0 0
        %2844 = vmatpush1.bf16.msra.mxu0 0
        %2845 = vmatprep.subr.bf16.mxu0 0
        %2846 = vmatpush1.bf16.msra.mxu0 0
        %2847 = vmatprep.subr.bf16.mxu0 0
        %2848 = vmatpush1.bf16.msra.mxu0 0
        %2849 = vmatprep.subr.bf16.mxu0 0
        %2850 = vmatpush1.bf16.msra.mxu0 0
        %2851 = vmatprep.subr.bf16.mxu0 0
        %2852 = vmatpush1.bf16.msra.mxu0 0
        %2853 = vmatprep.subr.bf16.mxu0 0
        %2854 = vmatpush1.bf16.msra.mxu0 0
        %2855 = vmatprep.subr.bf16.mxu0 0
        %2856 = vmatpush1.bf16.msra.mxu0 0
        %2857 = vmatprep.subr.bf16.mxu0 0
        %2858 = vmatpush1.bf16.msra.mxu0 0
        %2859 = vmatprep.subr.bf16.mxu0 0
        %2860 = vmatpush1.bf16.msra.mxu0 0
        %2861 = vmatprep.subr.bf16.mxu0 0
        %2862 = vmatpush1.bf16.msra.mxu0 0
        %2863 = vmatprep.mubr.bf16.mxu0 0
        %2864 = vmatmul.mubr.bf16.gmra.mrb[0].mxu0 %v2820
        %v2865 = vpop.f32.mrb[0].mxu0
        %v2866 = vadd.f32 0.0, %v2865
        %v2867 = vpop.f32.mrb[0].mxu0
        %v2868 = vpop.f32.mrb[0].mxu0
        %v2869 = vadd.f32 0.0, %v2868
        %v2870 = vpop.f32.mrb[0].mxu0
        %2871 = vmatprep.mubr.bf16.mxu0 0
        %2872 = vmatmul.mubr.bf16.gmra.mrb[0].mxu0 %v2823
        %v2873 = vpop.f32.mrb[0].mxu0
        %v2874 = vadd.f32 0.0, %v2873
        %v2875 = vpop.f32.mrb[0].mxu0
        %v2876 = vpop.f32.mrb[0].mxu0
        %v2877 = vadd.f32 0.0, %v2876
        %v2878 = vpop.f32.mrb[0].mxu0
        %2879 = vmatprep.mubr.bf16.mxu0 0
        %2880 = vmatmul.mubr.bf16.gmra.mrb[0].mxu0 %v2826
        %v2881 = vpop.f32.mrb[0].mxu0
        %v2882 = vadd.f32 0.0, %v2881
        %v2883 = vpop.f32.mrb[0].mxu0
        %v2884 = vpop.f32.mrb[0].mxu0
        %v2885 = vadd.f32 0.0, %v2884
        %v2886 = vpop.f32.mrb[0].mxu0
        %2887 = vmatprep.mubr.bf16.mxu0 0
        %2888 = vmatmul.mubr.bf16.gmra.mrb[0].mxu0 %v2829
        %v2889 = vpop.f32.mrb[0].mxu0
        %v2890 = vadd.f32 0.0, %v2889
        %v2891 = vpop.f32.mrb[0].mxu0
        %v2892 = vpop.f32.mrb[0].mxu0
        %v2893 = vadd.f32 0.0, %v2892
        %v2894 = vpop.f32.mrb[0].mxu0
        %2895 = vdwg.mxu0
        %v2896 = vrcp.pop %v2781
        %v2897 = vrcp.pop %v2784
        %v2898 = vrcp.pop %v2787
        %v2899 = vrcp.pop %v2790
        %v2900 = vrcp.pop %v2793
        %v2901 = vrcp.pop %v2796
        %v2902 = vrcp.pop %v2799
        %v2903 = vrcp.pop %v2802
        %v2904 = vmul.f32 %v2866, %v2896
        %v2905 = vmul.f32 %v2869, %v2897
        %v2906 = vmul.f32 %v2874, %v2898
        %v2907 = vmul.f32 %v2877, %v2899
        %v2908 = vmul.f32 %v2882, %v2900
        %v2909 = vmul.f32 %v2885, %v2901
        %v2910 = vmul.f32 %v2890, %v2902
        %v2911 = vmul.f32 %v2893, %v2903
        %2920 = vrot.lane.b32.xlu0 %v2904, 64
        %v2921 = vpop.permute.xlu0 %2920
        %2922 = vrot.lane.b32.xlu0 %v2905, 64
        %v2923 = vpop.permute.xlu0 %2922
        %2924 = vrot.lane.b32.xlu0 %v2906, 64
        %v2925 = vpop.permute.xlu0 %2924
        %2926 = vrot.lane.b32.xlu0 %v2907, 64
        %v2927 = vpop.permute.xlu0 %2926
        %2928 = vrot.lane.b32.xlu0 %v2908, 64
        %v2929 = vpop.permute.xlu0 %2928
        %2930 = vrot.lane.b32.xlu0 %v2909, 64
        %v2931 = vpop.permute.xlu0 %2930
        %2932 = vrot.lane.b32.xlu0 %v2910, 64
        %v2933 = vpop.permute.xlu0 %2932
        %2934 = vrot.lane.b32.xlu0 %v2911, 64
        %v2935 = vpop.permute.xlu0 %2934
        %2944 = vst.msk [vmem:[#allocation2 + $0x40] sm:$0xff] %vm1686, %v2921
        %2945 = vst.msk [vmem:[#allocation2 + $0x48] sm:$0xff] %vm1686, %v2923
        %2946 = vst.msk [vmem:[#allocation2 + $0x50] sm:$0xff] %vm1686, %v2925
        %2947 = vst.msk [vmem:[#allocation2 + $0x58] sm:$0xff] %vm1686, %v2927
        %2948 = vst.msk [vmem:[#allocation2 + $0x60] sm:$0xff] %vm1686, %v2929
        %2949 = vst.msk [vmem:[#allocation2 + $0x68] sm:$0xff] %vm1686, %v2931
        %2950 = vst.msk [vmem:[#allocation2 + $0x70] sm:$0xff] %vm1686, %v2933
        %2951 = vst.msk [vmem:[#allocation2 + $0x78] sm:$0xff] %vm1686, %v2935
        %2952 = vrot.lane.b32.xlu0 %v701, 32
        %v2953 = vpop.permute.xlu0 %2952
        %2954 = vrot.lane.b32.xlu0 %v702, 32
        %v2955 = vpop.permute.xlu0 %2954
        %2956 = vrot.lane.b32.xlu0 %v703, 32
        %v2957 = vpop.permute.xlu0 %2956
        %2958 = vrot.lane.b32.xlu0 %v704, 32
        %v2959 = vpop.permute.xlu0 %2958
        %2960 = vrot.lane.b32.xlu0 %v729, 32
        %v2961 = vpop.permute.xlu0 %2960
        %2962 = vrot.lane.b32.xlu0 %v730, 32
        %v2963 = vpop.permute.xlu0 %2962
        %2964 = vrot.lane.b32.xlu0 %v731, 32
        %v2965 = vpop.permute.xlu0 %2964
        %2966 = vrot.lane.b32.xlu0 %v732, 32
        %v2967 = vpop.permute.xlu0 %2966
        %v2969 = vsel %vm761, %v2953, 0
        %v2972 = vsel %vm761, %v2955, 0
        %v2975 = vsel %vm761, %v2957, 0
        %v2978 = vsel %vm761, %v2959, 0
        %v2981 = vsel %vm761, %v2961, 0
        %v2984 = vsel %vm761, %v2963, 0
        %v2987 = vsel %vm761, %v2965, 0
        %v2990 = vsel %vm761, %v2967, 0
        %2992 = vmatprep.subr.bf16.mxu0 0
        %2993 = vmatpush1.bf16.xpose.msra.mxu0 %v2981
        %2994 = vmatprep.subr.bf16.mxu0 0
        %2995 = vmatpush1.bf16.xpose.msra.mxu0 %v2984
        %2996 = vmatprep.subr.bf16.mxu0 0
        %2997 = vmatpush1.bf16.xpose.msra.mxu0 %v2987
        %2998 = vmatprep.subr.bf16.mxu0 0
        %2999 = vmatpush1.bf16.xpose.msra.mxu0 %v2990
        %3000 = vmatprep.subr.bf16.mxu0 0
        %3001 = vmatpush1.bf16.xpose.msra.mxu0 0
        %3002 = vmatprep.subr.bf16.mxu0 0
        %3003 = vmatpush1.bf16.xpose.msra.mxu0 0
        %3004 = vmatprep.subr.bf16.mxu0 0
        %3005 = vmatpush1.bf16.xpose.msra.mxu0 0
        %3006 = vmatprep.subr.bf16.mxu0 0
        %3007 = vmatpush1.bf16.xpose.msra.mxu0 0
        %3008 = vmatprep.subr.bf16.mxu0 0
        %3009 = vmatpush1.bf16.xpose.msra.mxu0 0
        %3010 = vmatprep.subr.bf16.mxu0 0
        %3011 = vmatpush1.bf16.xpose.msra.mxu0 0
        %3012 = vmatprep.subr.bf16.mxu0 0
        %3013 = vmatpush1.bf16.xpose.msra.mxu0 0
        %3014 = vmatprep.subr.bf16.mxu0 0
        %3015 = vmatpush1.bf16.xpose.msra.mxu0 0
        %3016 = vmatprep.subr.bf16.mxu0 0
        %3017 = vmatpush1.bf16.xpose.msra.mxu0 0
        %3018 = vmatprep.subr.bf16.mxu0 0
        %3019 = vmatpush1.bf16.xpose.msra.mxu0 0
        %3020 = vmatprep.subr.bf16.mxu0 0
        %3021 = vmatpush1.bf16.xpose.msra.mxu0 0
        %3022 = vmatprep.subr.bf16.mxu0 0
        %3023 = vmatpush1.bf16.xpose.msra.mxu0 0
        %3024 = vmatprep.mubr.bf16.mxu0 0
        %3025 = vmatmul.mubr.bf16.gmra.mrb[0].mxu0 %v2969
        %v3026 = vpop.f32.mrb[0].mxu0
        %v3027 = vadd.f32 0.0, %v3026
        %v3028 = vpop.f32.mrb[0].mxu0
        %v3029 = vpop.f32.mrb[0].mxu0
        %v3030 = vadd.f32 0.0, %v3029
        %v3031 = vpop.f32.mrb[0].mxu0
        %3032 = vmatprep.mubr.bf16.mxu0 0
        %3033 = vmatmul.mubr.bf16.gmra.mrb[0].mxu0 %v2972
        %v3034 = vpop.f32.mrb[0].mxu0
        %v3035 = vadd.f32 0.0, %v3034
        %v3036 = vpop.f32.mrb[0].mxu0
        %v3037 = vpop.f32.mrb[0].mxu0
        %v3038 = vadd.f32 0.0, %v3037
        %v3039 = vpop.f32.mrb[0].mxu0
        %3040 = vmatprep.mubr.bf16.mxu0 0
        %3041 = vmatmul.mubr.bf16.gmra.mrb[0].mxu0 %v2975
        %v3042 = vpop.f32.mrb[0].mxu0
        %v3043 = vadd.f32 0.0, %v3042
        %v3044 = vpop.f32.mrb[0].mxu0
        %v3045 = vpop.f32.mrb[0].mxu0
        %v3046 = vadd.f32 0.0, %v3045
        %v3047 = vpop.f32.mrb[0].mxu0
        %3048 = vmatprep.mubr.bf16.mxu0 0
        %3049 = vmatmul.mubr.bf16.gmra.mrb[0].mxu0 %v2978
        %v3050 = vpop.f32.mrb[0].mxu0
        %v3051 = vadd.f32 0.0, %v3050
        %v3052 = vpop.f32.mrb[0].mxu0
        %v3053 = vpop.f32.mrb[0].mxu0
        %v3054 = vadd.f32 0.0, %v3053
        %v3055 = vpop.f32.mrb[0].mxu0
        %3056 = vdwg.mxu0
        %v3057 = vsel %vm851, %v3027, -inf
        %3058 = vmax.xlane.f32.xlu0 %v3057
        %v3059 = vpop.xlane.xlu0 %3058
        %v3060 = vsel %vm851, %v3030, -inf
        %3061 = vmax.xlane.f32.xlu0 %v3060
        %v3062 = vpop.xlane.xlu0 %3061
        %v3063 = vsel %vm851, %v3035, -inf
        %3064 = vmax.xlane.f32.xlu0 %v3063
        %v3065 = vpop.xlane.xlu0 %3064
        %v3066 = vsel %vm851, %v3038, -inf
        %3067 = vmax.xlane.f32.xlu0 %v3066
        %v3068 = vpop.xlane.xlu0 %3067
        %v3069 = vsel %vm851, %v3043, -inf
        %3070 = vmax.xlane.f32.xlu0 %v3069
        %v3071 = vpop.xlane.xlu0 %3070
        %v3072 = vsel %vm851, %v3046, -inf
        %3073 = vmax.xlane.f32.xlu0 %v3072
        %v3074 = vpop.xlane.xlu0 %3073
        %v3075 = vsel %vm851, %v3051, -inf
        %3076 = vmax.xlane.f32.xlu0 %v3075
        %v3077 = vpop.xlane.xlu0 %3076
        %v3078 = vsel %vm851, %v3054, -inf
        %3079 = vmax.xlane.f32.xlu0 %v3078
        %v3080 = vpop.xlane.xlu0 %3079
        %v3081 = vsub.f32 %v3027, %v3059
        %v3082 = vsub.f32 %v3030, %v3062
        %v3083 = vsub.f32 %v3035, %v3065
        %v3084 = vsub.f32 %v3038, %v3068
        %v3085 = vsub.f32 %v3043, %v3071
        %v3086 = vsub.f32 %v3046, %v3074
        %v3087 = vsub.f32 %v3051, %v3077
        %v3088 = vsub.f32 %v3054, %v3080
        %v3089 = vmul.f32 %v3081, 1.442695
        %v3090 = vpow.pop %v3089
        %v3091 = vmul.f32 %v3082, 1.442695
        %v3092 = vpow.pop %v3091
        %v3093 = vmul.f32 %v3083, 1.442695
        %v3094 = vpow.pop %v3093
        %v3095 = vmul.f32 %v3084, 1.442695
        %v3096 = vpow.pop %v3095
        %v3097 = vmul.f32 %v3085, 1.442695
        %v3098 = vpow.pop %v3097
        %v3099 = vmul.f32 %v3086, 1.442695
        %v3100 = vpow.pop %v3099
        %v3101 = vmul.f32 %v3087, 1.442695
        %v3102 = vpow.pop %v3101
        %v3103 = vmul.f32 %v3088, 1.442695
        %v3104 = vpow.pop %v3103
        %v3105 = vsel %vm851, %v3090, 0.0
        %3106 = vadd.xlane.f32.xlu0 %v3105
        %v3107 = vpop.xlane.xlu0 %3106
        %v3108 = vsel %vm851, %v3092, 0.0
        %3109 = vadd.xlane.f32.xlu0 %v3108
        %v3110 = vpop.xlane.xlu0 %3109
        %v3111 = vsel %vm851, %v3094, 0.0
        %3112 = vadd.xlane.f32.xlu0 %v3111
        %v3113 = vpop.xlane.xlu0 %3112
        %v3114 = vsel %vm851, %v3096, 0.0
        %3115 = vadd.xlane.f32.xlu0 %v3114
        %v3116 = vpop.xlane.xlu0 %3115
        %v3117 = vsel %vm851, %v3098, 0.0
        %3118 = vadd.xlane.f32.xlu0 %v3117
        %v3119 = vpop.xlane.xlu0 %3118
        %v3120 = vsel %vm851, %v3100, 0.0
        %3121 = vadd.xlane.f32.xlu0 %v3120
        %v3122 = vpop.xlane.xlu0 %3121
        %v3123 = vsel %vm851, %v3102, 0.0
        %3124 = vadd.xlane.f32.xlu0 %v3123
        %v3125 = vpop.xlane.xlu0 %3124
        %v3126 = vsel %vm851, %v3104, 0.0
        %3127 = vadd.xlane.f32.xlu0 %v3126
        %v3128 = vpop.xlane.xlu0 %3127
        %v3129 = vpack.c.bf16 %v3092, %v3090
        %v3130 = vpack.c.bf16 %v3096, %v3094
        %v3131 = vpack.c.bf16 %v3100, %v3098
        %v3132 = vpack.c.bf16 %v3104, %v3102
        %3133 = vrot.lane.b32.xlu0 %v757, 32
        %v3134 = vpop.permute.xlu0 %3133
        %3135 = vrot.lane.b32.xlu0 %v758, 32
        %v3136 = vpop.permute.xlu0 %3135
        %3137 = vrot.lane.b32.xlu0 %v759, 32
        %v3138 = vpop.permute.xlu0 %3137
        %3139 = vrot.lane.b32.xlu0 %v760, 32
        %v3140 = vpop.permute.xlu0 %3139
        %v3146 = vsel %vm851, %v3129, 0
        %v3149 = vsel %vm851, %v3130, 0
        %v3152 = vsel %vm851, %v3131, 0
        %v3155 = vsel %vm851, %v3132, 0
        %3157 = vmatprep.subr.bf16.mxu0 0
        %3158 = vmatpush1.bf16.msra.mxu0 %v3134
        %3159 = vmatprep.subr.bf16.mxu0 0
        %3160 = vmatpush1.bf16.msra.mxu0 %v3136
        %3161 = vmatprep.subr.bf16.mxu0 0
        %3162 = vmatpush1.bf16.msra.mxu0 %v3138
        %3163 = vmatprep.subr.bf16.mxu0 0
        %3164 = vmatpush1.bf16.msra.mxu0 %v3140
        %3165 = vmatprep.subr.bf16.mxu0 0
        %3166 = vmatpush1.bf16.msra.mxu0 0
        %3167 = vmatprep.subr.bf16.mxu0 0
        %3168 = vmatpush1.bf16.msra.mxu0 0
        %3169 = vmatprep.subr.bf16.mxu0 0
        %3170 = vmatpush1.bf16.msra.mxu0 0
        %3171 = vmatprep.subr.bf16.mxu0 0
        %3172 = vmatpush1.bf16.msra.mxu0 0
        %3173 = vmatprep.subr.bf16.mxu0 0
        %3174 = vmatpush1.bf16.msra.mxu0 0
        %3175 = vmatprep.subr.bf16.mxu0 0
        %3176 = vmatpush1.bf16.msra.mxu0 0
        %3177 = vmatprep.subr.bf16.mxu0 0
        %3178 = vmatpush1.bf16.msra.mxu0 0
        %3179 = vmatprep.subr.bf16.mxu0 0
        %3180 = vmatpush1.bf16.msra.mxu0 0
        %3181 = vmatprep.subr.bf16.mxu0 0
        %3182 = vmatpush1.bf16.msra.mxu0 0
        %3183 = vmatprep.subr.bf16.mxu0 0
        %3184 = vmatpush1.bf16.msra.mxu0 0
        %3185 = vmatprep.subr.bf16.mxu0 0
        %3186 = vmatpush1.bf16.msra.mxu0 0
        %3187 = vmatprep.subr.bf16.mxu0 0
        %3188 = vmatpush1.bf16.msra.mxu0 0
        %3189 = vmatprep.mubr.bf16.mxu0 0
        %3190 = vmatmul.mubr.bf16.gmra.mrb[0].mxu0 %v3146
        %v3191 = vpop.f32.mrb[0].mxu0
        %v3192 = vadd.f32 0.0, %v3191
        %v3193 = vpop.f32.mrb[0].mxu0
        %v3194 = vpop.f32.mrb[0].mxu0
        %v3195 = vadd.f32 0.0, %v3194
        %v3196 = vpop.f32.mrb[0].mxu0
        %3197 = vmatprep.mubr.bf16.mxu0 0
        %3198 = vmatmul.mubr.bf16.gmra.mrb[0].mxu0 %v3149
        %v3199 = vpop.f32.mrb[0].mxu0
        %v3200 = vadd.f32 0.0, %v3199
        %v3201 = vpop.f32.mrb[0].mxu0
        %v3202 = vpop.f32.mrb[0].mxu0
        %v3203 = vadd.f32 0.0, %v3202
        %v3204 = vpop.f32.mrb[0].mxu0
        %3205 = vmatprep.mubr.bf16.mxu0 0
        %3206 = vmatmul.mubr.bf16.gmra.mrb[0].mxu0 %v3152
        %v3207 = vpop.f32.mrb[0].mxu0
        %v3208 = vadd.f32 0.0, %v3207
        %v3209 = vpop.f32.mrb[0].mxu0
        %v3210 = vpop.f32.mrb[0].mxu0
        %v3211 = vadd.f32 0.0, %v3210
        %v3212 = vpop.f32.mrb[0].mxu0
        %3213 = vmatprep.mubr.bf16.mxu0 0
        %3214 = vmatmul.mubr.bf16.gmra.mrb[0].mxu0 %v3155
        %v3215 = vpop.f32.mrb[0].mxu0
        %v3216 = vadd.f32 0.0, %v3215
        %v3217 = vpop.f32.mrb[0].mxu0
        %v3218 = vpop.f32.mrb[0].mxu0
        %v3219 = vadd.f32 0.0, %v3218
        %v3220 = vpop.f32.mrb[0].mxu0
        %3221 = vdwg.mxu0
        %v3222 = vrcp.pop %v3107
        %v3223 = vrcp.pop %v3110
        %v3224 = vrcp.pop %v3113
        %v3225 = vrcp.pop %v3116
        %v3226 = vrcp.pop %v3119
        %v3227 = vrcp.pop %v3122
        %v3228 = vrcp.pop %v3125
        %v3229 = vrcp.pop %v3128
        %v3230 = vmul.f32 %v3192, %v3222
        %v3231 = vmul.f32 %v3195, %v3223
        %v3232 = vmul.f32 %v3200, %v3224
        %v3233 = vmul.f32 %v3203, %v3225
        %v3234 = vmul.f32 %v3208, %v3226
        %v3235 = vmul.f32 %v3211, %v3227
        %v3236 = vmul.f32 %v3216, %v3228
        %v3237 = vmul.f32 %v3219, %v3229
        %3246 = vrot.lane.b32.xlu0 %v3230, 96
        %v3247 = vpop.permute.xlu0 %3246
        %3248 = vrot.lane.b32.xlu0 %v3231, 96
        %v3249 = vpop.permute.xlu0 %3248
        %3250 = vrot.lane.b32.xlu0 %v3232, 96
        %v3251 = vpop.permute.xlu0 %3250
        %3252 = vrot.lane.b32.xlu0 %v3233, 96
        %v3253 = vpop.permute.xlu0 %3252
        %3254 = vrot.lane.b32.xlu0 %v3234, 96
        %v3255 = vpop.permute.xlu0 %3254
        %3256 = vrot.lane.b32.xlu0 %v3235, 96
        %v3257 = vpop.permute.xlu0 %3256
        %3258 = vrot.lane.b32.xlu0 %v3236, 96
        %v3259 = vpop.permute.xlu0 %3258
        %3260 = vrot.lane.b32.xlu0 %v3237, 96
        %v3261 = vpop.permute.xlu0 %3260
        %3270 = vst.msk [vmem:[#allocation2 + $0x40] sm:$0xff] %vm2013, %v3247
        %3271 = vst.msk [vmem:[#allocation2 + $0x48] sm:$0xff] %vm2013, %v3249
        %3272 = vst.msk [vmem:[#allocation2 + $0x50] sm:$0xff] %vm2013, %v3251
        %3273 = vst.msk [vmem:[#allocation2 + $0x58] sm:$0xff] %vm2013, %v3253
        %3274 = vst.msk [vmem:[#allocation2 + $0x60] sm:$0xff] %vm2013, %v3255
        %3275 = vst.msk [vmem:[#allocation2 + $0x68] sm:$0xff] %vm2013, %v3257
        %3276 = vst.msk [vmem:[#allocation2 + $0x70] sm:$0xff] %vm2013, %v3259
        %3277 = vst.msk [vmem:[#allocation2 + $0x78] sm:$0xff] %vm2013, %v3261
        %v3278 = vld [vmem:[#allocation2] sm:$0xff]
        %v3279 = vld [vmem:[#allocation2 + $0x8] sm:$0xff]
        %v3280 = vld [vmem:[#allocation2 + $0x10] sm:$0xff]
        %v3281 = vld [vmem:[#allocation2 + $0x18] sm:$0xff]
        %v3282 = vld [vmem:[#allocation2 + $0x20] sm:$0xff]
        %v3283 = vld [vmem:[#allocation2 + $0x28] sm:$0xff]
        %v3284 = vld [vmem:[#allocation2 + $0x30] sm:$0xff]
        %v3285 = vld [vmem:[#allocation2 + $0x38] sm:$0xff]
        %v3286 = vld [vmem:[#allocation2 + $0x40] sm:$0xff]
        %v3287 = vld [vmem:[#allocation2 + $0x48] sm:$0xff]
        %v3288 = vld [vmem:[#allocation2 + $0x50] sm:$0xff]
        %v3289 = vld [vmem:[#allocation2 + $0x58] sm:$0xff]
        %v3290 = vld [vmem:[#allocation2 + $0x60] sm:$0xff]
        %v3291 = vld [vmem:[#allocation2 + $0x68] sm:$0xff]
        %v3292 = vld [vmem:[#allocation2 + $0x70] sm:$0xff]
        %v3293 = vld [vmem:[#allocation2 + $0x78] sm:$0xff]
        %v3294 = vpack.c.bf16 %v3279, %v3278
        %v3295 = vpack.c.bf16 %v3281, %v3280
        %v3296 = vpack.c.bf16 %v3283, %v3282
        %v3297 = vpack.c.bf16 %v3285, %v3284
        %v3298 = vpack.c.bf16 %v3287, %v3286
        %v3299 = vpack.c.bf16 %v3289, %v3288
        %v3300 = vpack.c.bf16 %v3291, %v3290
        %v3301 = vpack.c.bf16 %v3293, %v3292
        %v3302 = vld [vmem:[#allocation6 + $0xc] sm:$0xf]
        %v3303 = vld [vmem:[#allocation6 + $0x1c] sm:$0xf]
        %v3304 = vld [vmem:[#allocation6 + $0x2c] sm:$0xf]
        %v3305 = vld [vmem:[#allocation6 + $0x3c] sm:$0xf]
        %v3306 = vld [vmem:[#allocation6 + $0x4c] sm:$0xf]
        %v3307 = vld [vmem:[#allocation6 + $0x5c] sm:$0xf]
        %v3308 = vld [vmem:[#allocation6 + $0x6c] sm:$0xf]
        %v3309 = vld [vmem:[#allocation6 + $0x7c] sm:$0xf]
        %v3310 = vld [vmem:[#allocation6 + $0x8c] sm:$0xf]
        %v3311 = vld [vmem:[#allocation6 + $0x9c] sm:$0xf]
        %v3312 = vld [vmem:[#allocation6 + $0xac] sm:$0xf]
        %v3313 = vld [vmem:[#allocation6 + $0xbc] sm:$0xf]
        %v3314 = vld [vmem:[#allocation6 + $0xcc] sm:$0xf]
        %v3315 = vld [vmem:[#allocation6 + $0xdc] sm:$0xf]
        %v3316 = vld [vmem:[#allocation6 + $0xec] sm:$0xf]
        %v3317 = vld [vmem:[#allocation6 + $0xfc] sm:$0xf]
        %v3318 = vlaneseq
        %v3319 = vshrl.u32 %v3318, 7
        %v3320 = vsub.s32 3, %v3319
        %v3321 = vrot.slane %v238, %v3320
        %v3338 = vunpack.c.l.b16 %v3302
        %v3339 = vunpack.c.l.b16 %v3303
        %v3340 = vunpack.c.l.b16 %v3304
        %v3341 = vunpack.c.l.b16 %v3305
        %v3342 = vunpack.c.l.b16 %v3306
        %v3343 = vunpack.c.l.b16 %v3307
        %v3344 = vunpack.c.l.b16 %v3308
        %v3345 = vunpack.c.l.b16 %v3309
        %v3346 = vunpack.c.l.b16 %v3310
        %v3347 = vunpack.c.l.b16 %v3311
        %v3348 = vunpack.c.l.b16 %v3312
        %v3349 = vunpack.c.l.b16 %v3313
        %v3350 = vunpack.c.l.b16 %v3314
        %v3351 = vunpack.c.l.b16 %v3315
        %v3352 = vunpack.c.l.b16 %v3316
        %v3353 = vunpack.c.l.b16 %v3317
        %v3354 = vpack.c.b16 %v3339, %v3338
        %v3355 = vpack.c.b16 %v3341, %v3340
        %v3356 = vpack.c.b16 %v3343, %v3342
        %v3357 = vpack.c.b16 %v3345, %v3344
        %v3358 = vpack.c.b16 %v3347, %v3346
        %v3359 = vpack.c.b16 %v3349, %v3348
        %v3360 = vpack.c.b16 %v3351, %v3350
        %v3361 = vpack.c.b16 %v3353, %v3352
        %3370 = vmatprep.subr.bf16.mxu0 0
        %3371 = vmatpush1.bf16.msra.mxu0 %v3354
        %3372 = vmatprep.subr.bf16.mxu0 0
        %3373 = vmatpush1.bf16.msra.mxu0 %v3355
        %3374 = vmatprep.subr.bf16.mxu0 0
        %3375 = vmatpush1.bf16.msra.mxu0 %v3356
        %3376 = vmatprep.subr.bf16.mxu0 0
        %3377 = vmatpush1.bf16.msra.mxu0 %v3357
        %3378 = vmatprep.subr.bf16.mxu0 0
        %3379 = vmatpush1.bf16.msra.mxu0 %v3358
        %3380 = vmatprep.subr.bf16.mxu0 0
        %3381 = vmatpush1.bf16.msra.mxu0 %v3359
        %3382 = vmatprep.subr.bf16.mxu0 0
        %3383 = vmatpush1.bf16.msra.mxu0 %v3360
        %3384 = vmatprep.subr.bf16.mxu0 0
        %3385 = vmatpush1.bf16.msra.mxu0 %v3361
        %3386 = vmatprep.subr.bf16.mxu0 0
        %3387 = vmatpush1.bf16.msra.mxu0 0
        %3388 = vmatprep.subr.bf16.mxu0 0
        %3389 = vmatpush1.bf16.msra.mxu0 0
        %3390 = vmatprep.subr.bf16.mxu0 0
        %3391 = vmatpush1.bf16.msra.mxu0 0
        %3392 = vmatprep.subr.bf16.mxu0 0
        %3393 = vmatpush1.bf16.msra.mxu0 0
        %3394 = vmatprep.subr.bf16.mxu0 0
        %3395 = vmatpush1.bf16.msra.mxu0 0
        %3396 = vmatprep.subr.bf16.mxu0 0
        %3397 = vmatpush1.bf16.msra.mxu0 0
        %3398 = vmatprep.subr.bf16.mxu0 0
        %3399 = vmatpush1.bf16.msra.mxu0 0
        %3400 = vmatprep.subr.bf16.mxu0 0
        %3401 = vmatpush1.bf16.msra.mxu0 0
        %3402 = vmatprep.mubr.bf16.mxu0 0
        %3403 = vmatmul.mubr.bf16.gmra.mrb[0].mxu0 %v3294
        %v3404 = vpop.f32.mrb[0].mxu0
        %v3405 = vadd.f32 %v3321, %v3404
        %v3406 = vpop.f32.mrb[0].mxu0
        %v3407 = vpop.f32.mrb[0].mxu0
        %v3408 = vadd.f32 %v3321, %v3407
        %v3409 = vpop.f32.mrb[0].mxu0
        %3410 = vmatprep.mubr.bf16.mxu0 0
        %3411 = vmatmul.mubr.bf16.gmra.mrb[0].mxu0 %v3295
        %v3412 = vpop.f32.mrb[0].mxu0
        %v3413 = vadd.f32 %v3321, %v3412
        %v3414 = vpop.f32.mrb[0].mxu0
        %v3415 = vpop.f32.mrb[0].mxu0
        %v3416 = vadd.f32 %v3321, %v3415
        %v3417 = vpop.f32.mrb[0].mxu0
        %3418 = vmatprep.mubr.bf16.mxu0 0
        %3419 = vmatmul.mubr.bf16.gmra.mrb[0].mxu0 %v3296
        %v3420 = vpop.f32.mrb[0].mxu0
        %v3421 = vadd.f32 %v3321, %v3420
        %v3422 = vpop.f32.mrb[0].mxu0
        %v3423 = vpop.f32.mrb[0].mxu0
        %v3424 = vadd.f32 %v3321, %v3423
        %v3425 = vpop.f32.mrb[0].mxu0
        %3426 = vmatprep.mubr.bf16.mxu0 0
        %3427 = vmatmul.mubr.bf16.gmra.mrb[0].mxu0 %v3297
        %v3428 = vpop.f32.mrb[0].mxu0
        %v3429 = vadd.f32 %v3321, %v3428
        %v3430 = vpop.f32.mrb[0].mxu0
        %v3431 = vpop.f32.mrb[0].mxu0
        %v3432 = vadd.f32 %v3321, %v3431
        %v3433 = vpop.f32.mrb[0].mxu0
        %3434 = vmatprep.mubr.bf16.mxu0 0
        %3435 = vmatmul.mubr.bf16.gmra.mrb[0].mxu0 %v3298
        %v3436 = vpop.f32.mrb[0].mxu0
        %v3437 = vadd.f32 %v3321, %v3436
        %v3438 = vpop.f32.mrb[0].mxu0
        %v3439 = vpop.f32.mrb[0].mxu0
        %v3440 = vadd.f32 %v3321, %v3439
        %v3441 = vpop.f32.mrb[0].mxu0
        %3442 = vmatprep.mubr.bf16.mxu0 0
        %3443 = vmatmul.mubr.bf16.gmra.mrb[0].mxu0 %v3299
        %v3444 = vpop.f32.mrb[0].mxu0
        %v3445 = vadd.f32 %v3321, %v3444
        %v3446 = vpop.f32.mrb[0].mxu0
        %v3447 = vpop.f32.mrb[0].mxu0
        %v3448 = vadd.f32 %v3321, %v3447
        %v3449 = vpop.f32.mrb[0].mxu0
        %3450 = vmatprep.mubr.bf16.mxu0 0
        %3451 = vmatmul.mubr.bf16.gmra.mrb[0].mxu0 %v3300
        %v3452 = vpop.f32.mrb[0].mxu0
        %v3453 = vadd.f32 %v3321, %v3452
        %v3454 = vpop.f32.mrb[0].mxu0
        %v3455 = vpop.f32.mrb[0].mxu0
        %v3456 = vadd.f32 %v3321, %v3455
        %v3457 = vpop.f32.mrb[0].mxu0
        %3458 = vmatprep.mubr.bf16.mxu0 0
        %3459 = vmatmul.mubr.bf16.gmra.mrb[0].mxu0 %v3301
        %v3460 = vpop.f32.mrb[0].mxu0
        %v3461 = vadd.f32 %v3321, %v3460
        %v3462 = vpop.f32.mrb[0].mxu0
        %v3463 = vpop.f32.mrb[0].mxu0
        %v3464 = vadd.f32 %v3321, %v3463
        %v3465 = vpop.f32.mrb[0].mxu0
        %3466 = vdwg.mxu0
        %v3467 = vunpack.c.l.bf16 %v222
        %v3468 = vunpack.c.l.bf16 %v223
        %v3469 = vunpack.c.l.bf16 %v224
        %v3470 = vunpack.c.l.bf16 %v225
        %v3471 = vunpack.c.l.bf16 %v226
        %v3472 = vunpack.c.l.bf16 %v227
        %v3473 = vunpack.c.l.bf16 %v228
        %v3474 = vunpack.c.l.bf16 %v229
        %v3475 = vunpack.c.l.bf16 %v230
        %v3476 = vunpack.c.l.bf16 %v231
        %v3477 = vunpack.c.l.bf16 %v232
        %v3478 = vunpack.c.l.bf16 %v233
        %v3479 = vunpack.c.l.bf16 %v234
        %v3480 = vunpack.c.l.bf16 %v235
        %v3481 = vunpack.c.l.bf16 %v236
        %v3482 = vunpack.c.l.bf16 %v237
        %v3483 = vadd.f32 %v3405, %v3467
        %v3484 = vadd.f32 %v3408, %v3468
        %v3485 = vadd.f32 %v3413, %v3469
        %v3486 = vadd.f32 %v3416, %v3470
        %v3487 = vadd.f32 %v3421, %v3471
        %v3488 = vadd.f32 %v3424, %v3472
        %v3489 = vadd.f32 %v3429, %v3473
        %v3490 = vadd.f32 %v3432, %v3474
        %v3491 = vadd.f32 %v3437, %v3475
        %v3492 = vadd.f32 %v3440, %v3476
        %v3493 = vadd.f32 %v3445, %v3477
        %v3494 = vadd.f32 %v3448, %v3478
        %v3495 = vadd.f32 %v3453, %v3479
        %v3496 = vadd.f32 %v3456, %v3480
        %v3497 = vadd.f32 %v3461, %v3481
        %v3498 = vadd.f32 %v3464, %v3482
        %v3499 = vadd.f32 %v3483, %v3484
        %v3500 = vadd.f32 %v3499, %v3485
        %v3501 = vadd.f32 %v3500, %v3486
        %v3502 = vadd.f32 %v3501, %v3487
        %v3503 = vadd.f32 %v3502, %v3488
        %v3504 = vadd.f32 %v3503, %v3489
        %v3505 = vadd.f32 %v3504, %v3490
        %v3506 = vrot.slane %v3505, 4
        %v3507 = vadd.f32 %v3505, %v3506
        %v3508 = vrot.slane %v3507, 2
        %v3509 = vadd.f32 %v3507, %v3508
        %v3510 = vrot.slane %v3509, 1
        %v3511 = vadd.f32 %v3509, %v3510
        %3512 = vmatprep.subr.mxu0 0.0
        %3513 = vmatpush1.xpose.msra.mxu0 %v239
        %3514 = vmatprep.subr.mxu0 0.0
        %3515 = vmatpush1.xpose.msra.mxu0 %v240
        %3516 = vmatprep.subr.mxu0 0.0
        %3517 = vmatpush1.xpose.msra.mxu0 %v241
        %3518 = vmatprep.subr.mxu0 0.0
        %3519 = vmatpush1.xpose.msra.mxu0 %v242
        %3520 = vmatprep.subr.mxu0 0.0
        %3521 = vmatpush1.xpose.msra.mxu0 0.0
        %3522 = vmatprep.subr.mxu0 0.0
        %3523 = vmatpush1.xpose.msra.mxu0 0.0
        %3524 = vmatprep.subr.mxu0 0.0
        %3525 = vmatpush1.xpose.msra.mxu0 0.0
        %3526 = vmatprep.subr.mxu0 0.0
        %3527 = vmatpush1.xpose.msra.mxu0 0.0
        %3528 = vmatprep.subr.mxu0 0.0
        %3529 = vmatpush1.xpose.msra.mxu0 0.0
        %3530 = vmatprep.subr.mxu0 0.0
        %3531 = vmatpush1.xpose.msra.mxu0 0.0
        %3532 = vmatprep.subr.mxu0 0.0
        %3533 = vmatpush1.xpose.msra.mxu0 0.0
        %3534 = vmatprep.subr.mxu0 0.0
        %3535 = vmatpush1.xpose.msra.mxu0 0.0
        %3536 = vmatprep.subr.mxu0 0.0
        %3537 = vmatpush1.xpose.msra.mxu0 0.0
        %3538 = vmatprep.subr.mxu0 0.0
        %3539 = vmatpush1.xpose.msra.mxu0 0.0
        %3540 = vmatprep.subr.mxu0 0.0
        %3541 = vmatpush1.xpose.msra.mxu0 0.0
        %3542 = vmatprep.subr.mxu0 0.0
        %3543 = vmatpush1.xpose.msra.mxu0 0.0
        %3544 = vmatprep.subr.mxu0 0.0
        %3545 = vmatpush1.xpose.msra.mxu0 0.0
        %3546 = vmatprep.subr.mxu0 0.0
        %3547 = vmatpush1.xpose.msra.mxu0 0.0
        %3548 = vmatprep.subr.mxu0 0.0
        %3549 = vmatpush1.xpose.msra.mxu0 0.0
        %3550 = vmatprep.subr.mxu0 0.0
        %3551 = vmatpush1.xpose.msra.mxu0 0.0
        %3552 = vmatprep.subr.mxu0 0.0
        %3553 = vmatpush1.xpose.msra.mxu0 0.0
        %3554 = vmatprep.subr.mxu0 0.0
        %3555 = vmatpush1.xpose.msra.mxu0 0.0
        %3556 = vmatprep.subr.mxu0 0.0
        %3557 = vmatpush1.xpose.msra.mxu0 0.0
        %3558 = vmatprep.subr.mxu0 0.0
        %3559 = vmatpush1.xpose.msra.mxu0 0.0
        %3560 = vmatprep.subr.mxu0 0.0
        %3561 = vmatpush1.xpose.msra.mxu0 0.0
        %3562 = vmatprep.subr.mxu0 0.0
        %3563 = vmatpush1.xpose.msra.mxu0 0.0
        %3564 = vmatprep.subr.mxu0 0.0
        %3565 = vmatpush1.xpose.msra.mxu0 0.0
        %3566 = vmatprep.subr.mxu0 0.0
        %3567 = vmatpush1.xpose.msra.mxu0 0.0
        %3568 = vmatprep.subr.mxu0 0.0
        %3569 = vmatpush1.xpose.msra.mxu0 0.0
        %3570 = vmatprep.subr.mxu0 0.0
        %3571 = vmatpush1.xpose.msra.mxu0 0.0
        %3572 = vmatprep.subr.mxu0 0.0
        %3573 = vmatpush1.xpose.msra.mxu0 0.0
        %3574 = vmatprep.subr.mxu0 0.0
        %3575 = vmatpush1.xpose.msra.mxu0 0.0
        %3576 = vmatprep.mubr.f32.mxu0 0.0
        %3577 = vmatmul.mubr.f32.gmra.mrb[0].mxu0 %v3511
        %v3578 = vpop.f32.mrb[0].mxu0
        %v3579 = vadd.f32 0.0, %v3578
        %v3580 = vpop.f32.mrb[0].mxu0
        %3581 = vdwg.mxu0
        %v3582 = vrcp.pop 256.0
        %v3583 = vmul.f32 %v3579, %v3582
        %v3585 = vsel %vm761, %v3583, 0
        %3587 = vmatprep.subr.mxu0 0.0
        %3588 = vmatpush1.msra.mxu0 %v239
        %3589 = vmatprep.subr.mxu0 0.0
        %3590 = vmatpush1.msra.mxu0 %v240
        %3591 = vmatprep.subr.mxu0 0.0
        %3592 = vmatpush1.msra.mxu0 %v241
        %3593 = vmatprep.subr.mxu0 0.0
        %3594 = vmatpush1.msra.mxu0 %v242
        %3595 = vmatprep.subr.mxu0 0.0
        %3596 = vmatpush1.msra.mxu0 0.0
        %3597 = vmatprep.subr.mxu0 0.0
        %3598 = vmatpush1.msra.mxu0 0.0
        %3599 = vmatprep.subr.mxu0 0.0
        %3600 = vmatpush1.msra.mxu0 0.0
        %3601 = vmatprep.subr.mxu0 0.0
        %3602 = vmatpush1.msra.mxu0 0.0
        %3603 = vmatprep.subr.mxu0 0.0
        %3604 = vmatpush1.msra.mxu0 0.0
        %3605 = vmatprep.subr.mxu0 0.0
        %3606 = vmatpush1.msra.mxu0 0.0
        %3607 = vmatprep.subr.mxu0 0.0
        %3608 = vmatpush1.msra.mxu0 0.0
        %3609 = vmatprep.subr.mxu0 0.0
        %3610 = vmatpush1.msra.mxu0 0.0
        %3611 = vmatprep.subr.mxu0 0.0
        %3612 = vmatpush1.msra.mxu0 0.0
        %3613 = vmatprep.subr.mxu0 0.0
        %3614 = vmatpush1.msra.mxu0 0.0
        %3615 = vmatprep.subr.mxu0 0.0
        %3616 = vmatpush1.msra.mxu0 0.0
        %3617 = vmatprep.subr.mxu0 0.0
        %3618 = vmatpush1.msra.mxu0 0.0
        %3619 = vmatprep.subr.mxu0 0.0
        %3620 = vmatpush1.msra.mxu0 0.0
        %3621 = vmatprep.subr.mxu0 0.0
        %3622 = vmatpush1.msra.mxu0 0.0
        %3623 = vmatprep.subr.mxu0 0.0
        %3624 = vmatpush1.msra.mxu0 0.0
        %3625 = vmatprep.subr.mxu0 0.0
        %3626 = vmatpush1.msra.mxu0 0.0
        %3627 = vmatprep.subr.mxu0 0.0
        %3628 = vmatpush1.msra.mxu0 0.0
        %3629 = vmatprep.subr.mxu0 0.0
        %3630 = vmatpush1.msra.mxu0 0.0
        %3631 = vmatprep.subr.mxu0 0.0
        %3632 = vmatpush1.msra.mxu0 0.0
        %3633 = vmatprep.subr.mxu0 0.0
        %3634 = vmatpush1.msra.mxu0 0.0
        %3635 = vmatprep.subr.mxu0 0.0
        %3636 = vmatpush1.msra.mxu0 0.0
        %3637 = vmatprep.subr.mxu0 0.0
        %3638 = vmatpush1.msra.mxu0 0.0
        %3639 = vmatprep.subr.mxu0 0.0
        %3640 = vmatpush1.msra.mxu0 0.0
        %3641 = vmatprep.subr.mxu0 0.0
        %3642 = vmatpush1.msra.mxu0 0.0
        %3643 = vmatprep.subr.mxu0 0.0
        %3644 = vmatpush1.msra.mxu0 0.0
        %3645 = vmatprep.subr.mxu0 0.0
        %3646 = vmatpush1.msra.mxu0 0.0
        %3647 = vmatprep.subr.mxu0 0.0
        %3648 = vmatpush1.msra.mxu0 0.0
        %3649 = vmatprep.subr.mxu0 0.0
        %3650 = vmatpush1.msra.mxu0 0.0
        %3651 = vmatprep.mubr.f32.mxu0 0.0
        %3652 = vmatmul.mubr.f32.gmra.mrb[0].mxu0 %v3585
        %v3653 = vpop.f32.mrb[0].mxu0
        %v3654 = vadd.f32 0.0, %v3653
        %v3655 = vpop.f32.mrb[0].mxu0
        %3656 = vdwg.mxu0
        %v3657 = vlaneseq
        %v3658 = vshrl.u32 %v3657, 7
        %v3659 = vsub.s32 0, %v3658
        %v3660 = vrot.slane %v3654, %v3659
        %v3661 = vsub.f32 %v3483, %v3660
        %v3662 = vsub.f32 %v3484, %v3660
        %v3663 = vsub.f32 %v3485, %v3660
        %v3664 = vsub.f32 %v3486, %v3660
        %v3665 = vsub.f32 %v3487, %v3660
        %v3666 = vsub.f32 %v3488, %v3660
        %v3667 = vsub.f32 %v3489, %v3660
        %v3668 = vsub.f32 %v3490, %v3660
        %v3669 = vmul.f32 %v3661, %v3661
        %v3670 = vmul.f32 %v3662, %v3662
        %v3671 = vmul.f32 %v3663, %v3663
        %v3672 = vmul.f32 %v3664, %v3664
        %v3673 = vmul.f32 %v3665, %v3665
        %v3674 = vmul.f32 %v3666, %v3666
        %v3675 = vmul.f32 %v3667, %v3667
        %v3676 = vmul.f32 %v3668, %v3668
        %v3677 = vadd.f32 %v3669, %v3670
        %v3678 = vadd.f32 %v3677, %v3671
        %v3679 = vadd.f32 %v3678, %v3672
        %v3680 = vadd.f32 %v3679, %v3673
        %v3681 = vadd.f32 %v3680, %v3674
        %v3682 = vadd.f32 %v3681, %v3675
        %v3683 = vadd.f32 %v3682, %v3676
        %v3684 = vrot.slane %v3683, 4
        %v3685 = vadd.f32 %v3683, %v3684
        %v3686 = vrot.slane %v3685, 2
        %v3687 = vadd.f32 %v3685, %v3686
        %v3688 = vrot.slane %v3687, 1
        %v3689 = vadd.f32 %v3687, %v3688
        %3690 = vmatprep.subr.mxu0 0.0
        %3691 = vmatpush1.xpose.msra.mxu0 %v239
        %3692 = vmatprep.subr.mxu0 0.0
        %3693 = vmatpush1.xpose.msra.mxu0 %v240
        %3694 = vmatprep.subr.mxu0 0.0
        %3695 = vmatpush1.xpose.msra.mxu0 %v241
        %3696 = vmatprep.subr.mxu0 0.0
        %3697 = vmatpush1.xpose.msra.mxu0 %v242
        %3698 = vmatprep.subr.mxu0 0.0
        %3699 = vmatpush1.xpose.msra.mxu0 0.0
        %3700 = vmatprep.subr.mxu0 0.0
        %3701 = vmatpush1.xpose.msra.mxu0 0.0
        %3702 = vmatprep.subr.mxu0 0.0
        %3703 = vmatpush1.xpose.msra.mxu0 0.0
        %3704 = vmatprep.subr.mxu0 0.0
        %3705 = vmatpush1.xpose.msra.mxu0 0.0
        %3706 = vmatprep.subr.mxu0 0.0
        %3707 = vmatpush1.xpose.msra.mxu0 0.0
        %3708 = vmatprep.subr.mxu0 0.0
        %3709 = vmatpush1.xpose.msra.mxu0 0.0
        %3710 = vmatprep.subr.mxu0 0.0
        %3711 = vmatpush1.xpose.msra.mxu0 0.0
        %3712 = vmatprep.subr.mxu0 0.0
        %3713 = vmatpush1.xpose.msra.mxu0 0.0
        %3714 = vmatprep.subr.mxu0 0.0
        %3715 = vmatpush1.xpose.msra.mxu0 0.0
        %3716 = vmatprep.subr.mxu0 0.0
        %3717 = vmatpush1.xpose.msra.mxu0 0.0
        %3718 = vmatprep.subr.mxu0 0.0
        %3719 = vmatpush1.xpose.msra.mxu0 0.0
        %3720 = vmatprep.subr.mxu0 0.0
        %3721 = vmatpush1.xpose.msra.mxu0 0.0
        %3722 = vmatprep.subr.mxu0 0.0
        %3723 = vmatpush1.xpose.msra.mxu0 0.0
        %3724 = vmatprep.subr.mxu0 0.0
        %3725 = vmatpush1.xpose.msra.mxu0 0.0
        %3726 = vmatprep.subr.mxu0 0.0
        %3727 = vmatpush1.xpose.msra.mxu0 0.0
        %3728 = vmatprep.subr.mxu0 0.0
        %3729 = vmatpush1.xpose.msra.mxu0 0.0
        %3730 = vmatprep.subr.mxu0 0.0
        %3731 = vmatpush1.xpose.msra.mxu0 0.0
        %3732 = vmatprep.subr.mxu0 0.0
        %3733 = vmatpush1.xpose.msra.mxu0 0.0
        %3734 = vmatprep.subr.mxu0 0.0
        %3735 = vmatpush1.xpose.msra.mxu0 0.0
        %3736 = vmatprep.subr.mxu0 0.0
        %3737 = vmatpush1.xpose.msra.mxu0 0.0
        %3738 = vmatprep.subr.mxu0 0.0
        %3739 = vmatpush1.xpose.msra.mxu0 0.0
        %3740 = vmatprep.subr.mxu0 0.0
        %3741 = vmatpush1.xpose.msra.mxu0 0.0
        %3742 = vmatprep.subr.mxu0 0.0
        %3743 = vmatpush1.xpose.msra.mxu0 0.0
        %3744 = vmatprep.subr.mxu0 0.0
        %3745 = vmatpush1.xpose.msra.mxu0 0.0
        %3746 = vmatprep.subr.mxu0 0.0
        %3747 = vmatpush1.xpose.msra.mxu0 0.0
        %3748 = vmatprep.subr.mxu0 0.0
        %3749 = vmatpush1.xpose.msra.mxu0 0.0
        %3750 = vmatprep.subr.mxu0 0.0
        %3751 = vmatpush1.xpose.msra.mxu0 0.0
        %3752 = vmatprep.subr.mxu0 0.0
        %3753 = vmatpush1.xpose.msra.mxu0 0.0
        %3754 = vmatprep.mubr.f32.mxu0 0.0
        %3755 = vmatmul.mubr.f32.gmra.mrb[0].mxu0 %v3689
        %v3756 = vpop.f32.mrb[0].mxu0
        %v3757 = vadd.f32 0.0, %v3756
        %v3758 = vpop.f32.mrb[0].mxu0
        %3759 = vdwg.mxu0
        %v3760 = vmul.f32 %v3757, %v3582
        %v3761 = vadd.f32 %v3760, 1e-05
        %v3762 = vrsqrt.pop %v3761
        %v3764 = vsel %vm761, %v3762, 0
        %3766 = vmatprep.subr.mxu0 0.0
        %3767 = vmatpush1.msra.mxu0 %v239
        %3768 = vmatprep.subr.mxu0 0.0
        %3769 = vmatpush1.msra.mxu0 %v240
        %3770 = vmatprep.subr.mxu0 0.0
        %3771 = vmatpush1.msra.mxu0 %v241
        %3772 = vmatprep.subr.mxu0 0.0
        %3773 = vmatpush1.msra.mxu0 %v242
        %3774 = vmatprep.subr.mxu0 0.0
        %3775 = vmatpush1.msra.mxu0 0.0
        %3776 = vmatprep.subr.mxu0 0.0
        %3777 = vmatpush1.msra.mxu0 0.0
        %3778 = vmatprep.subr.mxu0 0.0
        %3779 = vmatpush1.msra.mxu0 0.0
        %3780 = vmatprep.subr.mxu0 0.0
        %3781 = vmatpush1.msra.mxu0 0.0
        %3782 = vmatprep.subr.mxu0 0.0
        %3783 = vmatpush1.msra.mxu0 0.0
        %3784 = vmatprep.subr.mxu0 0.0
        %3785 = vmatpush1.msra.mxu0 0.0
        %3786 = vmatprep.subr.mxu0 0.0
        %3787 = vmatpush1.msra.mxu0 0.0
        %3788 = vmatprep.subr.mxu0 0.0
        %3789 = vmatpush1.msra.mxu0 0.0
        %3790 = vmatprep.subr.mxu0 0.0
        %3791 = vmatpush1.msra.mxu0 0.0
        %3792 = vmatprep.subr.mxu0 0.0
        %3793 = vmatpush1.msra.mxu0 0.0
        %3794 = vmatprep.subr.mxu0 0.0
        %3795 = vmatpush1.msra.mxu0 0.0
        %3796 = vmatprep.subr.mxu0 0.0
        %3797 = vmatpush1.msra.mxu0 0.0
        %3798 = vmatprep.subr.mxu0 0.0
        %3799 = vmatpush1.msra.mxu0 0.0
        %3800 = vmatprep.subr.mxu0 0.0
        %3801 = vmatpush1.msra.mxu0 0.0
        %3802 = vmatprep.subr.mxu0 0.0
        %3803 = vmatpush1.msra.mxu0 0.0
        %3804 = vmatprep.subr.mxu0 0.0
        %3805 = vmatpush1.msra.mxu0 0.0
        %3806 = vmatprep.subr.mxu0 0.0
        %3807 = vmatpush1.msra.mxu0 0.0
        %3808 = vmatprep.subr.mxu0 0.0
        %3809 = vmatpush1.msra.mxu0 0.0
        %3810 = vmatprep.subr.mxu0 0.0
        %3811 = vmatpush1.msra.mxu0 0.0
        %3812 = vmatprep.subr.mxu0 0.0
        %3813 = vmatpush1.msra.mxu0 0.0
        %3814 = vmatprep.subr.mxu0 0.0
        %3815 = vmatpush1.msra.mxu0 0.0
        %3816 = vmatprep.subr.mxu0 0.0
        %3817 = vmatpush1.msra.mxu0 0.0
        %3818 = vmatprep.subr.mxu0 0.0
        %3819 = vmatpush1.msra.mxu0 0.0
        %3820 = vmatprep.subr.mxu0 0.0
        %3821 = vmatpush1.msra.mxu0 0.0
        %3822 = vmatprep.subr.mxu0 0.0
        %3823 = vmatpush1.msra.mxu0 0.0
        %3824 = vmatprep.subr.mxu0 0.0
        %3825 = vmatpush1.msra.mxu0 0.0
        %3826 = vmatprep.subr.mxu0 0.0
        %3827 = vmatpush1.msra.mxu0 0.0
        %3828 = vmatprep.subr.mxu0 0.0
        %3829 = vmatpush1.msra.mxu0 0.0
        %3830 = vmatprep.mubr.f32.mxu0 0.0
        %3831 = vmatmul.mubr.f32.gmra.mrb[0].mxu0 %v3764
        %v3832 = vpop.f32.mrb[0].mxu0
        %v3833 = vadd.f32 0.0, %v3832
        %v3834 = vpop.f32.mrb[0].mxu0
        %3835 = vdwg.mxu0
        %v3837 = vrot.slane %v238, 4
        %v3839 = vmul.f32 %v3833, %v3837
        %v3840 = vlaneseq
        %v3841 = vshrl.u32 %v3840, 7
        %v3842 = vsub.s32 0, %v3841
        %v3843 = vrot.slane %v3839, %v3842
        %v3844 = vmul.f32 %v3661, %v3843
        %v3845 = vmul.f32 %v3662, %v3843
        %v3846 = vmul.f32 %v3663, %v3843
        %v3847 = vmul.f32 %v3664, %v3843
        %v3848 = vmul.f32 %v3665, %v3843
        %v3849 = vmul.f32 %v3666, %v3843
        %v3850 = vmul.f32 %v3667, %v3843
        %v3851 = vmul.f32 %v3668, %v3843
        %v3852 = vlaneseq
        %v3853 = vshrl.u32 %v3852, 7
        %v3854 = vsub.s32 5, %v3853
        %v3855 = vrot.slane %v238, %v3854
        %v3856 = vadd.f32 %v3844, %v3855
        %v3857 = vadd.f32 %v3845, %v3855
        %v3858 = vadd.f32 %v3846, %v3855
        %v3859 = vadd.f32 %v3847, %v3855
        %v3860 = vadd.f32 %v3848, %v3855
        %v3861 = vadd.f32 %v3849, %v3855
        %v3862 = vadd.f32 %v3850, %v3855
        %v3863 = vadd.f32 %v3851, %v3855
        %3864 = vst [vmem:[%s218] sm:$0xff] %v3856
        %3865 = vst [vmem:[%s218 + $0x8] sm:$0xff] %v3857
        %3866 = vst [vmem:[%s218 + $0x10] sm:$0xff] %v3858
        %3867 = vst [vmem:[%s218 + $0x18] sm:$0xff] %v3859
        %3868 = vst [vmem:[%s218 + $0x20] sm:$0xff] %v3860
        %3869 = vst [vmem:[%s218 + $0x28] sm:$0xff] %v3861
        %3870 = vst [vmem:[%s218 + $0x30] sm:$0xff] %v3862
        %3871 = vst [vmem:[%s218 + $0x38] sm:$0xff] %v3863
        %v3872 = vadd.f32 %v3491, %v3492
        %v3873 = vadd.f32 %v3872, %v3493
        %v3874 = vadd.f32 %v3873, %v3494
        %v3875 = vadd.f32 %v3874, %v3495
        %v3876 = vadd.f32 %v3875, %v3496
        %v3877 = vadd.f32 %v3876, %v3497
        %v3878 = vadd.f32 %v3877, %v3498
        %v3879 = vrot.slane %v3878, 4
        %v3880 = vadd.f32 %v3878, %v3879
        %v3881 = vrot.slane %v3880, 2
        %v3882 = vadd.f32 %v3880, %v3881
        %v3883 = vrot.slane %v3882, 1
        %v3884 = vadd.f32 %v3882, %v3883
        %3885 = vmatprep.subr.mxu0 0.0
        %3886 = vmatpush1.xpose.msra.mxu0 %v239
        %3887 = vmatprep.subr.mxu0 0.0
        %3888 = vmatpush1.xpose.msra.mxu0 %v240
        %3889 = vmatprep.subr.mxu0 0.0
        %3890 = vmatpush1.xpose.msra.mxu0 %v241
        %3891 = vmatprep.subr.mxu0 0.0
        %3892 = vmatpush1.xpose.msra.mxu0 %v242
        %3893 = vmatprep.subr.mxu0 0.0
        %3894 = vmatpush1.xpose.msra.mxu0 0.0
        %3895 = vmatprep.subr.mxu0 0.0
        %3896 = vmatpush1.xpose.msra.mxu0 0.0
        %3897 = vmatprep.subr.mxu0 0.0
        %3898 = vmatpush1.xpose.msra.mxu0 0.0
        %3899 = vmatprep.subr.mxu0 0.0
        %3900 = vmatpush1.xpose.msra.mxu0 0.0
        %3901 = vmatprep.subr.mxu0 0.0
        %3902 = vmatpush1.xpose.msra.mxu0 0.0
        %3903 = vmatprep.subr.mxu0 0.0
        %3904 = vmatpush1.xpose.msra.mxu0 0.0
        %3905 = vmatprep.subr.mxu0 0.0
        %3906 = vmatpush1.xpose.msra.mxu0 0.0
        %3907 = vmatprep.subr.mxu0 0.0
        %3908 = vmatpush1.xpose.msra.mxu0 0.0
        %3909 = vmatprep.subr.mxu0 0.0
        %3910 = vmatpush1.xpose.msra.mxu0 0.0
        %3911 = vmatprep.subr.mxu0 0.0
        %3912 = vmatpush1.xpose.msra.mxu0 0.0
        %3913 = vmatprep.subr.mxu0 0.0
        %3914 = vmatpush1.xpose.msra.mxu0 0.0
        %3915 = vmatprep.subr.mxu0 0.0
        %3916 = vmatpush1.xpose.msra.mxu0 0.0
        %3917 = vmatprep.subr.mxu0 0.0
        %3918 = vmatpush1.xpose.msra.mxu0 0.0
        %3919 = vmatprep.subr.mxu0 0.0
        %3920 = vmatpush1.xpose.msra.mxu0 0.0
        %3921 = vmatprep.subr.mxu0 0.0
        %3922 = vmatpush1.xpose.msra.mxu0 0.0
        %3923 = vmatprep.subr.mxu0 0.0
        %3924 = vmatpush1.xpose.msra.mxu0 0.0
        %3925 = vmatprep.subr.mxu0 0.0
        %3926 = vmatpush1.xpose.msra.mxu0 0.0
        %3927 = vmatprep.subr.mxu0 0.0
        %3928 = vmatpush1.xpose.msra.mxu0 0.0
        %3929 = vmatprep.subr.mxu0 0.0
        %3930 = vmatpush1.xpose.msra.mxu0 0.0
        %3931 = vmatprep.subr.mxu0 0.0
        %3932 = vmatpush1.xpose.msra.mxu0 0.0
        %3933 = vmatprep.subr.mxu0 0.0
        %3934 = vmatpush1.xpose.msra.mxu0 0.0
        %3935 = vmatprep.subr.mxu0 0.0
        %3936 = vmatpush1.xpose.msra.mxu0 0.0
        %3937 = vmatprep.subr.mxu0 0.0
        %3938 = vmatpush1.xpose.msra.mxu0 0.0
        %3939 = vmatprep.subr.mxu0 0.0
        %3940 = vmatpush1.xpose.msra.mxu0 0.0
        %3941 = vmatprep.subr.mxu0 0.0
        %3942 = vmatpush1.xpose.msra.mxu0 0.0
        %3943 = vmatprep.subr.mxu0 0.0
        %3944 = vmatpush1.xpose.msra.mxu0 0.0
        %3945 = vmatprep.subr.mxu0 0.0
        %3946 = vmatpush1.xpose.msra.mxu0 0.0
        %3947 = vmatprep.subr.mxu0 0.0
        %3948 = vmatpush1.xpose.msra.mxu0 0.0
        %3949 = vmatprep.mubr.f32.mxu0 0.0
        %3950 = vmatmul.mubr.f32.gmra.mrb[0].mxu0 %v3884
        %v3951 = vpop.f32.mrb[0].mxu0
        %v3952 = vadd.f32 0.0, %v3951
        %v3953 = vpop.f32.mrb[0].mxu0
        %3954 = vdwg.mxu0
        %v3955 = vmul.f32 %v3952, %v3582
        %v3957 = vsel %vm761, %v3955, 0
        %3959 = vmatprep.subr.mxu0 0.0
        %3960 = vmatpush1.msra.mxu0 %v239
        %3961 = vmatprep.subr.mxu0 0.0
        %3962 = vmatpush1.msra.mxu0 %v240
        %3963 = vmatprep.subr.mxu0 0.0
        %3964 = vmatpush1.msra.mxu0 %v241
        %3965 = vmatprep.subr.mxu0 0.0
        %3966 = vmatpush1.msra.mxu0 %v242
        %3967 = vmatprep.subr.mxu0 0.0
        %3968 = vmatpush1.msra.mxu0 0.0
        %3969 = vmatprep.subr.mxu0 0.0
        %3970 = vmatpush1.msra.mxu0 0.0
        %3971 = vmatprep.subr.mxu0 0.0
        %3972 = vmatpush1.msra.mxu0 0.0
        %3973 = vmatprep.subr.mxu0 0.0
        %3974 = vmatpush1.msra.mxu0 0.0
        %3975 = vmatprep.subr.mxu0 0.0
        %3976 = vmatpush1.msra.mxu0 0.0
        %3977 = vmatprep.subr.mxu0 0.0
        %3978 = vmatpush1.msra.mxu0 0.0
        %3979 = vmatprep.subr.mxu0 0.0
        %3980 = vmatpush1.msra.mxu0 0.0
        %3981 = vmatprep.subr.mxu0 0.0
        %3982 = vmatpush1.msra.mxu0 0.0
        %3983 = vmatprep.subr.mxu0 0.0
        %3984 = vmatpush1.msra.mxu0 0.0
        %3985 = vmatprep.subr.mxu0 0.0
        %3986 = vmatpush1.msra.mxu0 0.0
        %3987 = vmatprep.subr.mxu0 0.0
        %3988 = vmatpush1.msra.mxu0 0.0
        %3989 = vmatprep.subr.mxu0 0.0
        %3990 = vmatpush1.msra.mxu0 0.0
        %3991 = vmatprep.subr.mxu0 0.0
        %3992 = vmatpush1.msra.mxu0 0.0
        %3993 = vmatprep.subr.mxu0 0.0
        %3994 = vmatpush1.msra.mxu0 0.0
        %3995 = vmatprep.subr.mxu0 0.0
        %3996 = vmatpush1.msra.mxu0 0.0
        %3997 = vmatprep.subr.mxu0 0.0
        %3998 = vmatpush1.msra.mxu0 0.0
        %3999 = vmatprep.subr.mxu0 0.0
        %4000 = vmatpush1.msra.mxu0 0.0
        %4001 = vmatprep.subr.mxu0 0.0
        %4002 = vmatpush1.msra.mxu0 0.0
        %4003 = vmatprep.subr.mxu0 0.0
        %4004 = vmatpush1.msra.mxu0 0.0
        %4005 = vmatprep.subr.mxu0 0.0
        %4006 = vmatpush1.msra.mxu0 0.0
        %4007 = vmatprep.subr.mxu0 0.0
        %4008 = vmatpush1.msra.mxu0 0.0
        %4009 = vmatprep.subr.mxu0 0.0
        %4010 = vmatpush1.msra.mxu0 0.0
        %4011 = vmatprep.subr.mxu0 0.0
        %4012 = vmatpush1.msra.mxu0 0.0
        %4013 = vmatprep.subr.mxu0 0.0
        %4014 = vmatpush1.msra.mxu0 0.0
        %4015 = vmatprep.subr.mxu0 0.0
        %4016 = vmatpush1.msra.mxu0 0.0
        %4017 = vmatprep.subr.mxu0 0.0
        %4018 = vmatpush1.msra.mxu0 0.0
        %4019 = vmatprep.subr.mxu0 0.0
        %4020 = vmatpush1.msra.mxu0 0.0
        %4021 = vmatprep.subr.mxu0 0.0
        %4022 = vmatpush1.msra.mxu0 0.0
        %4023 = vmatprep.mubr.f32.mxu0 0.0
        %4024 = vmatmul.mubr.f32.gmra.mrb[0].mxu0 %v3957
        %v4025 = vpop.f32.mrb[0].mxu0
        %v4026 = vadd.f32 0.0, %v4025
        %v4027 = vpop.f32.mrb[0].mxu0
        %4028 = vdwg.mxu0
        %v4029 = vlaneseq
        %v4030 = vshrl.u32 %v4029, 7
        %v4031 = vsub.s32 0, %v4030
        %v4032 = vrot.slane %v4026, %v4031
        %v4033 = vsub.f32 %v3491, %v4032
        %v4034 = vsub.f32 %v3492, %v4032
        %v4035 = vsub.f32 %v3493, %v4032
        %v4036 = vsub.f32 %v3494, %v4032
        %v4037 = vsub.f32 %v3495, %v4032
        %v4038 = vsub.f32 %v3496, %v4032
        %v4039 = vsub.f32 %v3497, %v4032
        %v4040 = vsub.f32 %v3498, %v4032
        %v4041 = vmul.f32 %v4033, %v4033
        %v4042 = vmul.f32 %v4034, %v4034
        %v4043 = vmul.f32 %v4035, %v4035
        %v4044 = vmul.f32 %v4036, %v4036
        %v4045 = vmul.f32 %v4037, %v4037
        %v4046 = vmul.f32 %v4038, %v4038
        %v4047 = vmul.f32 %v4039, %v4039
        %v4048 = vmul.f32 %v4040, %v4040
        %v4049 = vadd.f32 %v4041, %v4042
        %v4050 = vadd.f32 %v4049, %v4043
        %v4051 = vadd.f32 %v4050, %v4044
        %v4052 = vadd.f32 %v4051, %v4045
        %v4053 = vadd.f32 %v4052, %v4046
        %v4054 = vadd.f32 %v4053, %v4047
        %v4055 = vadd.f32 %v4054, %v4048
        %v4056 = vrot.slane %v4055, 4
        %v4057 = vadd.f32 %v4055, %v4056
        %v4058 = vrot.slane %v4057, 2
        %v4059 = vadd.f32 %v4057, %v4058
        %v4060 = vrot.slane %v4059, 1
        %v4061 = vadd.f32 %v4059, %v4060
        %4062 = vmatprep.subr.mxu0 0.0
        %4063 = vmatpush1.xpose.msra.mxu0 %v239
        %4064 = vmatprep.subr.mxu0 0.0
        %4065 = vmatpush1.xpose.msra.mxu0 %v240
        %4066 = vmatprep.subr.mxu0 0.0
        %4067 = vmatpush1.xpose.msra.mxu0 %v241
        %4068 = vmatprep.subr.mxu0 0.0
        %4069 = vmatpush1.xpose.msra.mxu0 %v242
        %4070 = vmatprep.subr.mxu0 0.0
        %4071 = vmatpush1.xpose.msra.mxu0 0.0
        %4072 = vmatprep.subr.mxu0 0.0
        %4073 = vmatpush1.xpose.msra.mxu0 0.0
        %4074 = vmatprep.subr.mxu0 0.0
        %4075 = vmatpush1.xpose.msra.mxu0 0.0
        %4076 = vmatprep.subr.mxu0 0.0
        %4077 = vmatpush1.xpose.msra.mxu0 0.0
        %4078 = vmatprep.subr.mxu0 0.0
        %4079 = vmatpush1.xpose.msra.mxu0 0.0
        %4080 = vmatprep.subr.mxu0 0.0
        %4081 = vmatpush1.xpose.msra.mxu0 0.0
        %4082 = vmatprep.subr.mxu0 0.0
        %4083 = vmatpush1.xpose.msra.mxu0 0.0
        %4084 = vmatprep.subr.mxu0 0.0
        %4085 = vmatpush1.xpose.msra.mxu0 0.0
        %4086 = vmatprep.subr.mxu0 0.0
        %4087 = vmatpush1.xpose.msra.mxu0 0.0
        %4088 = vmatprep.subr.mxu0 0.0
        %4089 = vmatpush1.xpose.msra.mxu0 0.0
        %4090 = vmatprep.subr.mxu0 0.0
        %4091 = vmatpush1.xpose.msra.mxu0 0.0
        %4092 = vmatprep.subr.mxu0 0.0
        %4093 = vmatpush1.xpose.msra.mxu0 0.0
        %4094 = vmatprep.subr.mxu0 0.0
        %4095 = vmatpush1.xpose.msra.mxu0 0.0
        %4096 = vmatprep.subr.mxu0 0.0
        %4097 = vmatpush1.xpose.msra.mxu0 0.0
        %4098 = vmatprep.subr.mxu0 0.0
        %4099 = vmatpush1.xpose.msra.mxu0 0.0
        %4100 = vmatprep.subr.mxu0 0.0
        %4101 = vmatpush1.xpose.msra.mxu0 0.0
        %4102 = vmatprep.subr.mxu0 0.0
        %4103 = vmatpush1.xpose.msra.mxu0 0.0
        %4104 = vmatprep.subr.mxu0 0.0
        %4105 = vmatpush1.xpose.msra.mxu0 0.0
        %4106 = vmatprep.subr.mxu0 0.0
        %4107 = vmatpush1.xpose.msra.mxu0 0.0
        %4108 = vmatprep.subr.mxu0 0.0
        %4109 = vmatpush1.xpose.msra.mxu0 0.0
        %4110 = vmatprep.subr.mxu0 0.0
        %4111 = vmatpush1.xpose.msra.mxu0 0.0
        %4112 = vmatprep.subr.mxu0 0.0
        %4113 = vmatpush1.xpose.msra.mxu0 0.0
        %4114 = vmatprep.subr.mxu0 0.0
        %4115 = vmatpush1.xpose.msra.mxu0 0.0
        %4116 = vmatprep.subr.mxu0 0.0
        %4117 = vmatpush1.xpose.msra.mxu0 0.0
        %4118 = vmatprep.subr.mxu0 0.0
        %4119 = vmatpush1.xpose.msra.mxu0 0.0
        %4120 = vmatprep.subr.mxu0 0.0
        %4121 = vmatpush1.xpose.msra.mxu0 0.0
        %4122 = vmatprep.subr.mxu0 0.0
        %4123 = vmatpush1.xpose.msra.mxu0 0.0
        %4124 = vmatprep.subr.mxu0 0.0
        %4125 = vmatpush1.xpose.msra.mxu0 0.0
        %4126 = vmatprep.mubr.f32.mxu0 0.0
        %4127 = vmatmul.mubr.f32.gmra.mrb[0].mxu0 %v4061
        %v4128 = vpop.f32.mrb[0].mxu0
        %v4129 = vadd.f32 0.0, %v4128
        %v4130 = vpop.f32.mrb[0].mxu0
        %4131 = vdwg.mxu0
        %v4132 = vmul.f32 %v4129, %v3582
        %v4133 = vadd.f32 %v4132, 1e-05
        %v4134 = vrsqrt.pop %v4133
        %v4136 = vsel %vm761, %v4134, 0
        %4138 = vmatprep.subr.mxu0 0.0
        %4139 = vmatpush1.msra.mxu0 %v239
        %4140 = vmatprep.subr.mxu0 0.0
        %4141 = vmatpush1.msra.mxu0 %v240
        %4142 = vmatprep.subr.mxu0 0.0
        %4143 = vmatpush1.msra.mxu0 %v241
        %4144 = vmatprep.subr.mxu0 0.0
        %4145 = vmatpush1.msra.mxu0 %v242
        %4146 = vmatprep.subr.mxu0 0.0
        %4147 = vmatpush1.msra.mxu0 0.0
        %4148 = vmatprep.subr.mxu0 0.0
        %4149 = vmatpush1.msra.mxu0 0.0
        %4150 = vmatprep.subr.mxu0 0.0
        %4151 = vmatpush1.msra.mxu0 0.0
        %4152 = vmatprep.subr.mxu0 0.0
        %4153 = vmatpush1.msra.mxu0 0.0
        %4154 = vmatprep.subr.mxu0 0.0
        %4155 = vmatpush1.msra.mxu0 0.0
        %4156 = vmatprep.subr.mxu0 0.0
        %4157 = vmatpush1.msra.mxu0 0.0
        %4158 = vmatprep.subr.mxu0 0.0
        %4159 = vmatpush1.msra.mxu0 0.0
        %4160 = vmatprep.subr.mxu0 0.0
        %4161 = vmatpush1.msra.mxu0 0.0
        %4162 = vmatprep.subr.mxu0 0.0
        %4163 = vmatpush1.msra.mxu0 0.0
        %4164 = vmatprep.subr.mxu0 0.0
        %4165 = vmatpush1.msra.mxu0 0.0
        %4166 = vmatprep.subr.mxu0 0.0
        %4167 = vmatpush1.msra.mxu0 0.0
        %4168 = vmatprep.subr.mxu0 0.0
        %4169 = vmatpush1.msra.mxu0 0.0
        %4170 = vmatprep.subr.mxu0 0.0
        %4171 = vmatpush1.msra.mxu0 0.0
        %4172 = vmatprep.subr.mxu0 0.0
        %4173 = vmatpush1.msra.mxu0 0.0
        %4174 = vmatprep.subr.mxu0 0.0
        %4175 = vmatpush1.msra.mxu0 0.0
        %4176 = vmatprep.subr.mxu0 0.0
        %4177 = vmatpush1.msra.mxu0 0.0
        %4178 = vmatprep.subr.mxu0 0.0
        %4179 = vmatpush1.msra.mxu0 0.0
        %4180 = vmatprep.subr.mxu0 0.0
        %4181 = vmatpush1.msra.mxu0 0.0
        %4182 = vmatprep.subr.mxu0 0.0
        %4183 = vmatpush1.msra.mxu0 0.0
        %4184 = vmatprep.subr.mxu0 0.0
        %4185 = vmatpush1.msra.mxu0 0.0
        %4186 = vmatprep.subr.mxu0 0.0
        %4187 = vmatpush1.msra.mxu0 0.0
        %4188 = vmatprep.subr.mxu0 0.0
        %4189 = vmatpush1.msra.mxu0 0.0
        %4190 = vmatprep.subr.mxu0 0.0
        %4191 = vmatpush1.msra.mxu0 0.0
        %4192 = vmatprep.subr.mxu0 0.0
        %4193 = vmatpush1.msra.mxu0 0.0
        %4194 = vmatprep.subr.mxu0 0.0
        %4195 = vmatpush1.msra.mxu0 0.0
        %4196 = vmatprep.subr.mxu0 0.0
        %4197 = vmatpush1.msra.mxu0 0.0
        %4198 = vmatprep.subr.mxu0 0.0
        %4199 = vmatpush1.msra.mxu0 0.0
        %4200 = vmatprep.subr.mxu0 0.0
        %4201 = vmatpush1.msra.mxu0 0.0
        %4202 = vmatprep.mubr.f32.mxu0 0.0
        %4203 = vmatmul.mubr.f32.gmra.mrb[0].mxu0 %v4136
        %v4204 = vpop.f32.mrb[0].mxu0
        %v4205 = vadd.f32 0.0, %v4204
        %v4206 = vpop.f32.mrb[0].mxu0
        %4207 = vdwg.mxu0
        %v4208 = vmul.f32 %v4205, %v3837
        %v4209 = vlaneseq
        %v4210 = vshrl.u32 %v4209, 7
        %v4211 = vsub.s32 0, %v4210
        %v4212 = vrot.slane %v4208, %v4211
        %v4213 = vmul.f32 %v4033, %v4212
        %v4214 = vmul.f32 %v4034, %v4212
        %v4215 = vmul.f32 %v4035, %v4212
        %v4216 = vmul.f32 %v4036, %v4212
        %v4217 = vmul.f32 %v4037, %v4212
        %v4218 = vmul.f32 %v4038, %v4212
        %v4219 = vmul.f32 %v4039, %v4212
        %v4220 = vmul.f32 %v4040, %v4212
        %v4221 = vadd.f32 %v4213, %v3855
        %v4222 = vadd.f32 %v4214, %v3855
        %v4223 = vadd.f32 %v4215, %v3855
        %v4224 = vadd.f32 %v4216, %v3855
        %v4225 = vadd.f32 %v4217, %v3855
        %v4226 = vadd.f32 %v4218, %v3855
        %v4227 = vadd.f32 %v4219, %v3855
        %v4228 = vadd.f32 %v4220, %v3855
        %s4229 = scalar_lea.vmem %s218, 64 [#allocation9]
        %4230 = vst [vmem:[%s4229] sm:$0xff] %v4221
        %4231 = vst [vmem:[%s4229 + $0x8] sm:$0xff] %v4222
        %4232 = vst [vmem:[%s4229 + $0x10] sm:$0xff] %v4223
        %4233 = vst [vmem:[%s4229 + $0x18] sm:$0xff] %v4224
        %4234 = vst [vmem:[%s4229 + $0x20] sm:$0xff] %v4225
        %4235 = vst [vmem:[%s4229 + $0x28] sm:$0xff] %v4226
        %4236 = vst [vmem:[%s4229 + $0x30] sm:$0xff] %v4227
        %4237 = vst [vmem:[%s4229 + $0x38] sm:$0xff] %v4228
        %s4238 = sand.u32 %s97, 1
        %s4239 = scalar_lea.sflag [#allocation5], %s4238
        %s4240 = sand.u32 %s97, 1
        %s4241 = smul.addr %s4240, 128
        %s4242 = scalar_lea.vmem [#allocation9], %s4241
        // Predicated region
        $region45: #{tpu_custom_call.1} parent=31 // pred_check
          %p4243 = pneg %p107
        $region46: #{tpu_custom_call.1} parent=31 // pred_check_branch
          %4245 = sbr.rel (%p4243) target = $region48
        $region47: #{tpu_custom_call.1} parent=31 // pred_region
          %s4246 = smul.u32 2, %s21
          %s4248 = ssub.s32 2048, 2048
          %4249 = vsyncadd %s4239, %s4248
          %s4250 = smul.addr %s4246, 8
          %s4251 = smul.addr %s4250, 128
          %s4252 = scalar_lea.hbm %s3, %s4251
          %s4253 = sshll.u32 %s4242, 4
          %s4254 = int_to_ptr.vmem [resolvable:$true] %s4253
          %4259 = dma.vmem_to_hbm [thread:$0]  %s4254, 2048, %s4252, %s4239, 128, 128, 8
        $region48: #{tpu_custom_call.1} parent=31 // pred_fallthru
          _
      $region32: #{tpu_custom_call.1} parent=5 // pred_fallthru
        _
      %p4260 = scmp.le.s32.totalorder 2, %s16
      // Predicated region
      $region49: #{tpu_custom_call.1} parent=5 // pred_check
        %p4261 = pneg %p4260
      $region50: #{tpu_custom_call.1} parent=5 // pred_check_branch
        %4263 = sbr.rel (%p4261) target = $region52
      $region51: #{tpu_custom_call.1} parent=5 // pred_region
        %s4264 = ssub.s32 %s16, 2
        // Predicated region
        $region53: #{tpu_custom_call.1} parent=51 // pred_check
          %p4265 = pneg %p113
        $region54: #{tpu_custom_call.1} parent=51 // pred_check_branch
          %4267 = sbr.rel (%p4265) target = $region56
        $region55: #{tpu_custom_call.1} parent=51 // pred_region
          %s4268 = sand.u32 %s98, 1
          %s4269 = scalar_lea.sflag [#allocation5], %s4268
          %s4270 = sand.u32 %s98, 1
          %s4271 = smul.addr %s4270, 128
          %s4272 = scalar_lea.vmem [#allocation9], %s4271
          %4273 = dma.done %s4269, 2048
        $region56: #{tpu_custom_call.1} parent=51 // pred_fallthru
          _
      $region52: #{tpu_custom_call.1} parent=5 // pred_fallthru
        _
    $region6: #{tpu_custom_call.1} parent=1 // loop_footer
      %s20 = sadd.s32 1, %s16
    $region7: #{tpu_custom_call.1} parent=1 // loop_footer_branch
      %15 = sbr.rel target = $region3
    $region8: #{tpu_custom_call.1} parent=1 // loop_exit
      _
    %4274 = vsyncpa [#allocation4], 1
    %s4275 = scalar_lea.sflag [#allocation4], 1
    %4276 = vsyncpa %s4275, 1
    %4277 = vsyncpa [#allocation7], 1
    %4278 = vsyncpa [#allocation5], 1
    %s4279 = scalar_lea.sflag [#allocation5], 1
    %4280 = vsyncpa %s4279, 1

</llo_original>
